<compile_context>
chip_gen: v7x
topology: tpu7x:2x2x1
jax: 0.10.0
libtpu: 0.0.40
codegen_flags: <defaults>
</compile_context>

<pallas_src>
import functools

import numpy as np

import jax
import jax.numpy as jnp
from jax import lax
from jax.experimental import pallas as pl
from jax.experimental.pallas import tpu as pltpu


def _round_up(x, m):
    return ((x + m - 1) // m) * m


# TODO(synk): newer torchvision Resize defaults antialias=True for tensor
# inputs; this implements bilinear antialias=False (= F.interpolate semantics).
def _bilinear_matrix(n_out, n_in):
    """(n_out, n_in) 1-D bilinear interpolation matrix, half-pixel centers."""
    m = np.zeros((n_out, n_in), np.float32)
    scale = n_in / n_out
    for i in range(n_out):
        src = (i + 0.5) * scale - 0.5
        i0 = int(np.floor(src))
        frac = src - i0
        lo = min(max(i0, 0), n_in - 1)
        hi = min(max(i0 + 1, 0), n_in - 1)
        m[i, lo] += 1.0 - frac
        m[i, hi] += frac
    return m


def _atblock_kernel(x_ref, mask_ref, rd_ref, wqkv_ref, wo_ref, bo_ref,
                    rup_ref, wt_ref, bc_ref, o_ref, *,
                    channels, heads, dim_heads, kernel_size, width_up):
    """Fused res_down -> attention -> res_up -> ReLU -> 3x3 conv -> ReLU.

    Per grid step (one batch tile of Bt images):
      x_ref    : (Bt*C, H*W)      f32   flattened input images (batch-major rows)
      mask_ref : (Bt*C, Bt*C)     f32   block-diagonal attention mask
      rd_ref   : (H*W, dim)       bf16  res_down interpolation matrix^T
      wqkv_ref : (3*H*E, dim)     bf16  fused q/k/v projection (PyTorch layout)
      wo_ref   : (H, E, dim)      bf16  output projection, split per head
      bo_ref   : (1, dim)         f32   output projection bias
      rup_ref  : (dim, Sup)       bf16  res_up matrix^T, zero-padded columns
      wt_ref   : (KH*KW, Cout, C) bf16  conv weights regrouped per tap
      bc_ref   : (Cout, 1)        f32   conv bias
      o_ref    : (Bt, Cout, L_out)      lane-dense output slab
    """
    f32 = jnp.float32
    bf16 = jnp.bfloat16
    bt_rows = x_ref.shape[0]                 # Bt * C  (== Bt * T tokens)
    c = channels
    b_tile = bt_rows // c
    he = heads * dim_heads
    l_out = o_ref.shape[2]
    cout = o_ref.shape[1]
    kk = kernel_size

    # ---- res_down as a single row-batched matmul (bf16 MXU, f32 acc) -------
    xs = jnp.dot(x_ref[...].astype(bf16), rd_ref[...],
                 preferred_element_type=f32)                 # (Bt*C, dim)

    # ---- fused QKV projection: one (3*H*E, dim) x (dim, Bt*T) MXU pass -----
    xsb = xs.astype(bf16)
    qkv = lax.dot_general(wqkv_ref[...], xsb, (((1,), (1,)), ((), ())),
                          preferred_element_type=f32)        # (3*HE, Bt*T)

    scale = dim_heads ** -0.5
    qh = (qkv[0 * he:1 * he] * scale).reshape(heads, dim_heads,
                                              bt_rows).astype(bf16)
    kh = qkv[1 * he:2 * he].reshape(heads, dim_heads, bt_rows).astype(bf16)
    vh = qkv[2 * he:3 * he].reshape(heads, dim_heads, bt_rows).astype(bf16)

    # ---- head-batched attention over the folded (batch, token) axis --------
    # Cross-image logits are computed (tiny: (Bt*T)^2) and zeroed after exp();
    # the max-shift cancels in the normalization so the softmax stays exact.
    dots = jnp.einsum('het,hes->hts', qh, kh,
                      preferred_element_type=f32)            # (H, Bt*T, Bt*T)
    m = jnp.max(dots, axis=-1, keepdims=True)
    p = jnp.exp(dots - m) * mask_ref[...]
    l = jnp.sum(p, axis=-1, keepdims=True)
    attn = p * pl.reciprocal(l)                              # exact recip (cheap)
    out = jnp.einsum('hts,hes->hte', attn.astype(bf16), vh,
                     preferred_element_type=f32)             # (H, Bt*T, E)

    # Output projection per head + head-sum (same MACs as the fused
    # (Bt*T, H*E) @ (H*E, dim) matmul; avoids an (H,BT,E)->(BT,H*E) relayout).
    yh = jnp.einsum('hte,hed->htd', out.astype(bf16), wo_ref[...],
                    preferred_element_type=f32)              # (H, Bt*T, dim)
    att = jnp.sum(yh, axis=0) + bo_ref[...]                  # (Bt*T, dim)

    # ---- res_up: ONE matmul, then a single ReLU -----------------------------
    up = jnp.dot(att.astype(bf16), rup_ref[...],
                 preferred_element_type=f32)                 # (Bt*T, Sup)
    rel = jnp.maximum(up, 0.0).astype(bf16).reshape(b_tile, c, -1)

    # ---- 3x3 valid conv: 9 shifted lane windows of the ReLU'd buffer -------
    # Window at tap (dy,dx) is a static lane slice at offset dy*(W-2)+dx; the
    # columns past the valid output region are garbage and sliced away in the
    # wrapper.  TODO(synk): switch to lax.fori_loop(unroll=True) / S-tiling if
    # L_out grows into the thousands (vreg pressure); trivial at this size.
    acc = jnp.zeros((b_tile, cout, l_out), f32)
    for tap in range(kk * kk):
        off = (tap // kk) * width_up + (tap % kk)
        sh = rel[:, :, off:off + l_out]                      # (Bt, C, L_out)
        wb = jnp.broadcast_to(wt_ref[tap], (b_tile, cout, c))
        acc = acc + jnp.einsum('boc,bcs->bos', wb, sh,
                               preferred_element_type=f32)
    res = jnp.maximum(acc + bc_ref[...], 0.0)                # bias + final ReLU
    o_ref[...] = res.astype(o_ref.dtype)


class ATBlockPallas:
    """Pallas TPU implementation of ATBlock's forward pass (NCHW in/out)."""

    def __init__(self, in_channels, out_channels, kernel_size=3,
                 dim=64, heads=8, *, key):
        self.in_channels = in_channels
        self.out_channels = out_channels
        self.kernel_size = kernel_size
        self.dim = dim
        self.heads = heads
        self.dim_heads = dim // heads
        self.height = int(round(dim ** 0.5))
        assert self.height * self.height == dim
        dh = self.dim_heads * heads

        ks = jax.random.split(key, 6)
        # Parameters in PyTorch layout (out_features, in_features).
        wq = 0.05 * jax.random.normal(ks[0], (dh, dim), jnp.float32)
        wkv = 0.05 * jax.random.normal(ks[1], (2 * dh, dim), jnp.float32)
        wo = 0.05 * jax.random.normal(ks[2], (dim, dh), jnp.float32)
        bo = 0.05 * jax.random.normal(ks[3], (dim,), jnp.float32)
        cw = 0.1 * jax.random.normal(
            ks[4], (out_channels, in_channels, kernel_size, kernel_size),
            jnp.float32)
        cb = 0.1 * jax.random.normal(ks[5], (out_channels,), jnp.float32)
        wk, wv = wkv[:dh], wkv[dh:]
        self.ref_params = dict(wq=wq, wk=wk, wv=wv, wo=wo, bo=bo, cw=cw, cb=cb)

        # Kernel operands: bf16 MXU weights, fused QKV, head-split output
        # projection, conv weights regrouped per (dy, dx) tap.
        self._wqkv = jnp.concatenate([wq, wk, wv], axis=0).astype(jnp.bfloat16)
        self._wo_h = wo.T.reshape(heads, self.dim_heads, dim).astype(jnp.bfloat16)
        self._bo = bo.reshape(1, dim)
        self._wt = jnp.transpose(cw, (2, 3, 0, 1)).reshape(
            kernel_size * kernel_size, out_channels,
            in_channels).astype(jnp.bfloat16)
        self._bc = cb.reshape(out_channels, 1)
        self._resize_cache = {}

    def _resize_operands(self, h, w):
        """res_down matrix^T, padded res_up matrix^T, and output lane widths."""
        if (h, w) not in self._resize_cache:
            hh = self.height
            kk = self.kernel_size
            ho = (h - 2) - kk + 1
            su = (h - 2) * (w - 2)
            max_off = (kk - 1) * (w - 2) + (kk - 1)
            l_out = _round_up(ho * (w - 2), 128)       # lane-dense output width
            sup = l_out + max_off                      # res_up width incl. pad
            rdown = np.kron(_bilinear_matrix(hh, h), _bilinear_matrix(hh, w))
            rup = np.kron(_bilinear_matrix(h - 2, hh),
                          _bilinear_matrix(w - 2, hh))  # (su, dim)
            rup_pad = np.zeros((self.dim, sup), np.float32)
            rup_pad[:, :su] = rup.T
            self._resize_cache[(h, w)] = (
                jnp.asarray(rdown.T, dtype=jnp.bfloat16),   # (h*w, dim)
                jnp.asarray(rup_pad, dtype=jnp.bfloat16),   # (dim, sup)
                l_out)
        return self._resize_cache[(h, w)]

    def __call__(self, x, *, batch_tile=None):
        b, c, h, w = x.shape
        assert c == self.in_channels
        kk = self.kernel_size
        ho, wo_ = (h - 2) - kk + 1, (w - 2) - kk + 1
        # Batch tile: default = whole batch (maximizes MXU row fill).  For
        # large even B on v7x, pass batch_tile=B//2 to shard the grid across
        # both TensorCores ("parallel" semantics below).
        bt = b if batch_tile is None else batch_tile
        assert b % bt == 0
        assert bt == b or (bt * c) % 8 == 0, \
            "batch-tile rows must form whole sublane groups"
        rd_t, rup_pad, l_out = self._resize_operands(h, w)

        x2 = x.reshape(b * c, h * w)
        # Block-diagonal softmax mask over the folded (batch, token) axis.
        ids = np.arange(bt * c) // c
        mask = jnp.asarray((ids[:, None] == ids[None, :]).astype(np.float32))

        kern = functools.partial(_atblock_kernel, channels=c, heads=self.heads,
                                 dim_heads=self.dim_heads, kernel_size=kk,
                                 width_up=w - 2)

        operand_bytes = (bt * c * h * w * 4 + mask.size * 4 + rd_t.size * 2 +
                         self._wqkv.size * 2 + self._wo_h.size * 2 +
                         self._bo.size * 4 + rup_pad.size * 2 +
                         self._wt.size * 2 + self._bc.size * 4 +
                         bt * self.out_channels * l_out * 4)
        vmem_limit = int(2 * operand_bytes + (16 << 20))   # generous headroom

        out = pl.pallas_call(
            kern,
            out_shape=jax.ShapeDtypeStruct((b, self.out_channels, l_out),
                                           x.dtype),
            grid=(b // bt,),
            in_specs=[
                pl.BlockSpec((bt * c, h * w), lambda i: (i, 0)),
                pl.BlockSpec(mask.shape, lambda i: (0, 0)),
                pl.BlockSpec(rd_t.shape, lambda i: (0, 0)),
                pl.BlockSpec(self._wqkv.shape, lambda i: (0, 0)),
                pl.BlockSpec(self._wo_h.shape, lambda i: (0, 0, 0)),
                pl.BlockSpec(self._bo.shape, lambda i: (0, 0)),
                pl.BlockSpec(rup_pad.shape, lambda i: (0, 0)),
                pl.BlockSpec(self._wt.shape, lambda i: (0, 0, 0)),
                pl.BlockSpec(self._bc.shape, lambda i: (0, 0)),
            ],
            out_specs=pl.BlockSpec((bt, self.out_channels, l_out),
                                   lambda i: (i, 0, 0)),
            compiler_params=pltpu.CompilerParams(
                dimension_semantics=("parallel",),       # megacore on v7x
                vmem_limit_bytes=vmem_limit),
        )(x2, mask, rd_t, self._wqkv, self._wo_h, self._bo, rup_pad,
          self._wt, self._bc)

        # Drop the padded / invalid lane positions and restore NCHW.
        out = out[:, :, :ho * (w - 2)].reshape(b, self.out_channels, ho, w - 2)
        return out[:, :, :, :wo_]


def atblock_reference(x, p, *, dim, heads):
    """Pure-JAX f32 reference implementing the module semantics directly."""
    b, c, h, w = x.shape
    height = int(round(dim ** 0.5))
    e = dim // heads
    xd = jax.image.resize(x, (b, c, height, height), method="linear",
                          antialias=False)
    xs = xd.reshape(b, c, dim)
    q = jnp.einsum('btd,jd->btj', xs, p['wq']).reshape(b, c, heads, e)
    k = jnp.einsum('btd,jd->btj', xs, p['wk']).reshape(b, c, heads, e)
    v = jnp.einsum('btd,jd->btj', xs, p['wv']).reshape(b, c, heads, e)
    dots = jnp.einsum('bihe,bjhe->bhij', q, k) * (e ** -0.5)
    attn = jax.nn.softmax(dots, axis=-1)
    out = jnp.einsum('bhij,bjhe->bihe', attn, v).reshape(b, c, heads * e)
    att = (jnp.einsum('btj,dj->btd', out, p['wo']) + p['bo']).reshape(
        b, c, height, height)
    up = jax.image.resize(att, (b, c, h - 2, w - 2), method="linear",
                          antialias=False)
    y = jax.lax.conv_general_dilated(
        jnp.maximum(up, 0.0), p['cw'], window_strides=(1, 1), padding='VALID',
        dimension_numbers=('NCHW', 'OIHW', 'NCHW'))
    return jnp.maximum(y + p['cb'][None, :, None, None], 0.0)


if __name__ == "__main__":
    key = jax.random.PRNGKey(0)
    kx, kp = jax.random.split(key)

    # dim must be a perfect square divisible by heads: dim=64 -> 8x8 attention
    # map; 16x16 input -> res_up to 14x14 -> 3x3 valid conv -> 12x12 output.
    x = jax.random.normal(kx, (2, 4, 16, 16), jnp.float32)
    block = ATBlockPallas(in_channels=4, out_channels=4, kernel_size=3,
                          dim=64, heads=8, key=kp)

    y = block(x)
    jax.block_until_ready(y)
    assert y.shape == (2, 4, 12, 12), y.shape
    assert bool(jnp.all(y >= 0.0))        # final ReLU

    # Numerical check against a pure-JAX reference (kernel uses bf16 MXU
    # operands everywhere -> loose tolerance; structural errors would be O(1)).
    y_ref = atblock_reference(x, block.ref_params, dim=64, heads=8)
    err = float(jnp.max(jnp.abs(y - y_ref)))
    assert err < 4e-2, err

    print("KERNEL_OK")
</pallas_src>

<mosaic_0001>
module attributes {stable_mosaic.version = 11 : i64} {
  func.func @_atblock_kernel(%arg0: i32, %arg1: memref<8x256xf32, #tpu.memory_space<vmem>>, %arg2: memref<8x8xf32, #tpu.memory_space<vmem>>, %arg3: memref<256x64xbf16, #tpu.memory_space<vmem>>, %arg4: memref<192x64xbf16, #tpu.memory_space<vmem>>, %arg5: memref<8x8x64xbf16, #tpu.memory_space<vmem>>, %arg6: memref<1x64xf32, #tpu.memory_space<vmem>>, %arg7: memref<64x286xbf16, #tpu.memory_space<vmem>>, %arg8: memref<9x4x4xbf16, #tpu.memory_space<vmem>>, %arg9: memref<4x1xf32, #tpu.memory_space<vmem>>, %arg10: memref<2x4x256xf32, #tpu.memory_space<vmem>>) attributes {dimension_semantics = [#tpu.dimension_semantics<parallel>], iteration_bounds = array<i64: 1>, scalar_prefetch = 0 : i64, scratch_operands = 0 : i64, tpu.core_type = #tpu.core_type<tc>, window_params = [{transform_indices = @transform_0, window_bounds = array<i64: 8, 256>}, {pipeline_mode = #tpu.pipeline_mode<synchronous>, transform_indices = @transform_1, window_bounds = array<i64: 8, 8>}, {pipeline_mode = #tpu.pipeline_mode<synchronous>, transform_indices = @transform_2, window_bounds = array<i64: 256, 64>}, {pipeline_mode = #tpu.pipeline_mode<synchronous>, transform_indices = @transform_3, window_bounds = array<i64: 192, 64>}, {pipeline_mode = #tpu.pipeline_mode<synchronous>, transform_indices = @transform_4, window_bounds = array<i64: 8, 8, 64>}, {pipeline_mode = #tpu.pipeline_mode<synchronous>, transform_indices = @transform_5, window_bounds = array<i64: 1, 64>}, {pipeline_mode = #tpu.pipeline_mode<synchronous>, transform_indices = @transform_6, window_bounds = array<i64: 64, 286>}, {pipeline_mode = #tpu.pipeline_mode<synchronous>, transform_indices = @transform_7, window_bounds = array<i64: 9, 4, 4>}, {pipeline_mode = #tpu.pipeline_mode<synchronous>, transform_indices = @transform_8, window_bounds = array<i64: 4, 1>}, {transform_indices = @transform_9, window_bounds = array<i64: 2, 4, 256>}]} {
    %c0 = arith.constant 0 : index
    %c0_0 = arith.constant 0 : index
    %0 = vector.load %arg1[%c0, %c0_0] : memref<8x256xf32, #tpu.memory_space<vmem>>, vector<8x256xf32>
    %1 = arith.truncf %0 : vector<8x256xf32> to vector<8x256xbf16>
    %c0_1 = arith.constant 0 : index
    %c0_2 = arith.constant 0 : index
    %2 = vector.load %arg3[%c0_1, %c0_2] : memref<256x64xbf16, #tpu.memory_space<vmem>>, vector<256x64xbf16>
    %cst = arith.constant dense<0.000000e+00> : vector<8x64xf32>
    %3 = tpu.matmul %1, %2, %cst {dimension_numbers = #tpu.dot_dimension_numbers<[1], [0], [0], [1], [0, 0, 1, 1], [], []>} : vector<8x256xbf16>, vector<256x64xbf16>, vector<8x64xf32> -> vector<8x64xf32>
    %4 = arith.truncf %3 : vector<8x64xf32> to vector<8x64xbf16>
    %c0_3 = arith.constant 0 : index
    %c0_4 = arith.constant 0 : index
    %5 = vector.load %arg4[%c0_3, %c0_4] : memref<192x64xbf16, #tpu.memory_space<vmem>>, vector<192x64xbf16>
    %cst_5 = arith.constant dense<0.000000e+00> : vector<192x8xf32>
    %6 = tpu.matmul %5, %4, %cst_5 {dimension_numbers = #tpu.dot_dimension_numbers<[1], [1], [0], [0], [0, 0, 1, 0], [], []>} : vector<192x64xbf16>, vector<8x64xbf16>, vector<192x8xf32> -> vector<192x8xf32>
    %7 = vector.extract_strided_slice %6 {offsets = [0, 0], sizes = [64, 8], strides = [1, 1]} : vector<192x8xf32> to vector<64x8xf32>
    %cst_6 = arith.constant 0.353553385 : f32
    %8 = vector.broadcast %cst_6 : f32 to vector<64x8xf32>
    %9 = arith.mulf %7, %8 : vector<64x8xf32>
    %10 = vector.shape_cast %9 : vector<64x8xf32> to vector<8x8x8xf32>
    %11 = arith.truncf %10 : vector<8x8x8xf32> to vector<8x8x8xbf16>
    %12 = vector.extract_strided_slice %6 {offsets = [64, 0], sizes = [64, 8], strides = [1, 1]} : vector<192x8xf32> to vector<64x8xf32>
    %13 = vector.shape_cast %12 : vector<64x8xf32> to vector<8x8x8xf32>
    %14 = arith.truncf %13 : vector<8x8x8xf32> to vector<8x8x8xbf16>
    %15 = vector.extract_strided_slice %6 {offsets = [128, 0], sizes = [64, 8], strides = [1, 1]} : vector<192x8xf32> to vector<64x8xf32>
    %16 = vector.shape_cast %15 : vector<64x8xf32> to vector<8x8x8xf32>
    %17 = arith.truncf %16 : vector<8x8x8xf32> to vector<8x8x8xbf16>
    "tpu.trace_start"() <{level = 10 : i32, message = "het,hes->hts"}> : () -> ()
    %cst_7 = arith.constant dense<0.000000e+00> : vector<8x8x8xf32>
    %18 = tpu.matmul %11, %14, %cst_7 {dimension_numbers = #tpu.dot_dimension_numbers<[1], [1], [2], [2], [0, 0, 0, 2, 1, 2], [0], [0]>} : vector<8x8x8xbf16>, vector<8x8x8xbf16>, vector<8x8x8xf32> -> vector<8x8x8xf32>
    "tpu.trace_stop"() : () -> ()
    %cst_8 = arith.constant dense<0xFF800000> : vector<8x8xf32>
    %19 = vector.multi_reduction <maximumf>, %18, %cst_8 [2] : vector<8x8x8xf32> to vector<8x8xf32>
    %20 = vector.shape_cast %19 : vector<8x8xf32> to vector<8x8x1xf32>
    %21 = vector.broadcast %20 : vector<8x8x1xf32> to vector<8x8x8xf32>
    %22 = arith.subf %18, %21 : vector<8x8x8xf32>
    %23 = math.exp %22 : vector<8x8x8xf32>
    %c0_9 = arith.constant 0 : index
    %c0_10 = arith.constant 0 : index
    %24 = vector.load %arg2[%c0_9, %c0_10] : memref<8x8xf32, #tpu.memory_space<vmem>>, vector<8x8xf32>
    %25 = vector.shape_cast %24 : vector<8x8xf32> to vector<1x8x8xf32>
    %26 = vector.broadcast %25 : vector<1x8x8xf32> to vector<8x8x8xf32>
    %27 = arith.mulf %23, %26 : vector<8x8x8xf32>
    %cst_11 = arith.constant dense<0.000000e+00> : vector<8x8xf32>
    %28 = vector.multi_reduction <add>, %27, %cst_11 [2] : vector<8x8x8xf32> to vector<8x8xf32>
    %29 = vector.shape_cast %28 : vector<8x8xf32> to vector<8x8x1xf32>
    %30 = tpu.reciprocal %29 : vector<8x8x1xf32> -> vector<8x8x1xf32>
    %31 = vector.broadcast %30 : vector<8x8x1xf32> to vector<8x8x8xf32>
    %32 = arith.mulf %27, %31 : vector<8x8x8xf32>
    %33 = arith.truncf %32 : vector<8x8x8xf32> to vector<8x8x8xbf16>
    "tpu.trace_start"() <{level = 10 : i32, message = "hts,hes->hte"}> : () -> ()
    %cst_12 = arith.constant dense<0.000000e+00> : vector<8x8x8xf32>
    %34 = tpu.matmul %33, %17, %cst_12 {dimension_numbers = #tpu.dot_dimension_numbers<[2], [2], [1], [1], [0, 0, 0, 1, 1, 1], [0], [0]>} : vector<8x8x8xbf16>, vector<8x8x8xbf16>, vector<8x8x8xf32> -> vector<8x8x8xf32>
    "tpu.trace_stop"() : () -> ()
    %35 = arith.truncf %34 : vector<8x8x8xf32> to vector<8x8x8xbf16>
    %c0_13 = arith.constant 0 : index
    %c0_14 = arith.constant 0 : index
    %c0_15 = arith.constant 0 : index
    %36 = vector.load %arg5[%c0_13, %c0_14, %c0_15] : memref<8x8x64xbf16, #tpu.memory_space<vmem>>, vector<8x8x64xbf16>
    "tpu.trace_start"() <{level = 10 : i32, message = "hte,hed->htd"}> : () -> ()
    %cst_16 = arith.constant dense<0.000000e+00> : vector<8x8x64xf32>
    %37 = tpu.matmul %35, %36, %cst_16 {dimension_numbers = #tpu.dot_dimension_numbers<[2], [1], [1], [2], [0, 0, 0, 1, 1, 2], [0], [0]>} : vector<8x8x8xbf16>, vector<8x8x64xbf16>, vector<8x8x64xf32> -> vector<8x8x64xf32>
    "tpu.trace_stop"() : () -> ()
    %cst_17 = arith.constant dense<0.000000e+00> : vector<8x64xf32>
    %38 = vector.multi_reduction <add>, %37, %cst_17 [0] : vector<8x8x64xf32> to vector<8x64xf32>
    %c0_18 = arith.constant 0 : index
    %c0_19 = arith.constant 0 : index
    %39 = vector.load %arg6[%c0_18, %c0_19] : memref<1x64xf32, #tpu.memory_space<vmem>>, vector<1x64xf32>
    %40 = vector.broadcast %39 : vector<1x64xf32> to vector<8x64xf32>
    %41 = arith.addf %38, %40 : vector<8x64xf32>
    %42 = arith.truncf %41 : vector<8x64xf32> to vector<8x64xbf16>
    %c0_20 = arith.constant 0 : index
    %c0_21 = arith.constant 0 : index
    %43 = vector.load %arg7[%c0_20, %c0_21] : memref<64x286xbf16, #tpu.memory_space<vmem>>, vector<64x286xbf16>
    %cst_22 = arith.constant dense<0.000000e+00> : vector<8x286xf32>
    %44 = tpu.matmul %42, %43, %cst_22 {dimension_numbers = #tpu.dot_dimension_numbers<[1], [0], [0], [1], [0, 0, 1, 1], [], []>} : vector<8x64xbf16>, vector<64x286xbf16>, vector<8x286xf32> -> vector<8x286xf32>
    %cst_23 = arith.constant 0.000000e+00 : f32
    %45 = vector.broadcast %cst_23 : f32 to vector<8x286xf32>
    %46 = arith.maximumf %44, %45 : vector<8x286xf32>
    %47 = arith.truncf %46 : vector<8x286xf32> to vector<8x286xbf16>
    %48 = vector.shape_cast %47 : vector<8x286xbf16> to vector<2x4x286xbf16>
    %cst_24 = arith.constant 0.000000e+00 : f32
    %49 = vector.broadcast %cst_24 : f32 to vector<2x4x256xf32>
    %50 = vector.extract_strided_slice %48 {offsets = [0, 0, 0], sizes = [2, 4, 256], strides = [1, 1, 1]} : vector<2x4x286xbf16> to vector<2x4x256xbf16>
    %c0_25 = arith.constant 0 : index
    %c0_26 = arith.constant 0 : index
    %c0_27 = arith.constant 0 : index
    %51 = vector.load %arg8[%c0_25, %c0_26, %c0_27] : memref<9x4x4xbf16, #tpu.memory_space<vmem>>, vector<1x4x4xbf16>
    %52 = vector.shape_cast %51 : vector<1x4x4xbf16> to vector<4x4xbf16>
    %53 = vector.shape_cast %52 : vector<4x4xbf16> to vector<1x4x4xbf16>
    %54 = vector.broadcast %53 : vector<1x4x4xbf16> to vector<2x4x4xbf16>
    "tpu.trace_start"() <{level = 10 : i32, message = "boc,bcs->bos"}> : () -> ()
    %cst_28 = arith.constant dense<0.000000e+00> : vector<2x4x256xf32>
    %55 = tpu.matmul %54, %50, %cst_28 {dimension_numbers = #tpu.dot_dimension_numbers<[2], [1], [1], [2], [0, 0, 0, 1, 1, 2], [0], [0]>} : vector<2x4x4xbf16>, vector<2x4x256xbf16>, vector<2x4x256xf32> -> vector<2x4x256xf32>
    "tpu.trace_stop"() : () -> ()
    %56 = arith.addf %49, %55 : vector<2x4x256xf32>
    %57 = vector.extract_strided_slice %48 {offsets = [0, 0, 1], sizes = [2, 4, 256], strides = [1, 1, 1]} : vector<2x4x286xbf16> to vector<2x4x256xbf16>
    %c1 = arith.constant 1 : index
    %c0_29 = arith.constant 0 : index
    %c0_30 = arith.constant 0 : index
    %58 = vector.load %arg8[%c1, %c0_29, %c0_30] : memref<9x4x4xbf16, #tpu.memory_space<vmem>>, vector<1x4x4xbf16>
    %59 = vector.shape_cast %58 : vector<1x4x4xbf16> to vector<4x4xbf16>
    %60 = vector.shape_cast %59 : vector<4x4xbf16> to vector<1x4x4xbf16>
    %61 = vector.broadcast %60 : vector<1x4x4xbf16> to vector<2x4x4xbf16>
    "tpu.trace_start"() <{level = 10 : i32, message = "boc,bcs->bos"}> : () -> ()
    %cst_31 = arith.constant dense<0.000000e+00> : vector<2x4x256xf32>
    %62 = tpu.matmul %61, %57, %cst_31 {dimension_numbers = #tpu.dot_dimension_numbers<[2], [1], [1], [2], [0, 0, 0, 1, 1, 2], [0], [0]>} : vector<2x4x4xbf16>, vector<2x4x256xbf16>, vector<2x4x256xf32> -> vector<2x4x256xf32>
    "tpu.trace_stop"() : () -> ()
    %63 = arith.addf %56, %62 : vector<2x4x256xf32>
    %64 = vector.extract_strided_slice %48 {offsets = [0, 0, 2], sizes = [2, 4, 256], strides = [1, 1, 1]} : vector<2x4x286xbf16> to vector<2x4x256xbf16>
    %c2 = arith.constant 2 : index
    %c0_32 = arith.constant 0 : index
    %c0_33 = arith.constant 0 : index
    %65 = vector.load %arg8[%c2, %c0_32, %c0_33] : memref<9x4x4xbf16, #tpu.memory_space<vmem>>, vector<1x4x4xbf16>
    %66 = vector.shape_cast %65 : vector<1x4x4xbf16> to vector<4x4xbf16>
    %67 = vector.shape_cast %66 : vector<4x4xbf16> to vector<1x4x4xbf16>
    %68 = vector.broadcast %67 : vector<1x4x4xbf16> to vector<2x4x4xbf16>
    "tpu.trace_start"() <{level = 10 : i32, message = "boc,bcs->bos"}> : () -> ()
    %cst_34 = arith.constant dense<0.000000e+00> : vector<2x4x256xf32>
    %69 = tpu.matmul %68, %64, %cst_34 {dimension_numbers = #tpu.dot_dimension_numbers<[2], [1], [1], [2], [0, 0, 0, 1, 1, 2], [0], [0]>} : vector<2x4x4xbf16>, vector<2x4x256xbf16>, vector<2x4x256xf32> -> vector<2x4x256xf32>
    "tpu.trace_stop"() : () -> ()
    %70 = arith.addf %63, %69 : vector<2x4x256xf32>
    %71 = vector.extract_strided_slice %48 {offsets = [0, 0, 14], sizes = [2, 4, 256], strides = [1, 1, 1]} : vector<2x4x286xbf16> to vector<2x4x256xbf16>
    %c3 = arith.constant 3 : index
    %c0_35 = arith.constant 0 : index
    %c0_36 = arith.constant 0 : index
    %72 = vector.load %arg8[%c3, %c0_35, %c0_36] : memref<9x4x4xbf16, #tpu.memory_space<vmem>>, vector<1x4x4xbf16>
    %73 = vector.shape_cast %72 : vector<1x4x4xbf16> to vector<4x4xbf16>
    %74 = vector.shape_cast %73 : vector<4x4xbf16> to vector<1x4x4xbf16>
    %75 = vector.broadcast %74 : vector<1x4x4xbf16> to vector<2x4x4xbf16>
    "tpu.trace_start"() <{level = 10 : i32, message = "boc,bcs->bos"}> : () -> ()
    %cst_37 = arith.constant dense<0.000000e+00> : vector<2x4x256xf32>
    %76 = tpu.matmul %75, %71, %cst_37 {dimension_numbers = #tpu.dot_dimension_numbers<[2], [1], [1], [2], [0, 0, 0, 1, 1, 2], [0], [0]>} : vector<2x4x4xbf16>, vector<2x4x256xbf16>, vector<2x4x256xf32> -> vector<2x4x256xf32>
    "tpu.trace_stop"() : () -> ()
    %77 = arith.addf %70, %76 : vector<2x4x256xf32>
    %78 = vector.extract_strided_slice %48 {offsets = [0, 0, 15], sizes = [2, 4, 256], strides = [1, 1, 1]} : vector<2x4x286xbf16> to vector<2x4x256xbf16>
    %c4 = arith.constant 4 : index
    %c0_38 = arith.constant 0 : index
    %c0_39 = arith.constant 0 : index
    %79 = vector.load %arg8[%c4, %c0_38, %c0_39] : memref<9x4x4xbf16, #tpu.memory_space<vmem>>, vector<1x4x4xbf16>
    %80 = vector.shape_cast %79 : vector<1x4x4xbf16> to vector<4x4xbf16>
    %81 = vector.shape_cast %80 : vector<4x4xbf16> to vector<1x4x4xbf16>
    %82 = vector.broadcast %81 : vector<1x4x4xbf16> to vector<2x4x4xbf16>
    "tpu.trace_start"() <{level = 10 : i32, message = "boc,bcs->bos"}> : () -> ()
    %cst_40 = arith.constant dense<0.000000e+00> : vector<2x4x256xf32>
    %83 = tpu.matmul %82, %78, %cst_40 {dimension_numbers = #tpu.dot_dimension_numbers<[2], [1], [1], [2], [0, 0, 0, 1, 1, 2], [0], [0]>} : vector<2x4x4xbf16>, vector<2x4x256xbf16>, vector<2x4x256xf32> -> vector<2x4x256xf32>
    "tpu.trace_stop"() : () -> ()
    %84 = arith.addf %77, %83 : vector<2x4x256xf32>
    %85 = vector.extract_strided_slice %48 {offsets = [0, 0, 16], sizes = [2, 4, 256], strides = [1, 1, 1]} : vector<2x4x286xbf16> to vector<2x4x256xbf16>
    %c5 = arith.constant 5 : index
    %c0_41 = arith.constant 0 : index
    %c0_42 = arith.constant 0 : index
    %86 = vector.load %arg8[%c5, %c0_41, %c0_42] : memref<9x4x4xbf16, #tpu.memory_space<vmem>>, vector<1x4x4xbf16>
    %87 = vector.shape_cast %86 : vector<1x4x4xbf16> to vector<4x4xbf16>
    %88 = vector.shape_cast %87 : vector<4x4xbf16> to vector<1x4x4xbf16>
    %89 = vector.broadcast %88 : vector<1x4x4xbf16> to vector<2x4x4xbf16>
    "tpu.trace_start"() <{level = 10 : i32, message = "boc,bcs->bos"}> : () -> ()
    %cst_43 = arith.constant dense<0.000000e+00> : vector<2x4x256xf32>
    %90 = tpu.matmul %89, %85, %cst_43 {dimension_numbers = #tpu.dot_dimension_numbers<[2], [1], [1], [2], [0, 0, 0, 1, 1, 2], [0], [0]>} : vector<2x4x4xbf16>, vector<2x4x256xbf16>, vector<2x4x256xf32> -> vector<2x4x256xf32>
    "tpu.trace_stop"() : () -> ()
    %91 = arith.addf %84, %90 : vector<2x4x256xf32>
    %92 = vector.extract_strided_slice %48 {offsets = [0, 0, 28], sizes = [2, 4, 256], strides = [1, 1, 1]} : vector<2x4x286xbf16> to vector<2x4x256xbf16>
    %c6 = arith.constant 6 : index
    %c0_44 = arith.constant 0 : index
    %c0_45 = arith.constant 0 : index
    %93 = vector.load %arg8[%c6, %c0_44, %c0_45] : memref<9x4x4xbf16, #tpu.memory_space<vmem>>, vector<1x4x4xbf16>
    %94 = vector.shape_cast %93 : vector<1x4x4xbf16> to vector<4x4xbf16>
    %95 = vector.shape_cast %94 : vector<4x4xbf16> to vector<1x4x4xbf16>
    %96 = vector.broadcast %95 : vector<1x4x4xbf16> to vector<2x4x4xbf16>
    "tpu.trace_start"() <{level = 10 : i32, message = "boc,bcs->bos"}> : () -> ()
    %cst_46 = arith.constant dense<0.000000e+00> : vector<2x4x256xf32>
    %97 = tpu.matmul %96, %92, %cst_46 {dimension_numbers = #tpu.dot_dimension_numbers<[2], [1], [1], [2], [0, 0, 0, 1, 1, 2], [0], [0]>} : vector<2x4x4xbf16>, vector<2x4x256xbf16>, vector<2x4x256xf32> -> vector<2x4x256xf32>
    "tpu.trace_stop"() : () -> ()
    %98 = arith.addf %91, %97 : vector<2x4x256xf32>
    %99 = vector.extract_strided_slice %48 {offsets = [0, 0, 29], sizes = [2, 4, 256], strides = [1, 1, 1]} : vector<2x4x286xbf16> to vector<2x4x256xbf16>
    %c7 = arith.constant 7 : index
    %c0_47 = arith.constant 0 : index
    %c0_48 = arith.constant 0 : index
    %100 = vector.load %arg8[%c7, %c0_47, %c0_48] : memref<9x4x4xbf16, #tpu.memory_space<vmem>>, vector<1x4x4xbf16>
    %101 = vector.shape_cast %100 : vector<1x4x4xbf16> to vector<4x4xbf16>
    %102 = vector.shape_cast %101 : vector<4x4xbf16> to vector<1x4x4xbf16>
    %103 = vector.broadcast %102 : vector<1x4x4xbf16> to vector<2x4x4xbf16>
    "tpu.trace_start"() <{level = 10 : i32, message = "boc,bcs->bos"}> : () -> ()
    %cst_49 = arith.constant dense<0.000000e+00> : vector<2x4x256xf32>
    %104 = tpu.matmul %103, %99, %cst_49 {dimension_numbers = #tpu.dot_dimension_numbers<[2], [1], [1], [2], [0, 0, 0, 1, 1, 2], [0], [0]>} : vector<2x4x4xbf16>, vector<2x4x256xbf16>, vector<2x4x256xf32> -> vector<2x4x256xf32>
    "tpu.trace_stop"() : () -> ()
    %105 = arith.addf %98, %104 : vector<2x4x256xf32>
    %106 = vector.extract_strided_slice %48 {offsets = [0, 0, 30], sizes = [2, 4, 256], strides = [1, 1, 1]} : vector<2x4x286xbf16> to vector<2x4x256xbf16>
    %c8 = arith.constant 8 : index
    %c0_50 = arith.constant 0 : index
    %c0_51 = arith.constant 0 : index
    %107 = vector.load %arg8[%c8, %c0_50, %c0_51] : memref<9x4x4xbf16, #tpu.memory_space<vmem>>, vector<1x4x4xbf16>
    %108 = vector.shape_cast %107 : vector<1x4x4xbf16> to vector<4x4xbf16>
    %109 = vector.shape_cast %108 : vector<4x4xbf16> to vector<1x4x4xbf16>
    %110 = vector.broadcast %109 : vector<1x4x4xbf16> to vector<2x4x4xbf16>
    "tpu.trace_start"() <{level = 10 : i32, message = "boc,bcs->bos"}> : () -> ()
    %cst_52 = arith.constant dense<0.000000e+00> : vector<2x4x256xf32>
    %111 = tpu.matmul %110, %106, %cst_52 {dimension_numbers = #tpu.dot_dimension_numbers<[2], [1], [1], [2], [0, 0, 0, 1, 1, 2], [0], [0]>} : vector<2x4x4xbf16>, vector<2x4x256xbf16>, vector<2x4x256xf32> -> vector<2x4x256xf32>
    "tpu.trace_stop"() : () -> ()
    %112 = arith.addf %105, %111 : vector<2x4x256xf32>
    %c0_53 = arith.constant 0 : index
    %c0_54 = arith.constant 0 : index
    %113 = vector.load %arg9[%c0_53, %c0_54] : memref<4x1xf32, #tpu.memory_space<vmem>>, vector<4x1xf32>
    %114 = vector.shape_cast %113 : vector<4x1xf32> to vector<1x4x1xf32>
    %115 = vector.broadcast %114 : vector<1x4x1xf32> to vector<2x4x256xf32>
    %116 = arith.addf %112, %115 : vector<2x4x256xf32>
    %cst_55 = arith.constant 0.000000e+00 : f32
    %117 = vector.broadcast %cst_55 : f32 to vector<2x4x256xf32>
    %118 = arith.maximumf %116, %117 : vector<2x4x256xf32>
    %c0_56 = arith.constant 0 : index
    %c0_57 = arith.constant 0 : index
    %c0_58 = arith.constant 0 : index
    %119 = vector.load %arg10[%c0_56, %c0_57, %c0_58] : memref<2x4x256xf32, #tpu.memory_space<vmem>>, vector<2x4x256xf32>
    tpu.vector_store %arg10[%c0_56, %c0_57, %c0_58], %118 {strides = array<i32>} : memref<2x4x256xf32, #tpu.memory_space<vmem>>, vector<2x4x256xf32>,
    return
  }
  func.func @transform_0(%arg0: i32) -> (i32, i32) {
    %c0_i32 = arith.constant 0 : i32
    %c0_i32_0 = arith.constant 0 : i32
    return %arg0, %c0_i32 : i32, i32
  }
  func.func @transform_1(%arg0: i32) -> (i32, i32) {
    %c0_i32 = arith.constant 0 : i32
    %c0_i32_0 = arith.constant 0 : i32
    %c0_i32_1 = arith.constant 0 : i32
    return %c0_i32, %c0_i32_0 : i32, i32
  }
  func.func @transform_2(%arg0: i32) -> (i32, i32) {
    %c0_i32 = arith.constant 0 : i32
    %c0_i32_0 = arith.constant 0 : i32
    %c0_i32_1 = arith.constant 0 : i32
    return %c0_i32, %c0_i32_0 : i32, i32
  }
  func.func @transform_3(%arg0: i32) -> (i32, i32) {
    %c0_i32 = arith.constant 0 : i32
    %c0_i32_0 = arith.constant 0 : i32
    %c0_i32_1 = arith.constant 0 : i32
    return %c0_i32, %c0_i32_0 : i32, i32
  }
  func.func @transform_4(%arg0: i32) -> (i32, i32, i32) {
    %c0_i32 = arith.constant 0 : i32
    %c0_i32_0 = arith.constant 0 : i32
    %c0_i32_1 = arith.constant 0 : i32
    %c0_i32_2 = arith.constant 0 : i32
    return %c0_i32, %c0_i32_0, %c0_i32_1 : i32, i32, i32
  }
  func.func @transform_5(%arg0: i32) -> (i32, i32) {
    %c0_i32 = arith.constant 0 : i32
    %c0_i32_0 = arith.constant 0 : i32
    %c0_i32_1 = arith.constant 0 : i32
    return %c0_i32, %c0_i32_0 : i32, i32
  }
  func.func @transform_6(%arg0: i32) -> (i32, i32) {
    %c0_i32 = arith.constant 0 : i32
    %c0_i32_0 = arith.constant 0 : i32
    %c0_i32_1 = arith.constant 0 : i32
    return %c0_i32, %c0_i32_0 : i32, i32
  }
  func.func @transform_7(%arg0: i32) -> (i32, i32, i32) {
    %c0_i32 = arith.constant 0 : i32
    %c0_i32_0 = arith.constant 0 : i32
    %c0_i32_1 = arith.constant 0 : i32
    %c0_i32_2 = arith.constant 0 : i32
    return %c0_i32, %c0_i32_0, %c0_i32_1 : i32, i32, i32
  }
  func.func @transform_8(%arg0: i32) -> (i32, i32) {
    %c0_i32 = arith.constant 0 : i32
    %c0_i32_0 = arith.constant 0 : i32
    %c0_i32_1 = arith.constant 0 : i32
    return %c0_i32, %c0_i32_0 : i32, i32
  }
  func.func @transform_9(%arg0: i32) -> (i32, i32, i32) {
    %c0_i32 = arith.constant 0 : i32
    %c0_i32_0 = arith.constant 0 : i32
    %c0_i32_1 = arith.constant 0 : i32
    return %arg0, %c0_i32, %c0_i32_0 : i32, i32, i32
  }
}

</mosaic_0001>

<llo_original>
// kernel: tpu_custom_call.1
$region0: #{tpu_custom_call.1}
  #allocation0 [shape = 'u32[]', space=smem, size = 0x4, offset = 0x4, fixed_abs, tag = 'smem constant byte address 0x4 - core index']
  #allocation1 [shape = 'u32[144,128]{1,0:T(1,128)}', space=vmem, size = 0x12000, scoped, tag = 'internal scratch']
  %s0 = inlined_call_operand.vmem [shape: f32[8,256], index: 0, kind: input, shape index: {}]
  %s1 = inlined_call_operand.vmem [shape: f32[8,8], index: 1, kind: input, shape index: {}]
  %s2 = inlined_call_operand.vmem [shape: bf16[256,64], index: 2, kind: input, shape index: {}]
  %s3 = inlined_call_operand.vmem [shape: bf16[192,64], index: 3, kind: input, shape index: {}]
  %s4 = inlined_call_operand.vmem [shape: bf16[8,8,64], index: 4, kind: input, shape index: {}]
  %s5 = inlined_call_operand.vmem [shape: f32[1,64], index: 5, kind: input, shape index: {}]
  %s6 = inlined_call_operand.vmem [shape: bf16[64,286], index: 6, kind: input, shape index: {}]
  %s7 = inlined_call_operand.vmem [shape: bf16[9,4,4], index: 7, kind: input, shape index: {}]
  %s8 = inlined_call_operand.vmem [shape: f32[4,1], index: 8, kind: input, shape index: {}]
  %s9 = inlined_call_operand.hbm [shape: f32[2,4,256], index: 9, kind: output, shape index: {}]
  %s10 = sld [smem:[#allocation0]]
  $region46: #{tpu_custom_call.1} parent=0
    _
  %s12 = ssub.s32 1, %s10
  %s13 = scalar_select 0, %s12, %s10
  $region1: #{tpu_custom_call.1} parent=0
    #allocation2 [shape = 'u8[8192]{0}', space=vmem, size = 0x2000, scoped, tag = 'output window, operand 0, single buffered']
    #allocation3 [shape = 's32[1]{0}', space=sflag, size = 0x4, scoped, tag = 'scoped memory for tpu_custom_call.1']
    %14 = vsyncpa [#allocation3], 0
    // Predicated region
    $region2: #{tpu_custom_call.1} parent=1 // pred_check
      _
    $region3: #{tpu_custom_call.1} parent=1 // pred_check_branch
      %16 = sbr.rel (0) target = $region5
    $region4: #{tpu_custom_call.1} parent=1 // pred_region
      _
    $region5: #{tpu_custom_call.1} parent=1 // pred_fallthru
      _
    // Predicated region
    $region6: #{tpu_custom_call.1} parent=1 // pred_check
      _
    $region7: #{tpu_custom_call.1} parent=1 // pred_check_branch
      %18 = sbr.rel (0) target = $region9
    $region8: #{tpu_custom_call.1} parent=1 // pred_region
      _
    $region9: #{tpu_custom_call.1} parent=1 // pred_fallthru
      _
    // Predicated region
    $region10: #{tpu_custom_call.1} parent=1 // pred_check
      _
    $region11: #{tpu_custom_call.1} parent=1 // pred_check_branch
      %20 = sbr.rel (0) target = $region13
    $region12: #{tpu_custom_call.1} parent=1 // pred_region
      _
    $region13: #{tpu_custom_call.1} parent=1 // pred_fallthru
      _
    // Predicated region
    $region14: #{tpu_custom_call.1} parent=1 // pred_check
      _
    $region15: #{tpu_custom_call.1} parent=1 // pred_check_branch
      %22 = sbr.rel (0) target = $region17
    $region16: #{tpu_custom_call.1} parent=1 // pred_region
      _
    $region17: #{tpu_custom_call.1} parent=1 // pred_fallthru
      _
    // Predicated region
    $region18: #{tpu_custom_call.1} parent=1 // pred_check
      _
    $region19: #{tpu_custom_call.1} parent=1 // pred_check_branch
      %24 = sbr.rel (0) target = $region21
    $region20: #{tpu_custom_call.1} parent=1 // pred_region
      _
    $region21: #{tpu_custom_call.1} parent=1 // pred_fallthru
      _
    // Predicated region
    $region22: #{tpu_custom_call.1} parent=1 // pred_check
      _
    $region23: #{tpu_custom_call.1} parent=1 // pred_check_branch
      %26 = sbr.rel (0) target = $region25
    $region24: #{tpu_custom_call.1} parent=1 // pred_region
      _
    $region25: #{tpu_custom_call.1} parent=1 // pred_fallthru
      _
    // Predicated region
    $region26: #{tpu_custom_call.1} parent=1 // pred_check
      _
    $region27: #{tpu_custom_call.1} parent=1 // pred_check_branch
      %28 = sbr.rel (0) target = $region29
    $region28: #{tpu_custom_call.1} parent=1 // pred_region
      _
    $region29: #{tpu_custom_call.1} parent=1 // pred_fallthru
      _
    // Predicated region
    $region30: #{tpu_custom_call.1} parent=1 // pred_check
      _
    $region31: #{tpu_custom_call.1} parent=1 // pred_check_branch
      %30 = sbr.rel (0) target = $region33
    $region32: #{tpu_custom_call.1} parent=1 // pred_region
      _
    $region33: #{tpu_custom_call.1} parent=1 // pred_fallthru
      _
    // Predicated region
    $region34: #{tpu_custom_call.1} parent=1 // pred_check
      _
    $region35: #{tpu_custom_call.1} parent=1 // pred_check_branch
      %32 = sbr.rel (0) target = $region37
    $region36: #{tpu_custom_call.1} parent=1 // pred_region
      _
    $region37: #{tpu_custom_call.1} parent=1 // pred_fallthru
      _
    %v34 = vld [vmem:[%s0] sm:$0xff]
    %v35 = vld [vmem:[%s0 + $0x8] sm:$0xff]
    %v36 = vpack.c.bf16 %v34, %v34
    %v37 = vpack.c.bf16 %v35, %v35
    %v38 = vld [vmem:[%s2] sm:$0xf]
    %v39 = vld [vmem:[%s2 + $0x4] sm:$0xf]
    %v40 = vld [vmem:[%s2 + $0x8] sm:$0xf]
    %v41 = vld [vmem:[%s2 + $0xc] sm:$0xf]
    %v42 = vld [vmem:[%s2 + $0x10] sm:$0xf]
    %v43 = vld [vmem:[%s2 + $0x14] sm:$0xf]
    %v44 = vld [vmem:[%s2 + $0x18] sm:$0xf]
    %v45 = vld [vmem:[%s2 + $0x1c] sm:$0xf]
    %v46 = vld [vmem:[%s2 + $0x20] sm:$0xf]
    %v47 = vld [vmem:[%s2 + $0x24] sm:$0xf]
    %v48 = vld [vmem:[%s2 + $0x28] sm:$0xf]
    %v49 = vld [vmem:[%s2 + $0x2c] sm:$0xf]
    %v50 = vld [vmem:[%s2 + $0x30] sm:$0xf]
    %v51 = vld [vmem:[%s2 + $0x34] sm:$0xf]
    %v52 = vld [vmem:[%s2 + $0x38] sm:$0xf]
    %v53 = vld [vmem:[%s2 + $0x3c] sm:$0xf]
    %v54 = vld [vmem:[%s2 + $0x40] sm:$0xf]
    %v55 = vld [vmem:[%s2 + $0x44] sm:$0xf]
    %v56 = vld [vmem:[%s2 + $0x48] sm:$0xf]
    %v57 = vld [vmem:[%s2 + $0x4c] sm:$0xf]
    %v58 = vld [vmem:[%s2 + $0x50] sm:$0xf]
    %v59 = vld [vmem:[%s2 + $0x54] sm:$0xf]
    %v60 = vld [vmem:[%s2 + $0x58] sm:$0xf]
    %v61 = vld [vmem:[%s2 + $0x5c] sm:$0xf]
    %v62 = vld [vmem:[%s2 + $0x60] sm:$0xf]
    %v63 = vld [vmem:[%s2 + $0x64] sm:$0xf]
    %v64 = vld [vmem:[%s2 + $0x68] sm:$0xf]
    %v65 = vld [vmem:[%s2 + $0x6c] sm:$0xf]
    %v66 = vld [vmem:[%s2 + $0x70] sm:$0xf]
    %v67 = vld [vmem:[%s2 + $0x74] sm:$0xf]
    %v68 = vld [vmem:[%s2 + $0x78] sm:$0xf]
    %v69 = vld [vmem:[%s2 + $0x7c] sm:$0xf]
    %v102 = vunpack.c.l.b16 %v38
    %v103 = vunpack.c.l.b16 %v39
    %v104 = vunpack.c.l.b16 %v40
    %v105 = vunpack.c.l.b16 %v41
    %v106 = vunpack.c.l.b16 %v42
    %v107 = vunpack.c.l.b16 %v43
    %v108 = vunpack.c.l.b16 %v44
    %v109 = vunpack.c.l.b16 %v45
    %v110 = vunpack.c.l.b16 %v46
    %v111 = vunpack.c.l.b16 %v47
    %v112 = vunpack.c.l.b16 %v48
    %v113 = vunpack.c.l.b16 %v49
    %v114 = vunpack.c.l.b16 %v50
    %v115 = vunpack.c.l.b16 %v51
    %v116 = vunpack.c.l.b16 %v52
    %v117 = vunpack.c.l.b16 %v53
    %v118 = vunpack.c.l.b16 %v54
    %v119 = vunpack.c.l.b16 %v55
    %v120 = vunpack.c.l.b16 %v56
    %v121 = vunpack.c.l.b16 %v57
    %v122 = vunpack.c.l.b16 %v58
    %v123 = vunpack.c.l.b16 %v59
    %v124 = vunpack.c.l.b16 %v60
    %v125 = vunpack.c.l.b16 %v61
    %v126 = vunpack.c.l.b16 %v62
    %v127 = vunpack.c.l.b16 %v63
    %v128 = vunpack.c.l.b16 %v64
    %v129 = vunpack.c.l.b16 %v65
    %v130 = vunpack.c.l.b16 %v66
    %v131 = vunpack.c.l.b16 %v67
    %v132 = vunpack.c.l.b16 %v68
    %v133 = vunpack.c.l.b16 %v69
    %v134 = vpack.c.b16 %v103, %v102
    %v135 = vpack.c.b16 %v105, %v104
    %v136 = vpack.c.b16 %v107, %v106
    %v137 = vpack.c.b16 %v109, %v108
    %v138 = vpack.c.b16 %v111, %v110
    %v139 = vpack.c.b16 %v113, %v112
    %v140 = vpack.c.b16 %v115, %v114
    %v141 = vpack.c.b16 %v117, %v116
    %v142 = vpack.c.b16 %v119, %v118
    %v143 = vpack.c.b16 %v121, %v120
    %v144 = vpack.c.b16 %v123, %v122
    %v145 = vpack.c.b16 %v125, %v124
    %v146 = vpack.c.b16 %v127, %v126
    %v147 = vpack.c.b16 %v129, %v128
    %v148 = vpack.c.b16 %v131, %v130
    %v149 = vpack.c.b16 %v133, %v132
    %166 = vmatprep.subr.bf16.mxu0 0
    %167 = vmatpush1.bf16.msra.mxu0 %v134
    %168 = vmatprep.subr.bf16.mxu0 0
    %169 = vmatpush1.bf16.msra.mxu0 %v135
    %170 = vmatprep.subr.bf16.mxu0 0
    %171 = vmatpush1.bf16.msra.mxu0 %v136
    %172 = vmatprep.subr.bf16.mxu0 0
    %173 = vmatpush1.bf16.msra.mxu0 %v137
    %174 = vmatprep.subr.bf16.mxu0 0
    %175 = vmatpush1.bf16.msra.mxu0 %v138
    %176 = vmatprep.subr.bf16.mxu0 0
    %177 = vmatpush1.bf16.msra.mxu0 %v139
    %178 = vmatprep.subr.bf16.mxu0 0
    %179 = vmatpush1.bf16.msra.mxu0 %v140
    %180 = vmatprep.subr.bf16.mxu0 0
    %181 = vmatpush1.bf16.msra.mxu0 %v141
    %182 = vmatprep.subr.bf16.mxu0 0
    %183 = vmatpush1.bf16.msra.mxu0 %v142
    %184 = vmatprep.subr.bf16.mxu0 0
    %185 = vmatpush1.bf16.msra.mxu0 %v143
    %186 = vmatprep.subr.bf16.mxu0 0
    %187 = vmatpush1.bf16.msra.mxu0 %v144
    %188 = vmatprep.subr.bf16.mxu0 0
    %189 = vmatpush1.bf16.msra.mxu0 %v145
    %190 = vmatprep.subr.bf16.mxu0 0
    %191 = vmatpush1.bf16.msra.mxu0 %v146
    %192 = vmatprep.subr.bf16.mxu0 0
    %193 = vmatpush1.bf16.msra.mxu0 %v147
    %194 = vmatprep.subr.bf16.mxu0 0
    %195 = vmatpush1.bf16.msra.mxu0 %v148
    %196 = vmatprep.subr.bf16.mxu0 0
    %197 = vmatpush1.bf16.msra.mxu0 %v149
    %198 = vmatprep.mubr.bf16.mxu0 %v37
    %199 = vmatmul.mubr.bf16.gmra.mrb[0].mxu0 %v36
    %v200 = vpop.f32.mrb[0].mxu0
    %v201 = vadd.f32 0.0, %v200
    %v202 = vpop.f32.mrb[0].mxu0
    %v203 = vpop.f32.mrb[0].mxu0
    %v204 = vpop.f32.mrb[0].mxu0
    %205 = vdwg.mxu0
    %v206 = vpack.c.bf16 %v201, %v201
    %v207 = vld [vmem:[%s3] sm:$0xf]
    %v208 = vld [vmem:[%s3 + $0x4] sm:$0xf]
    %v209 = vld [vmem:[%s3 + $0x8] sm:$0xf]
    %v210 = vld [vmem:[%s3 + $0xc] sm:$0xf]
    %v211 = vld [vmem:[%s3 + $0x10] sm:$0xf]
    %v212 = vld [vmem:[%s3 + $0x14] sm:$0xf]
    %v213 = vld [vmem:[%s3 + $0x18] sm:$0xf]
    %v214 = vld [vmem:[%s3 + $0x1c] sm:$0xf]
    %v215 = vld [vmem:[%s3 + $0x20] sm:$0xf]
    %v216 = vld [vmem:[%s3 + $0x24] sm:$0xf]
    %v217 = vld [vmem:[%s3 + $0x28] sm:$0xf]
    %v218 = vld [vmem:[%s3 + $0x2c] sm:$0xf]
    %v219 = vld [vmem:[%s3 + $0x30] sm:$0xf]
    %v220 = vld [vmem:[%s3 + $0x34] sm:$0xf]
    %v221 = vld [vmem:[%s3 + $0x38] sm:$0xf]
    %v222 = vld [vmem:[%s3 + $0x3c] sm:$0xf]
    %v223 = vld [vmem:[%s3 + $0x40] sm:$0xf]
    %v224 = vld [vmem:[%s3 + $0x44] sm:$0xf]
    %v225 = vld [vmem:[%s3 + $0x48] sm:$0xf]
    %v226 = vld [vmem:[%s3 + $0x4c] sm:$0xf]
    %v227 = vld [vmem:[%s3 + $0x50] sm:$0xf]
    %v228 = vld [vmem:[%s3 + $0x54] sm:$0xf]
    %v229 = vld [vmem:[%s3 + $0x58] sm:$0xf]
    %v230 = vld [vmem:[%s3 + $0x5c] sm:$0xf]
    %v255 = vunpack.c.l.b16 %v207
    %v256 = vunpack.c.l.b16 %v208
    %v257 = vunpack.c.l.b16 %v209
    %v258 = vunpack.c.l.b16 %v210
    %v259 = vunpack.c.l.b16 %v211
    %v260 = vunpack.c.l.b16 %v212
    %v261 = vunpack.c.l.b16 %v213
    %v262 = vunpack.c.l.b16 %v214
    %v263 = vunpack.c.l.b16 %v215
    %v264 = vunpack.c.l.b16 %v216
    %v265 = vunpack.c.l.b16 %v217
    %v266 = vunpack.c.l.b16 %v218
    %v267 = vunpack.c.l.b16 %v219
    %v268 = vunpack.c.l.b16 %v220
    %v269 = vunpack.c.l.b16 %v221
    %v270 = vunpack.c.l.b16 %v222
    %v271 = vunpack.c.l.b16 %v223
    %v272 = vunpack.c.l.b16 %v224
    %v273 = vunpack.c.l.b16 %v225
    %v274 = vunpack.c.l.b16 %v226
    %v275 = vunpack.c.l.b16 %v227
    %v276 = vunpack.c.l.b16 %v228
    %v277 = vunpack.c.l.b16 %v229
    %v278 = vunpack.c.l.b16 %v230
    %v279 = vpack.c.b16 %v256, %v255
    %v280 = vpack.c.b16 %v258, %v257
    %v281 = vpack.c.b16 %v260, %v259
    %v282 = vpack.c.b16 %v262, %v261
    %v283 = vpack.c.b16 %v264, %v263
    %v284 = vpack.c.b16 %v266, %v265
    %v285 = vpack.c.b16 %v268, %v267
    %v286 = vpack.c.b16 %v270, %v269
    %v287 = vpack.c.b16 %v272, %v271
    %v288 = vpack.c.b16 %v274, %v273
    %v289 = vpack.c.b16 %v276, %v275
    %v290 = vpack.c.b16 %v278, %v277
    %vm291 = vcmask 523264
    %v293 = vsel %vm291, %v279, 0
    %v296 = vsel %vm291, %v280, 0
    %v299 = vsel %vm291, %v281, 0
    %v302 = vsel %vm291, %v282, 0
    %v305 = vsel %vm291, %v283, 0
    %v308 = vsel %vm291, %v284, 0
    %v311 = vsel %vm291, %v285, 0
    %v314 = vsel %vm291, %v286, 0
    %v317 = vsel %vm291, %v287, 0
    %v320 = vsel %vm291, %v288, 0
    %v323 = vsel %vm291, %v289, 0
    %v326 = vsel %vm291, %v290, 0
    %v329 = vsel %vm291, %v206, 0
    %331 = vmatprep.subr.bf16.mxu0 0
    %332 = vmatpush1.bf16.xpose.msra.mxu0 %v329
    %333 = vmatprep.subr.bf16.mxu0 0
    %334 = vmatpush1.bf16.xpose.msra.mxu0 0
    %335 = vmatprep.subr.bf16.mxu0 0
    %336 = vmatpush1.bf16.xpose.msra.mxu0 0
    %337 = vmatprep.subr.bf16.mxu0 0
    %338 = vmatpush1.bf16.xpose.msra.mxu0 0
    %339 = vmatprep.subr.bf16.mxu0 0
    %340 = vmatpush1.bf16.xpose.msra.mxu0 0
    %341 = vmatprep.subr.bf16.mxu0 0
    %342 = vmatpush1.bf16.xpose.msra.mxu0 0
    %343 = vmatprep.subr.bf16.mxu0 0
    %344 = vmatpush1.bf16.xpose.msra.mxu0 0
    %345 = vmatprep.subr.bf16.mxu0 0
    %346 = vmatpush1.bf16.xpose.msra.mxu0 0
    %347 = vmatprep.subr.bf16.mxu0 0
    %348 = vmatpush1.bf16.xpose.msra.mxu0 0
    %349 = vmatprep.subr.bf16.mxu0 0
    %350 = vmatpush1.bf16.xpose.msra.mxu0 0
    %351 = vmatprep.subr.bf16.mxu0 0
    %352 = vmatpush1.bf16.xpose.msra.mxu0 0
    %353 = vmatprep.subr.bf16.mxu0 0
    %354 = vmatpush1.bf16.xpose.msra.mxu0 0
    %355 = vmatprep.subr.bf16.mxu0 0
    %356 = vmatpush1.bf16.xpose.msra.mxu0 0
    %357 = vmatprep.subr.bf16.mxu0 0
    %358 = vmatpush1.bf16.xpose.msra.mxu0 0
    %359 = vmatprep.subr.bf16.mxu0 0
    %360 = vmatpush1.bf16.xpose.msra.mxu0 0
    %361 = vmatprep.subr.bf16.mxu0 0
    %362 = vmatpush1.bf16.xpose.msra.mxu0 0
    %363 = vmatprep.mubr.bf16.mxu0 0
    %364 = vmatmul.mubr.bf16.gmra.mrb[0].mxu0 %v293
    %v365 = vpop.f32.mrb[0].mxu0
    %v366 = vadd.f32 0.0, %v365
    %v367 = vpop.f32.mrb[0].mxu0
    %v368 = vpop.f32.mrb[0].mxu0
    %v369 = vadd.f32 0.0, %v368
    %v370 = vpop.f32.mrb[0].mxu0
    %371 = vmatprep.mubr.bf16.mxu0 0
    %372 = vmatmul.mubr.bf16.gmra.mrb[0].mxu0 %v296
    %v373 = vpop.f32.mrb[0].mxu0
    %v374 = vadd.f32 0.0, %v373
    %v375 = vpop.f32.mrb[0].mxu0
    %v376 = vpop.f32.mrb[0].mxu0
    %v377 = vadd.f32 0.0, %v376
    %v378 = vpop.f32.mrb[0].mxu0
    %379 = vmatprep.mubr.bf16.mxu0 0
    %380 = vmatmul.mubr.bf16.gmra.mrb[0].mxu0 %v299
    %v381 = vpop.f32.mrb[0].mxu0
    %v382 = vadd.f32 0.0, %v381
    %v383 = vpop.f32.mrb[0].mxu0
    %v384 = vpop.f32.mrb[0].mxu0
    %v385 = vadd.f32 0.0, %v384
    %v386 = vpop.f32.mrb[0].mxu0
    %387 = vmatprep.mubr.bf16.mxu0 0
    %388 = vmatmul.mubr.bf16.gmra.mrb[0].mxu0 %v302
    %v389 = vpop.f32.mrb[0].mxu0
    %v390 = vadd.f32 0.0, %v389
    %v391 = vpop.f32.mrb[0].mxu0
    %v392 = vpop.f32.mrb[0].mxu0
    %v393 = vadd.f32 0.0, %v392
    %v394 = vpop.f32.mrb[0].mxu0
    %395 = vmatprep.mubr.bf16.mxu0 0
    %396 = vmatmul.mubr.bf16.gmra.mrb[0].mxu0 %v305
    %v397 = vpop.f32.mrb[0].mxu0
    %v398 = vadd.f32 0.0, %v397
    %v399 = vpop.f32.mrb[0].mxu0
    %v400 = vpop.f32.mrb[0].mxu0
    %v401 = vadd.f32 0.0, %v400
    %v402 = vpop.f32.mrb[0].mxu0
    %403 = vmatprep.mubr.bf16.mxu0 0
    %404 = vmatmul.mubr.bf16.gmra.mrb[0].mxu0 %v308
    %v405 = vpop.f32.mrb[0].mxu0
    %v406 = vadd.f32 0.0, %v405
    %v407 = vpop.f32.mrb[0].mxu0
    %v408 = vpop.f32.mrb[0].mxu0
    %v409 = vadd.f32 0.0, %v408
    %v410 = vpop.f32.mrb[0].mxu0
    %411 = vmatprep.mubr.bf16.mxu0 0
    %412 = vmatmul.mubr.bf16.gmra.mrb[0].mxu0 %v311
    %v413 = vpop.f32.mrb[0].mxu0
    %v414 = vadd.f32 0.0, %v413
    %v415 = vpop.f32.mrb[0].mxu0
    %v416 = vpop.f32.mrb[0].mxu0
    %v417 = vadd.f32 0.0, %v416
    %v418 = vpop.f32.mrb[0].mxu0
    %419 = vmatprep.mubr.bf16.mxu0 0
    %420 = vmatmul.mubr.bf16.gmra.mrb[0].mxu0 %v314
    %v421 = vpop.f32.mrb[0].mxu0
    %v422 = vadd.f32 0.0, %v421
    %v423 = vpop.f32.mrb[0].mxu0
    %v424 = vpop.f32.mrb[0].mxu0
    %v425 = vadd.f32 0.0, %v424
    %v426 = vpop.f32.mrb[0].mxu0
    %427 = vmatprep.mubr.bf16.mxu0 0
    %428 = vmatmul.mubr.bf16.gmra.mrb[0].mxu0 %v317
    %v429 = vpop.f32.mrb[0].mxu0
    %v430 = vadd.f32 0.0, %v429
    %v431 = vpop.f32.mrb[0].mxu0
    %v432 = vpop.f32.mrb[0].mxu0
    %v433 = vadd.f32 0.0, %v432
    %v434 = vpop.f32.mrb[0].mxu0
    %435 = vmatprep.mubr.bf16.mxu0 0
    %436 = vmatmul.mubr.bf16.gmra.mrb[0].mxu0 %v320
    %v437 = vpop.f32.mrb[0].mxu0
    %v438 = vadd.f32 0.0, %v437
    %v439 = vpop.f32.mrb[0].mxu0
    %v440 = vpop.f32.mrb[0].mxu0
    %v441 = vadd.f32 0.0, %v440
    %v442 = vpop.f32.mrb[0].mxu0
    %443 = vmatprep.mubr.bf16.mxu0 0
    %444 = vmatmul.mubr.bf16.gmra.mrb[0].mxu0 %v323
    %v445 = vpop.f32.mrb[0].mxu0
    %v446 = vadd.f32 0.0, %v445
    %v447 = vpop.f32.mrb[0].mxu0
    %v448 = vpop.f32.mrb[0].mxu0
    %v449 = vadd.f32 0.0, %v448
    %v450 = vpop.f32.mrb[0].mxu0
    %451 = vmatprep.mubr.bf16.mxu0 0
    %452 = vmatmul.mubr.bf16.gmra.mrb[0].mxu0 %v326
    %v453 = vpop.f32.mrb[0].mxu0
    %v454 = vadd.f32 0.0, %v453
    %v455 = vpop.f32.mrb[0].mxu0
    %v456 = vpop.f32.mrb[0].mxu0
    %v457 = vadd.f32 0.0, %v456
    %v458 = vpop.f32.mrb[0].mxu0
    %459 = vdwg.mxu0
    %v460 = vmul.f32 %v366, 0.35355338
    %v461 = vmul.f32 %v369, 0.35355338
    %v462 = vmul.f32 %v374, 0.35355338
    %v463 = vmul.f32 %v377, 0.35355338
    %v464 = vmul.f32 %v382, 0.35355338
    %v465 = vmul.f32 %v385, 0.35355338
    %v466 = vmul.f32 %v390, 0.35355338
    %v467 = vmul.f32 %v393, 0.35355338
    %v468 = vpack.c.bf16 %v460, %v460
    %v469 = vpack.c.bf16 %v461, %v461
    %v470 = vpack.c.bf16 %v462, %v462
    %v471 = vpack.c.bf16 %v463, %v463
    %v472 = vpack.c.bf16 %v464, %v464
    %v473 = vpack.c.bf16 %v465, %v465
    %v474 = vpack.c.bf16 %v466, %v466
    %v475 = vpack.c.bf16 %v467, %v467
    %v476 = vpack.c.bf16 %v398, %v398
    %v477 = vpack.c.bf16 %v401, %v401
    %v478 = vpack.c.bf16 %v406, %v406
    %v479 = vpack.c.bf16 %v409, %v409
    %v480 = vpack.c.bf16 %v414, %v414
    %v481 = vpack.c.bf16 %v417, %v417
    %v482 = vpack.c.bf16 %v422, %v422
    %v483 = vpack.c.bf16 %v425, %v425
    %v484 = vpack.c.bf16 %v430, %v430
    %v485 = vpack.c.bf16 %v433, %v433
    %v486 = vpack.c.bf16 %v438, %v438
    %v487 = vpack.c.bf16 %v441, %v441
    %v488 = vpack.c.bf16 %v446, %v446
    %v489 = vpack.c.bf16 %v449, %v449
    %v490 = vpack.c.bf16 %v454, %v454
    %v491 = vpack.c.bf16 %v457, %v457
    %492 = vxpose.xlu0.c.b16.start [1/8] %v468, 128
    %493 = vxpose.xlu0.c.b16.cont [2/8] 0, 128
    %494 = vxpose.xlu0.c.b16.cont [3/8] 0, 128
    %495 = vxpose.xlu0.c.b16.cont [4/8] 0, 128
    %496 = vxpose.xlu0.c.b16.cont [5/8] 0, 128
    %497 = vxpose.xlu0.c.b16.cont [6/8] 0, 128
    %498 = vxpose.xlu0.c.b16.cont [7/8] 0, 128
    %499 = vxpose.xlu0.c.b16.end [8/8] 0, 128
    %v500 = vpop.trf.xlu0
    %v501 = vpop.trf.xlu0
    %v502 = vpop.trf.xlu0
    %v503 = vpop.trf.xlu0
    %v504 = vpop.trf.xlu0
    %v505 = vpop.trf.xlu0
    %v506 = vpop.trf.xlu0
    %v507 = vpop.trf.xlu0
    %vm508 = vcmask 64512
    %v510 = vsel %vm508, %v500, 0
    %vm512 = vcmask 1043456
    %v514 = vsel %vm512, %v476, 0
    %516 = vmatprep.subr.bf16.mxu0 0
    %517 = vmatpush1.bf16.msra.mxu0 %v514
    %518 = vmatprep.subr.bf16.mxu0 0
    %519 = vmatpush1.bf16.msra.mxu0 0
    %520 = vmatprep.subr.bf16.mxu0 0
    %521 = vmatpush1.bf16.msra.mxu0 0
    %522 = vmatprep.subr.bf16.mxu0 0
    %523 = vmatpush1.bf16.msra.mxu0 0
    %524 = vmatprep.subr.bf16.mxu0 0
    %525 = vmatpush1.bf16.msra.mxu0 0
    %526 = vmatprep.subr.bf16.mxu0 0
    %527 = vmatpush1.bf16.msra.mxu0 0
    %528 = vmatprep.subr.bf16.mxu0 0
    %529 = vmatpush1.bf16.msra.mxu0 0
    %530 = vmatprep.subr.bf16.mxu0 0
    %531 = vmatpush1.bf16.msra.mxu0 0
    %532 = vmatprep.subr.bf16.mxu0 0
    %533 = vmatpush1.bf16.msra.mxu0 0
    %534 = vmatprep.subr.bf16.mxu0 0
    %535 = vmatpush1.bf16.msra.mxu0 0
    %536 = vmatprep.subr.bf16.mxu0 0
    %537 = vmatpush1.bf16.msra.mxu0 0
    %538 = vmatprep.subr.bf16.mxu0 0
    %539 = vmatpush1.bf16.msra.mxu0 0
    %540 = vmatprep.subr.bf16.mxu0 0
    %541 = vmatpush1.bf16.msra.mxu0 0
    %542 = vmatprep.subr.bf16.mxu0 0
    %543 = vmatpush1.bf16.msra.mxu0 0
    %544 = vmatprep.subr.bf16.mxu0 0
    %545 = vmatpush1.bf16.msra.mxu0 0
    %546 = vmatprep.subr.bf16.mxu0 0
    %547 = vmatpush1.bf16.msra.mxu0 0
    %548 = vmatprep.mubr.bf16.mxu0 0
    %549 = vmatmul.mubr.bf16.gmra.mrb[0].mxu0 %v510
    %v550 = vpop.f32.mrb[0].mxu0
    %v551 = vadd.f32 0.0, %v550
    %v552 = vpop.f32.mrb[0].mxu0
    %v553 = vpop.f32.mrb[0].mxu0
    %v554 = vpop.f32.mrb[0].mxu0
    %555 = vdwg.mxu0
    %556 = vxpose.xlu0.c.b16.start [1/8] %v469, 128
    %557 = vxpose.xlu0.c.b16.cont [2/8] 0, 128
    %558 = vxpose.xlu0.c.b16.cont [3/8] 0, 128
    %559 = vxpose.xlu0.c.b16.cont [4/8] 0, 128
    %560 = vxpose.xlu0.c.b16.cont [5/8] 0, 128
    %561 = vxpose.xlu0.c.b16.cont [6/8] 0, 128
    %562 = vxpose.xlu0.c.b16.cont [7/8] 0, 128
    %563 = vxpose.xlu0.c.b16.end [8/8] 0, 128
    %v564 = vpop.trf.xlu0
    %v565 = vpop.trf.xlu0
    %v566 = vpop.trf.xlu0
    %v567 = vpop.trf.xlu0
    %v568 = vpop.trf.xlu0
    %v569 = vpop.trf.xlu0
    %v570 = vpop.trf.xlu0
    %v571 = vpop.trf.xlu0
    %v573 = vsel %vm508, %v564, 0
    %v576 = vsel %vm512, %v477, 0
    %578 = vmatprep.subr.bf16.mxu0 0
    %579 = vmatpush1.bf16.msra.mxu0 %v576
    %580 = vmatprep.subr.bf16.mxu0 0
    %581 = vmatpush1.bf16.msra.mxu0 0
    %582 = vmatprep.subr.bf16.mxu0 0
    %583 = vmatpush1.bf16.msra.mxu0 0
    %584 = vmatprep.subr.bf16.mxu0 0
    %585 = vmatpush1.bf16.msra.mxu0 0
    %586 = vmatprep.subr.bf16.mxu0 0
    %587 = vmatpush1.bf16.msra.mxu0 0
    %588 = vmatprep.subr.bf16.mxu0 0
    %589 = vmatpush1.bf16.msra.mxu0 0
    %590 = vmatprep.subr.bf16.mxu0 0
    %591 = vmatpush1.bf16.msra.mxu0 0
    %592 = vmatprep.subr.bf16.mxu0 0
    %593 = vmatpush1.bf16.msra.mxu0 0
    %594 = vmatprep.subr.bf16.mxu0 0
    %595 = vmatpush1.bf16.msra.mxu0 0
    %596 = vmatprep.subr.bf16.mxu0 0
    %597 = vmatpush1.bf16.msra.mxu0 0
    %598 = vmatprep.subr.bf16.mxu0 0
    %599 = vmatpush1.bf16.msra.mxu0 0
    %600 = vmatprep.subr.bf16.mxu0 0
    %601 = vmatpush1.bf16.msra.mxu0 0
    %602 = vmatprep.subr.bf16.mxu0 0
    %603 = vmatpush1.bf16.msra.mxu0 0
    %604 = vmatprep.subr.bf16.mxu0 0
    %605 = vmatpush1.bf16.msra.mxu0 0
    %606 = vmatprep.subr.bf16.mxu0 0
    %607 = vmatpush1.bf16.msra.mxu0 0
    %608 = vmatprep.subr.bf16.mxu0 0
    %609 = vmatpush1.bf16.msra.mxu0 0
    %610 = vmatprep.mubr.bf16.mxu0 0
    %611 = vmatmul.mubr.bf16.gmra.mrb[0].mxu0 %v573
    %v612 = vpop.f32.mrb[0].mxu0
    %v613 = vadd.f32 0.0, %v612
    %v614 = vpop.f32.mrb[0].mxu0
    %v615 = vpop.f32.mrb[0].mxu0
    %v616 = vpop.f32.mrb[0].mxu0
    %617 = vdwg.mxu0
    %618 = vxpose.xlu0.c.b16.start [1/8] %v470, 128
    %619 = vxpose.xlu0.c.b16.cont [2/8] 0, 128
    %620 = vxpose.xlu0.c.b16.cont [3/8] 0, 128
    %621 = vxpose.xlu0.c.b16.cont [4/8] 0, 128
    %622 = vxpose.xlu0.c.b16.cont [5/8] 0, 128
    %623 = vxpose.xlu0.c.b16.cont [6/8] 0, 128
    %624 = vxpose.xlu0.c.b16.cont [7/8] 0, 128
    %625 = vxpose.xlu0.c.b16.end [8/8] 0, 128
    %v626 = vpop.trf.xlu0
    %v627 = vpop.trf.xlu0
    %v628 = vpop.trf.xlu0
    %v629 = vpop.trf.xlu0
    %v630 = vpop.trf.xlu0
    %v631 = vpop.trf.xlu0
    %v632 = vpop.trf.xlu0
    %v633 = vpop.trf.xlu0
    %v635 = vsel %vm508, %v626, 0
    %v638 = vsel %vm512, %v478, 0
    %640 = vmatprep.subr.bf16.mxu0 0
    %641 = vmatpush1.bf16.msra.mxu0 %v638
    %642 = vmatprep.subr.bf16.mxu0 0
    %643 = vmatpush1.bf16.msra.mxu0 0
    %644 = vmatprep.subr.bf16.mxu0 0
    %645 = vmatpush1.bf16.msra.mxu0 0
    %646 = vmatprep.subr.bf16.mxu0 0
    %647 = vmatpush1.bf16.msra.mxu0 0
    %648 = vmatprep.subr.bf16.mxu0 0
    %649 = vmatpush1.bf16.msra.mxu0 0
    %650 = vmatprep.subr.bf16.mxu0 0
    %651 = vmatpush1.bf16.msra.mxu0 0
    %652 = vmatprep.subr.bf16.mxu0 0
    %653 = vmatpush1.bf16.msra.mxu0 0
    %654 = vmatprep.subr.bf16.mxu0 0
    %655 = vmatpush1.bf16.msra.mxu0 0
    %656 = vmatprep.subr.bf16.mxu0 0
    %657 = vmatpush1.bf16.msra.mxu0 0
    %658 = vmatprep.subr.bf16.mxu0 0
    %659 = vmatpush1.bf16.msra.mxu0 0
    %660 = vmatprep.subr.bf16.mxu0 0
    %661 = vmatpush1.bf16.msra.mxu0 0
    %662 = vmatprep.subr.bf16.mxu0 0
    %663 = vmatpush1.bf16.msra.mxu0 0
    %664 = vmatprep.subr.bf16.mxu0 0
    %665 = vmatpush1.bf16.msra.mxu0 0
    %666 = vmatprep.subr.bf16.mxu0 0
    %667 = vmatpush1.bf16.msra.mxu0 0
    %668 = vmatprep.subr.bf16.mxu0 0
    %669 = vmatpush1.bf16.msra.mxu0 0
    %670 = vmatprep.subr.bf16.mxu0 0
    %671 = vmatpush1.bf16.msra.mxu0 0
    %672 = vmatprep.mubr.bf16.mxu0 0
    %673 = vmatmul.mubr.bf16.gmra.mrb[0].mxu0 %v635
    %v674 = vpop.f32.mrb[0].mxu0
    %v675 = vadd.f32 0.0, %v674
    %v676 = vpop.f32.mrb[0].mxu0
    %v677 = vpop.f32.mrb[0].mxu0
    %v678 = vpop.f32.mrb[0].mxu0
    %679 = vdwg.mxu0
    %680 = vxpose.xlu0.c.b16.start [1/8] %v471, 128
    %681 = vxpose.xlu0.c.b16.cont [2/8] 0, 128
    %682 = vxpose.xlu0.c.b16.cont [3/8] 0, 128
    %683 = vxpose.xlu0.c.b16.cont [4/8] 0, 128
    %684 = vxpose.xlu0.c.b16.cont [5/8] 0, 128
    %685 = vxpose.xlu0.c.b16.cont [6/8] 0, 128
    %686 = vxpose.xlu0.c.b16.cont [7/8] 0, 128
    %687 = vxpose.xlu0.c.b16.end [8/8] 0, 128
    %v688 = vpop.trf.xlu0
    %v689 = vpop.trf.xlu0
    %v690 = vpop.trf.xlu0
    %v691 = vpop.trf.xlu0
    %v692 = vpop.trf.xlu0
    %v693 = vpop.trf.xlu0
    %v694 = vpop.trf.xlu0
    %v695 = vpop.trf.xlu0
    %v697 = vsel %vm508, %v688, 0
    %v700 = vsel %vm512, %v479, 0
    %702 = vmatprep.subr.bf16.mxu0 0
    %703 = vmatpush1.bf16.msra.mxu0 %v700
    %704 = vmatprep.subr.bf16.mxu0 0
    %705 = vmatpush1.bf16.msra.mxu0 0
    %706 = vmatprep.subr.bf16.mxu0 0
    %707 = vmatpush1.bf16.msra.mxu0 0
    %708 = vmatprep.subr.bf16.mxu0 0
    %709 = vmatpush1.bf16.msra.mxu0 0
    %710 = vmatprep.subr.bf16.mxu0 0
    %711 = vmatpush1.bf16.msra.mxu0 0
    %712 = vmatprep.subr.bf16.mxu0 0
    %713 = vmatpush1.bf16.msra.mxu0 0
    %714 = vmatprep.subr.bf16.mxu0 0
    %715 = vmatpush1.bf16.msra.mxu0 0
    %716 = vmatprep.subr.bf16.mxu0 0
    %717 = vmatpush1.bf16.msra.mxu0 0
    %718 = vmatprep.subr.bf16.mxu0 0
    %719 = vmatpush1.bf16.msra.mxu0 0
    %720 = vmatprep.subr.bf16.mxu0 0
    %721 = vmatpush1.bf16.msra.mxu0 0
    %722 = vmatprep.subr.bf16.mxu0 0
    %723 = vmatpush1.bf16.msra.mxu0 0
    %724 = vmatprep.subr.bf16.mxu0 0
    %725 = vmatpush1.bf16.msra.mxu0 0
    %726 = vmatprep.subr.bf16.mxu0 0
    %727 = vmatpush1.bf16.msra.mxu0 0
    %728 = vmatprep.subr.bf16.mxu0 0
    %729 = vmatpush1.bf16.msra.mxu0 0
    %730 = vmatprep.subr.bf16.mxu0 0
    %731 = vmatpush1.bf16.msra.mxu0 0
    %732 = vmatprep.subr.bf16.mxu0 0
    %733 = vmatpush1.bf16.msra.mxu0 0
    %734 = vmatprep.mubr.bf16.mxu0 0
    %735 = vmatmul.mubr.bf16.gmra.mrb[0].mxu0 %v697
    %v736 = vpop.f32.mrb[0].mxu0
    %v737 = vadd.f32 0.0, %v736
    %v738 = vpop.f32.mrb[0].mxu0
    %v739 = vpop.f32.mrb[0].mxu0
    %v740 = vpop.f32.mrb[0].mxu0
    %741 = vdwg.mxu0
    %742 = vxpose.xlu0.c.b16.start [1/8] %v472, 128
    %743 = vxpose.xlu0.c.b16.cont [2/8] 0, 128
    %744 = vxpose.xlu0.c.b16.cont [3/8] 0, 128
    %745 = vxpose.xlu0.c.b16.cont [4/8] 0, 128
    %746 = vxpose.xlu0.c.b16.cont [5/8] 0, 128
    %747 = vxpose.xlu0.c.b16.cont [6/8] 0, 128
    %748 = vxpose.xlu0.c.b16.cont [7/8] 0, 128
    %749 = vxpose.xlu0.c.b16.end [8/8] 0, 128
    %v750 = vpop.trf.xlu0
    %v751 = vpop.trf.xlu0
    %v752 = vpop.trf.xlu0
    %v753 = vpop.trf.xlu0
    %v754 = vpop.trf.xlu0
    %v755 = vpop.trf.xlu0
    %v756 = vpop.trf.xlu0
    %v757 = vpop.trf.xlu0
    %v759 = vsel %vm508, %v750, 0
    %v762 = vsel %vm512, %v480, 0
    %764 = vmatprep.subr.bf16.mxu0 0
    %765 = vmatpush1.bf16.msra.mxu0 %v762
    %766 = vmatprep.subr.bf16.mxu0 0
    %767 = vmatpush1.bf16.msra.mxu0 0
    %768 = vmatprep.subr.bf16.mxu0 0
    %769 = vmatpush1.bf16.msra.mxu0 0
    %770 = vmatprep.subr.bf16.mxu0 0
    %771 = vmatpush1.bf16.msra.mxu0 0
    %772 = vmatprep.subr.bf16.mxu0 0
    %773 = vmatpush1.bf16.msra.mxu0 0
    %774 = vmatprep.subr.bf16.mxu0 0
    %775 = vmatpush1.bf16.msra.mxu0 0
    %776 = vmatprep.subr.bf16.mxu0 0
    %777 = vmatpush1.bf16.msra.mxu0 0
    %778 = vmatprep.subr.bf16.mxu0 0
    %779 = vmatpush1.bf16.msra.mxu0 0
    %780 = vmatprep.subr.bf16.mxu0 0
    %781 = vmatpush1.bf16.msra.mxu0 0
    %782 = vmatprep.subr.bf16.mxu0 0
    %783 = vmatpush1.bf16.msra.mxu0 0
    %784 = vmatprep.subr.bf16.mxu0 0
    %785 = vmatpush1.bf16.msra.mxu0 0
    %786 = vmatprep.subr.bf16.mxu0 0
    %787 = vmatpush1.bf16.msra.mxu0 0
    %788 = vmatprep.subr.bf16.mxu0 0
    %789 = vmatpush1.bf16.msra.mxu0 0
    %790 = vmatprep.subr.bf16.mxu0 0
    %791 = vmatpush1.bf16.msra.mxu0 0
    %792 = vmatprep.subr.bf16.mxu0 0
    %793 = vmatpush1.bf16.msra.mxu0 0
    %794 = vmatprep.subr.bf16.mxu0 0
    %795 = vmatpush1.bf16.msra.mxu0 0
    %796 = vmatprep.mubr.bf16.mxu0 0
    %797 = vmatmul.mubr.bf16.gmra.mrb[0].mxu0 %v759
    %v798 = vpop.f32.mrb[0].mxu0
    %v799 = vadd.f32 0.0, %v798
    %v800 = vpop.f32.mrb[0].mxu0
    %v801 = vpop.f32.mrb[0].mxu0
    %v802 = vpop.f32.mrb[0].mxu0
    %803 = vdwg.mxu0
    %804 = vxpose.xlu0.c.b16.start [1/8] %v473, 128
    %805 = vxpose.xlu0.c.b16.cont [2/8] 0, 128
    %806 = vxpose.xlu0.c.b16.cont [3/8] 0, 128
    %807 = vxpose.xlu0.c.b16.cont [4/8] 0, 128
    %808 = vxpose.xlu0.c.b16.cont [5/8] 0, 128
    %809 = vxpose.xlu0.c.b16.cont [6/8] 0, 128
    %810 = vxpose.xlu0.c.b16.cont [7/8] 0, 128
    %811 = vxpose.xlu0.c.b16.end [8/8] 0, 128
    %v812 = vpop.trf.xlu0
    %v813 = vpop.trf.xlu0
    %v814 = vpop.trf.xlu0
    %v815 = vpop.trf.xlu0
    %v816 = vpop.trf.xlu0
    %v817 = vpop.trf.xlu0
    %v818 = vpop.trf.xlu0
    %v819 = vpop.trf.xlu0
    %v821 = vsel %vm508, %v812, 0
    %v824 = vsel %vm512, %v481, 0
    %826 = vmatprep.subr.bf16.mxu0 0
    %827 = vmatpush1.bf16.msra.mxu0 %v824
    %828 = vmatprep.subr.bf16.mxu0 0
    %829 = vmatpush1.bf16.msra.mxu0 0
    %830 = vmatprep.subr.bf16.mxu0 0
    %831 = vmatpush1.bf16.msra.mxu0 0
    %832 = vmatprep.subr.bf16.mxu0 0
    %833 = vmatpush1.bf16.msra.mxu0 0
    %834 = vmatprep.subr.bf16.mxu0 0
    %835 = vmatpush1.bf16.msra.mxu0 0
    %836 = vmatprep.subr.bf16.mxu0 0
    %837 = vmatpush1.bf16.msra.mxu0 0
    %838 = vmatprep.subr.bf16.mxu0 0
    %839 = vmatpush1.bf16.msra.mxu0 0
    %840 = vmatprep.subr.bf16.mxu0 0
    %841 = vmatpush1.bf16.msra.mxu0 0
    %842 = vmatprep.subr.bf16.mxu0 0
    %843 = vmatpush1.bf16.msra.mxu0 0
    %844 = vmatprep.subr.bf16.mxu0 0
    %845 = vmatpush1.bf16.msra.mxu0 0
    %846 = vmatprep.subr.bf16.mxu0 0
    %847 = vmatpush1.bf16.msra.mxu0 0
    %848 = vmatprep.subr.bf16.mxu0 0
    %849 = vmatpush1.bf16.msra.mxu0 0
    %850 = vmatprep.subr.bf16.mxu0 0
    %851 = vmatpush1.bf16.msra.mxu0 0
    %852 = vmatprep.subr.bf16.mxu0 0
    %853 = vmatpush1.bf16.msra.mxu0 0
    %854 = vmatprep.subr.bf16.mxu0 0
    %855 = vmatpush1.bf16.msra.mxu0 0
    %856 = vmatprep.subr.bf16.mxu0 0
    %857 = vmatpush1.bf16.msra.mxu0 0
    %858 = vmatprep.mubr.bf16.mxu0 0
    %859 = vmatmul.mubr.bf16.gmra.mrb[0].mxu0 %v821
    %v860 = vpop.f32.mrb[0].mxu0
    %v861 = vadd.f32 0.0, %v860
    %v862 = vpop.f32.mrb[0].mxu0
    %v863 = vpop.f32.mrb[0].mxu0
    %v864 = vpop.f32.mrb[0].mxu0
    %865 = vdwg.mxu0
    %866 = vxpose.xlu0.c.b16.start [1/8] %v474, 128
    %867 = vxpose.xlu0.c.b16.cont [2/8] 0, 128
    %868 = vxpose.xlu0.c.b16.cont [3/8] 0, 128
    %869 = vxpose.xlu0.c.b16.cont [4/8] 0, 128
    %870 = vxpose.xlu0.c.b16.cont [5/8] 0, 128
    %871 = vxpose.xlu0.c.b16.cont [6/8] 0, 128
    %872 = vxpose.xlu0.c.b16.cont [7/8] 0, 128
    %873 = vxpose.xlu0.c.b16.end [8/8] 0, 128
    %v874 = vpop.trf.xlu0
    %v875 = vpop.trf.xlu0
    %v876 = vpop.trf.xlu0
    %v877 = vpop.trf.xlu0
    %v878 = vpop.trf.xlu0
    %v879 = vpop.trf.xlu0
    %v880 = vpop.trf.xlu0
    %v881 = vpop.trf.xlu0
    %v883 = vsel %vm508, %v874, 0
    %v886 = vsel %vm512, %v482, 0
    %888 = vmatprep.subr.bf16.mxu0 0
    %889 = vmatpush1.bf16.msra.mxu0 %v886
    %890 = vmatprep.subr.bf16.mxu0 0
    %891 = vmatpush1.bf16.msra.mxu0 0
    %892 = vmatprep.subr.bf16.mxu0 0
    %893 = vmatpush1.bf16.msra.mxu0 0
    %894 = vmatprep.subr.bf16.mxu0 0
    %895 = vmatpush1.bf16.msra.mxu0 0
    %896 = vmatprep.subr.bf16.mxu0 0
    %897 = vmatpush1.bf16.msra.mxu0 0
    %898 = vmatprep.subr.bf16.mxu0 0
    %899 = vmatpush1.bf16.msra.mxu0 0
    %900 = vmatprep.subr.bf16.mxu0 0
    %901 = vmatpush1.bf16.msra.mxu0 0
    %902 = vmatprep.subr.bf16.mxu0 0
    %903 = vmatpush1.bf16.msra.mxu0 0
    %904 = vmatprep.subr.bf16.mxu0 0
    %905 = vmatpush1.bf16.msra.mxu0 0
    %906 = vmatprep.subr.bf16.mxu0 0
    %907 = vmatpush1.bf16.msra.mxu0 0
    %908 = vmatprep.subr.bf16.mxu0 0
    %909 = vmatpush1.bf16.msra.mxu0 0
    %910 = vmatprep.subr.bf16.mxu0 0
    %911 = vmatpush1.bf16.msra.mxu0 0
    %912 = vmatprep.subr.bf16.mxu0 0
    %913 = vmatpush1.bf16.msra.mxu0 0
    %914 = vmatprep.subr.bf16.mxu0 0
    %915 = vmatpush1.bf16.msra.mxu0 0
    %916 = vmatprep.subr.bf16.mxu0 0
    %917 = vmatpush1.bf16.msra.mxu0 0
    %918 = vmatprep.subr.bf16.mxu0 0
    %919 = vmatpush1.bf16.msra.mxu0 0
    %920 = vmatprep.mubr.bf16.mxu0 0
    %921 = vmatmul.mubr.bf16.gmra.mrb[0].mxu0 %v883
    %v922 = vpop.f32.mrb[0].mxu0
    %v923 = vadd.f32 0.0, %v922
    %v924 = vpop.f32.mrb[0].mxu0
    %v925 = vpop.f32.mrb[0].mxu0
    %v926 = vpop.f32.mrb[0].mxu0
    %927 = vdwg.mxu0
    %928 = vxpose.xlu0.c.b16.start [1/8] %v475, 128
    %929 = vxpose.xlu0.c.b16.cont [2/8] 0, 128
    %930 = vxpose.xlu0.c.b16.cont [3/8] 0, 128
    %931 = vxpose.xlu0.c.b16.cont [4/8] 0, 128
    %932 = vxpose.xlu0.c.b16.cont [5/8] 0, 128
    %933 = vxpose.xlu0.c.b16.cont [6/8] 0, 128
    %934 = vxpose.xlu0.c.b16.cont [7/8] 0, 128
    %935 = vxpose.xlu0.c.b16.end [8/8] 0, 128
    %v936 = vpop.trf.xlu0
    %v937 = vpop.trf.xlu0
    %v938 = vpop.trf.xlu0
    %v939 = vpop.trf.xlu0
    %v940 = vpop.trf.xlu0
    %v941 = vpop.trf.xlu0
    %v942 = vpop.trf.xlu0
    %v943 = vpop.trf.xlu0
    %v945 = vsel %vm508, %v936, 0
    %v948 = vsel %vm512, %v483, 0
    %950 = vmatprep.subr.bf16.mxu0 0
    %951 = vmatpush1.bf16.msra.mxu0 %v948
    %952 = vmatprep.subr.bf16.mxu0 0
    %953 = vmatpush1.bf16.msra.mxu0 0
    %954 = vmatprep.subr.bf16.mxu0 0
    %955 = vmatpush1.bf16.msra.mxu0 0
    %956 = vmatprep.subr.bf16.mxu0 0
    %957 = vmatpush1.bf16.msra.mxu0 0
    %958 = vmatprep.subr.bf16.mxu0 0
    %959 = vmatpush1.bf16.msra.mxu0 0
    %960 = vmatprep.subr.bf16.mxu0 0
    %961 = vmatpush1.bf16.msra.mxu0 0
    %962 = vmatprep.subr.bf16.mxu0 0
    %963 = vmatpush1.bf16.msra.mxu0 0
    %964 = vmatprep.subr.bf16.mxu0 0
    %965 = vmatpush1.bf16.msra.mxu0 0
    %966 = vmatprep.subr.bf16.mxu0 0
    %967 = vmatpush1.bf16.msra.mxu0 0
    %968 = vmatprep.subr.bf16.mxu0 0
    %969 = vmatpush1.bf16.msra.mxu0 0
    %970 = vmatprep.subr.bf16.mxu0 0
    %971 = vmatpush1.bf16.msra.mxu0 0
    %972 = vmatprep.subr.bf16.mxu0 0
    %973 = vmatpush1.bf16.msra.mxu0 0
    %974 = vmatprep.subr.bf16.mxu0 0
    %975 = vmatpush1.bf16.msra.mxu0 0
    %976 = vmatprep.subr.bf16.mxu0 0
    %977 = vmatpush1.bf16.msra.mxu0 0
    %978 = vmatprep.subr.bf16.mxu0 0
    %979 = vmatpush1.bf16.msra.mxu0 0
    %980 = vmatprep.subr.bf16.mxu0 0
    %981 = vmatpush1.bf16.msra.mxu0 0
    %982 = vmatprep.mubr.bf16.mxu0 0
    %983 = vmatmul.mubr.bf16.gmra.mrb[0].mxu0 %v945
    %v984 = vpop.f32.mrb[0].mxu0
    %v985 = vadd.f32 0.0, %v984
    %v986 = vpop.f32.mrb[0].mxu0
    %v987 = vpop.f32.mrb[0].mxu0
    %v988 = vpop.f32.mrb[0].mxu0
    %989 = vdwg.mxu0
    %v990 = vsel %vm508, %v551, -inf
    %991 = vmax.xlane.f32.xlu0 %v990
    %v992 = vpop.xlane.xlu0 %991
    %v993 = vsel %vm508, %v613, -inf
    %994 = vmax.xlane.f32.xlu0 %v993
    %v995 = vpop.xlane.xlu0 %994
    %v996 = vsel %vm508, %v675, -inf
    %997 = vmax.xlane.f32.xlu0 %v996
    %v998 = vpop.xlane.xlu0 %997
    %v999 = vsel %vm508, %v737, -inf
    %1000 = vmax.xlane.f32.xlu0 %v999
    %v1001 = vpop.xlane.xlu0 %1000
    %v1002 = vsel %vm508, %v799, -inf
    %1003 = vmax.xlane.f32.xlu0 %v1002
    %v1004 = vpop.xlane.xlu0 %1003
    %v1005 = vsel %vm508, %v861, -inf
    %1006 = vmax.xlane.f32.xlu0 %v1005
    %v1007 = vpop.xlane.xlu0 %1006
    %v1008 = vsel %vm508, %v923, -inf
    %1009 = vmax.xlane.f32.xlu0 %v1008
    %v1010 = vpop.xlane.xlu0 %1009
    %v1011 = vsel %vm508, %v985, -inf
    %1012 = vmax.xlane.f32.xlu0 %v1011
    %v1013 = vpop.xlane.xlu0 %1012
    %v1014 = vsub.f32 %v551, %v992
    %v1015 = vsub.f32 %v613, %v995
    %v1016 = vsub.f32 %v675, %v998
    %v1017 = vsub.f32 %v737, %v1001
    %v1018 = vsub.f32 %v799, %v1004
    %v1019 = vsub.f32 %v861, %v1007
    %v1020 = vsub.f32 %v923, %v1010
    %v1021 = vsub.f32 %v985, %v1013
    %v1022 = vmul.f32 %v1014, 1.442695
    %v1023 = vpow.pop %v1022
    %v1024 = vmul.f32 %v1015, 1.442695
    %v1025 = vpow.pop %v1024
    %v1026 = vmul.f32 %v1016, 1.442695
    %v1027 = vpow.pop %v1026
    %v1028 = vmul.f32 %v1017, 1.442695
    %v1029 = vpow.pop %v1028
    %v1030 = vmul.f32 %v1018, 1.442695
    %v1031 = vpow.pop %v1030
    %v1032 = vmul.f32 %v1019, 1.442695
    %v1033 = vpow.pop %v1032
    %v1034 = vmul.f32 %v1020, 1.442695
    %v1035 = vpow.pop %v1034
    %v1036 = vmul.f32 %v1021, 1.442695
    %v1037 = vpow.pop %v1036
    %v1038 = vld [vmem:[%s1] sm:$0xff]
    %v1039 = vmul.f32 %v1023, %v1038
    %v1040 = vmul.f32 %v1025, %v1038
    %v1041 = vmul.f32 %v1027, %v1038
    %v1042 = vmul.f32 %v1029, %v1038
    %v1043 = vmul.f32 %v1031, %v1038
    %v1044 = vmul.f32 %v1033, %v1038
    %v1045 = vmul.f32 %v1035, %v1038
    %v1046 = vmul.f32 %v1037, %v1038
    %v1047 = vsel %vm508, %v1039, 0.0
    %1048 = vadd.xlane.f32.xlu0 %v1047
    %v1049 = vpop.xlane.xlu0 %1048
    %v1050 = vsel %vm508, %v1040, 0.0
    %1051 = vadd.xlane.f32.xlu0 %v1050
    %v1052 = vpop.xlane.xlu0 %1051
    %v1053 = vsel %vm508, %v1041, 0.0
    %1054 = vadd.xlane.f32.xlu0 %v1053
    %v1055 = vpop.xlane.xlu0 %1054
    %v1056 = vsel %vm508, %v1042, 0.0
    %1057 = vadd.xlane.f32.xlu0 %v1056
    %v1058 = vpop.xlane.xlu0 %1057
    %v1059 = vsel %vm508, %v1043, 0.0
    %1060 = vadd.xlane.f32.xlu0 %v1059
    %v1061 = vpop.xlane.xlu0 %1060
    %v1062 = vsel %vm508, %v1044, 0.0
    %1063 = vadd.xlane.f32.xlu0 %v1062
    %v1064 = vpop.xlane.xlu0 %1063
    %v1065 = vsel %vm508, %v1045, 0.0
    %1066 = vadd.xlane.f32.xlu0 %v1065
    %v1067 = vpop.xlane.xlu0 %1066
    %v1068 = vsel %vm508, %v1046, 0.0
    %1069 = vadd.xlane.f32.xlu0 %v1068
    %v1070 = vpop.xlane.xlu0 %1069
    %v1071 = vrcp.pop %v1049
    %v1072 = vrcp.pop %v1052
    %v1073 = vrcp.pop %v1055
    %v1074 = vrcp.pop %v1058
    %v1075 = vrcp.pop %v1061
    %v1076 = vrcp.pop %v1064
    %v1077 = vrcp.pop %v1067
    %v1078 = vrcp.pop %v1070
    %v1079 = vmul.f32 %v1039, %v1071
    %v1080 = vmul.f32 %v1040, %v1072
    %v1081 = vmul.f32 %v1041, %v1073
    %v1082 = vmul.f32 %v1042, %v1074
    %v1083 = vmul.f32 %v1043, %v1075
    %v1084 = vmul.f32 %v1044, %v1076
    %v1085 = vmul.f32 %v1045, %v1077
    %v1086 = vmul.f32 %v1046, %v1078
    %v1087 = vpack.c.bf16 %v1079, %v1079
    %v1088 = vpack.c.bf16 %v1080, %v1080
    %v1089 = vpack.c.bf16 %v1081, %v1081
    %v1090 = vpack.c.bf16 %v1082, %v1082
    %v1091 = vpack.c.bf16 %v1083, %v1083
    %v1092 = vpack.c.bf16 %v1084, %v1084
    %v1093 = vpack.c.bf16 %v1085, %v1085
    %v1094 = vpack.c.bf16 %v1086, %v1086
    %v1096 = vsel %vm508, %v1087, 0
    %v1099 = vsel %vm508, %v484, 0
    %1101 = vmatprep.subr.bf16.mxu0 0
    %1102 = vmatpush1.bf16.xpose.msra.mxu0 %v1099
    %1103 = vmatprep.subr.bf16.mxu0 0
    %1104 = vmatpush1.bf16.xpose.msra.mxu0 0
    %1105 = vmatprep.subr.bf16.mxu0 0
    %1106 = vmatpush1.bf16.xpose.msra.mxu0 0
    %1107 = vmatprep.subr.bf16.mxu0 0
    %1108 = vmatpush1.bf16.xpose.msra.mxu0 0
    %1109 = vmatprep.subr.bf16.mxu0 0
    %1110 = vmatpush1.bf16.xpose.msra.mxu0 0
    %1111 = vmatprep.subr.bf16.mxu0 0
    %1112 = vmatpush1.bf16.xpose.msra.mxu0 0
    %1113 = vmatprep.subr.bf16.mxu0 0
    %1114 = vmatpush1.bf16.xpose.msra.mxu0 0
    %1115 = vmatprep.subr.bf16.mxu0 0
    %1116 = vmatpush1.bf16.xpose.msra.mxu0 0
    %1117 = vmatprep.subr.bf16.mxu0 0
    %1118 = vmatpush1.bf16.xpose.msra.mxu0 0
    %1119 = vmatprep.subr.bf16.mxu0 0
    %1120 = vmatpush1.bf16.xpose.msra.mxu0 0
    %1121 = vmatprep.subr.bf16.mxu0 0
    %1122 = vmatpush1.bf16.xpose.msra.mxu0 0
    %1123 = vmatprep.subr.bf16.mxu0 0
    %1124 = vmatpush1.bf16.xpose.msra.mxu0 0
    %1125 = vmatprep.subr.bf16.mxu0 0
    %1126 = vmatpush1.bf16.xpose.msra.mxu0 0
    %1127 = vmatprep.subr.bf16.mxu0 0
    %1128 = vmatpush1.bf16.xpose.msra.mxu0 0
    %1129 = vmatprep.subr.bf16.mxu0 0
    %1130 = vmatpush1.bf16.xpose.msra.mxu0 0
    %1131 = vmatprep.subr.bf16.mxu0 0
    %1132 = vmatpush1.bf16.xpose.msra.mxu0 0
    %1133 = vmatprep.mubr.bf16.mxu0 0
    %1134 = vmatmul.mubr.bf16.gmra.mrb[0].mxu0 %v1096
    %v1135 = vpop.f32.mrb[0].mxu0
    %v1136 = vadd.f32 0.0, %v1135
    %v1137 = vpop.f32.mrb[0].mxu0
    %v1138 = vpop.f32.mrb[0].mxu0
    %v1139 = vpop.f32.mrb[0].mxu0
    %1140 = vdwg.mxu0
    %v1142 = vsel %vm508, %v1088, 0
    %v1145 = vsel %vm508, %v485, 0
    %1147 = vmatprep.subr.bf16.mxu0 0
    %1148 = vmatpush1.bf16.xpose.msra.mxu0 %v1145
    %1149 = vmatprep.subr.bf16.mxu0 0
    %1150 = vmatpush1.bf16.xpose.msra.mxu0 0
    %1151 = vmatprep.subr.bf16.mxu0 0
    %1152 = vmatpush1.bf16.xpose.msra.mxu0 0
    %1153 = vmatprep.subr.bf16.mxu0 0
    %1154 = vmatpush1.bf16.xpose.msra.mxu0 0
    %1155 = vmatprep.subr.bf16.mxu0 0
    %1156 = vmatpush1.bf16.xpose.msra.mxu0 0
    %1157 = vmatprep.subr.bf16.mxu0 0
    %1158 = vmatpush1.bf16.xpose.msra.mxu0 0
    %1159 = vmatprep.subr.bf16.mxu0 0
    %1160 = vmatpush1.bf16.xpose.msra.mxu0 0
    %1161 = vmatprep.subr.bf16.mxu0 0
    %1162 = vmatpush1.bf16.xpose.msra.mxu0 0
    %1163 = vmatprep.subr.bf16.mxu0 0
    %1164 = vmatpush1.bf16.xpose.msra.mxu0 0
    %1165 = vmatprep.subr.bf16.mxu0 0
    %1166 = vmatpush1.bf16.xpose.msra.mxu0 0
    %1167 = vmatprep.subr.bf16.mxu0 0
    %1168 = vmatpush1.bf16.xpose.msra.mxu0 0
    %1169 = vmatprep.subr.bf16.mxu0 0
    %1170 = vmatpush1.bf16.xpose.msra.mxu0 0
    %1171 = vmatprep.subr.bf16.mxu0 0
    %1172 = vmatpush1.bf16.xpose.msra.mxu0 0
    %1173 = vmatprep.subr.bf16.mxu0 0
    %1174 = vmatpush1.bf16.xpose.msra.mxu0 0
    %1175 = vmatprep.subr.bf16.mxu0 0
    %1176 = vmatpush1.bf16.xpose.msra.mxu0 0
    %1177 = vmatprep.subr.bf16.mxu0 0
    %1178 = vmatpush1.bf16.xpose.msra.mxu0 0
    %1179 = vmatprep.mubr.bf16.mxu0 0
    %1180 = vmatmul.mubr.bf16.gmra.mrb[0].mxu0 %v1142
    %v1181 = vpop.f32.mrb[0].mxu0
    %v1182 = vadd.f32 0.0, %v1181
    %v1183 = vpop.f32.mrb[0].mxu0
    %v1184 = vpop.f32.mrb[0].mxu0
    %v1185 = vpop.f32.mrb[0].mxu0
    %1186 = vdwg.mxu0
    %v1188 = vsel %vm508, %v1089, 0
    %v1191 = vsel %vm508, %v486, 0
    %1193 = vmatprep.subr.bf16.mxu0 0
    %1194 = vmatpush1.bf16.xpose.msra.mxu0 %v1191
    %1195 = vmatprep.subr.bf16.mxu0 0
    %1196 = vmatpush1.bf16.xpose.msra.mxu0 0
    %1197 = vmatprep.subr.bf16.mxu0 0
    %1198 = vmatpush1.bf16.xpose.msra.mxu0 0
    %1199 = vmatprep.subr.bf16.mxu0 0
    %1200 = vmatpush1.bf16.xpose.msra.mxu0 0
    %1201 = vmatprep.subr.bf16.mxu0 0
    %1202 = vmatpush1.bf16.xpose.msra.mxu0 0
    %1203 = vmatprep.subr.bf16.mxu0 0
    %1204 = vmatpush1.bf16.xpose.msra.mxu0 0
    %1205 = vmatprep.subr.bf16.mxu0 0
    %1206 = vmatpush1.bf16.xpose.msra.mxu0 0
    %1207 = vmatprep.subr.bf16.mxu0 0
    %1208 = vmatpush1.bf16.xpose.msra.mxu0 0
    %1209 = vmatprep.subr.bf16.mxu0 0
    %1210 = vmatpush1.bf16.xpose.msra.mxu0 0
    %1211 = vmatprep.subr.bf16.mxu0 0
    %1212 = vmatpush1.bf16.xpose.msra.mxu0 0
    %1213 = vmatprep.subr.bf16.mxu0 0
    %1214 = vmatpush1.bf16.xpose.msra.mxu0 0
    %1215 = vmatprep.subr.bf16.mxu0 0
    %1216 = vmatpush1.bf16.xpose.msra.mxu0 0
    %1217 = vmatprep.subr.bf16.mxu0 0
    %1218 = vmatpush1.bf16.xpose.msra.mxu0 0
    %1219 = vmatprep.subr.bf16.mxu0 0
    %1220 = vmatpush1.bf16.xpose.msra.mxu0 0
    %1221 = vmatprep.subr.bf16.mxu0 0
    %1222 = vmatpush1.bf16.xpose.msra.mxu0 0
    %1223 = vmatprep.subr.bf16.mxu0 0
    %1224 = vmatpush1.bf16.xpose.msra.mxu0 0
    %1225 = vmatprep.mubr.bf16.mxu0 0
    %1226 = vmatmul.mubr.bf16.gmra.mrb[0].mxu0 %v1188
    %v1227 = vpop.f32.mrb[0].mxu0
    %v1228 = vadd.f32 0.0, %v1227
    %v1229 = vpop.f32.mrb[0].mxu0
    %v1230 = vpop.f32.mrb[0].mxu0
    %v1231 = vpop.f32.mrb[0].mxu0
    %1232 = vdwg.mxu0
    %v1234 = vsel %vm508, %v1090, 0
    %v1237 = vsel %vm508, %v487, 0
    %1239 = vmatprep.subr.bf16.mxu0 0
    %1240 = vmatpush1.bf16.xpose.msra.mxu0 %v1237
    %1241 = vmatprep.subr.bf16.mxu0 0
    %1242 = vmatpush1.bf16.xpose.msra.mxu0 0
    %1243 = vmatprep.subr.bf16.mxu0 0
    %1244 = vmatpush1.bf16.xpose.msra.mxu0 0
    %1245 = vmatprep.subr.bf16.mxu0 0
    %1246 = vmatpush1.bf16.xpose.msra.mxu0 0
    %1247 = vmatprep.subr.bf16.mxu0 0
    %1248 = vmatpush1.bf16.xpose.msra.mxu0 0
    %1249 = vmatprep.subr.bf16.mxu0 0
    %1250 = vmatpush1.bf16.xpose.msra.mxu0 0
    %1251 = vmatprep.subr.bf16.mxu0 0
    %1252 = vmatpush1.bf16.xpose.msra.mxu0 0
    %1253 = vmatprep.subr.bf16.mxu0 0
    %1254 = vmatpush1.bf16.xpose.msra.mxu0 0
    %1255 = vmatprep.subr.bf16.mxu0 0
    %1256 = vmatpush1.bf16.xpose.msra.mxu0 0
    %1257 = vmatprep.subr.bf16.mxu0 0
    %1258 = vmatpush1.bf16.xpose.msra.mxu0 0
    %1259 = vmatprep.subr.bf16.mxu0 0
    %1260 = vmatpush1.bf16.xpose.msra.mxu0 0
    %1261 = vmatprep.subr.bf16.mxu0 0
    %1262 = vmatpush1.bf16.xpose.msra.mxu0 0
    %1263 = vmatprep.subr.bf16.mxu0 0
    %1264 = vmatpush1.bf16.xpose.msra.mxu0 0
    %1265 = vmatprep.subr.bf16.mxu0 0
    %1266 = vmatpush1.bf16.xpose.msra.mxu0 0
    %1267 = vmatprep.subr.bf16.mxu0 0
    %1268 = vmatpush1.bf16.xpose.msra.mxu0 0
    %1269 = vmatprep.subr.bf16.mxu0 0
    %1270 = vmatpush1.bf16.xpose.msra.mxu0 0
    %1271 = vmatprep.mubr.bf16.mxu0 0
    %1272 = vmatmul.mubr.bf16.gmra.mrb[0].mxu0 %v1234
    %v1273 = vpop.f32.mrb[0].mxu0
    %v1274 = vadd.f32 0.0, %v1273
    %v1275 = vpop.f32.mrb[0].mxu0
    %v1276 = vpop.f32.mrb[0].mxu0
    %v1277 = vpop.f32.mrb[0].mxu0
    %1278 = vdwg.mxu0
    %v1280 = vsel %vm508, %v1091, 0
    %v1283 = vsel %vm508, %v488, 0
    %1285 = vmatprep.subr.bf16.mxu0 0
    %1286 = vmatpush1.bf16.xpose.msra.mxu0 %v1283
    %1287 = vmatprep.subr.bf16.mxu0 0
    %1288 = vmatpush1.bf16.xpose.msra.mxu0 0
    %1289 = vmatprep.subr.bf16.mxu0 0
    %1290 = vmatpush1.bf16.xpose.msra.mxu0 0
    %1291 = vmatprep.subr.bf16.mxu0 0
    %1292 = vmatpush1.bf16.xpose.msra.mxu0 0
    %1293 = vmatprep.subr.bf16.mxu0 0
    %1294 = vmatpush1.bf16.xpose.msra.mxu0 0
    %1295 = vmatprep.subr.bf16.mxu0 0
    %1296 = vmatpush1.bf16.xpose.msra.mxu0 0
    %1297 = vmatprep.subr.bf16.mxu0 0
    %1298 = vmatpush1.bf16.xpose.msra.mxu0 0
    %1299 = vmatprep.subr.bf16.mxu0 0
    %1300 = vmatpush1.bf16.xpose.msra.mxu0 0
    %1301 = vmatprep.subr.bf16.mxu0 0
    %1302 = vmatpush1.bf16.xpose.msra.mxu0 0
    %1303 = vmatprep.subr.bf16.mxu0 0
    %1304 = vmatpush1.bf16.xpose.msra.mxu0 0
    %1305 = vmatprep.subr.bf16.mxu0 0
    %1306 = vmatpush1.bf16.xpose.msra.mxu0 0
    %1307 = vmatprep.subr.bf16.mxu0 0
    %1308 = vmatpush1.bf16.xpose.msra.mxu0 0
    %1309 = vmatprep.subr.bf16.mxu0 0
    %1310 = vmatpush1.bf16.xpose.msra.mxu0 0
    %1311 = vmatprep.subr.bf16.mxu0 0
    %1312 = vmatpush1.bf16.xpose.msra.mxu0 0
    %1313 = vmatprep.subr.bf16.mxu0 0
    %1314 = vmatpush1.bf16.xpose.msra.mxu0 0
    %1315 = vmatprep.subr.bf16.mxu0 0
    %1316 = vmatpush1.bf16.xpose.msra.mxu0 0
    %1317 = vmatprep.mubr.bf16.mxu0 0
    %1318 = vmatmul.mubr.bf16.gmra.mrb[0].mxu0 %v1280
    %v1319 = vpop.f32.mrb[0].mxu0
    %v1320 = vadd.f32 0.0, %v1319
    %v1321 = vpop.f32.mrb[0].mxu0
    %v1322 = vpop.f32.mrb[0].mxu0
    %v1323 = vpop.f32.mrb[0].mxu0
    %1324 = vdwg.mxu0
    %v1326 = vsel %vm508, %v1092, 0
    %v1329 = vsel %vm508, %v489, 0
    %1331 = vmatprep.subr.bf16.mxu0 0
    %1332 = vmatpush1.bf16.xpose.msra.mxu0 %v1329
    %1333 = vmatprep.subr.bf16.mxu0 0
    %1334 = vmatpush1.bf16.xpose.msra.mxu0 0
    %1335 = vmatprep.subr.bf16.mxu0 0
    %1336 = vmatpush1.bf16.xpose.msra.mxu0 0
    %1337 = vmatprep.subr.bf16.mxu0 0
    %1338 = vmatpush1.bf16.xpose.msra.mxu0 0
    %1339 = vmatprep.subr.bf16.mxu0 0
    %1340 = vmatpush1.bf16.xpose.msra.mxu0 0
    %1341 = vmatprep.subr.bf16.mxu0 0
    %1342 = vmatpush1.bf16.xpose.msra.mxu0 0
    %1343 = vmatprep.subr.bf16.mxu0 0
    %1344 = vmatpush1.bf16.xpose.msra.mxu0 0
    %1345 = vmatprep.subr.bf16.mxu0 0
    %1346 = vmatpush1.bf16.xpose.msra.mxu0 0
    %1347 = vmatprep.subr.bf16.mxu0 0
    %1348 = vmatpush1.bf16.xpose.msra.mxu0 0
    %1349 = vmatprep.subr.bf16.mxu0 0
    %1350 = vmatpush1.bf16.xpose.msra.mxu0 0
    %1351 = vmatprep.subr.bf16.mxu0 0
    %1352 = vmatpush1.bf16.xpose.msra.mxu0 0
    %1353 = vmatprep.subr.bf16.mxu0 0
    %1354 = vmatpush1.bf16.xpose.msra.mxu0 0
    %1355 = vmatprep.subr.bf16.mxu0 0
    %1356 = vmatpush1.bf16.xpose.msra.mxu0 0
    %1357 = vmatprep.subr.bf16.mxu0 0
    %1358 = vmatpush1.bf16.xpose.msra.mxu0 0
    %1359 = vmatprep.subr.bf16.mxu0 0
    %1360 = vmatpush1.bf16.xpose.msra.mxu0 0
    %1361 = vmatprep.subr.bf16.mxu0 0
    %1362 = vmatpush1.bf16.xpose.msra.mxu0 0
    %1363 = vmatprep.mubr.bf16.mxu0 0
    %1364 = vmatmul.mubr.bf16.gmra.mrb[0].mxu0 %v1326
    %v1365 = vpop.f32.mrb[0].mxu0
    %v1366 = vadd.f32 0.0, %v1365
    %v1367 = vpop.f32.mrb[0].mxu0
    %v1368 = vpop.f32.mrb[0].mxu0
    %v1369 = vpop.f32.mrb[0].mxu0
    %1370 = vdwg.mxu0
    %v1372 = vsel %vm508, %v1093, 0
    %v1375 = vsel %vm508, %v490, 0
    %1377 = vmatprep.subr.bf16.mxu0 0
    %1378 = vmatpush1.bf16.xpose.msra.mxu0 %v1375
    %1379 = vmatprep.subr.bf16.mxu0 0
    %1380 = vmatpush1.bf16.xpose.msra.mxu0 0
    %1381 = vmatprep.subr.bf16.mxu0 0
    %1382 = vmatpush1.bf16.xpose.msra.mxu0 0
    %1383 = vmatprep.subr.bf16.mxu0 0
    %1384 = vmatpush1.bf16.xpose.msra.mxu0 0
    %1385 = vmatprep.subr.bf16.mxu0 0
    %1386 = vmatpush1.bf16.xpose.msra.mxu0 0
    %1387 = vmatprep.subr.bf16.mxu0 0
    %1388 = vmatpush1.bf16.xpose.msra.mxu0 0
    %1389 = vmatprep.subr.bf16.mxu0 0
    %1390 = vmatpush1.bf16.xpose.msra.mxu0 0
    %1391 = vmatprep.subr.bf16.mxu0 0
    %1392 = vmatpush1.bf16.xpose.msra.mxu0 0
    %1393 = vmatprep.subr.bf16.mxu0 0
    %1394 = vmatpush1.bf16.xpose.msra.mxu0 0
    %1395 = vmatprep.subr.bf16.mxu0 0
    %1396 = vmatpush1.bf16.xpose.msra.mxu0 0
    %1397 = vmatprep.subr.bf16.mxu0 0
    %1398 = vmatpush1.bf16.xpose.msra.mxu0 0
    %1399 = vmatprep.subr.bf16.mxu0 0
    %1400 = vmatpush1.bf16.xpose.msra.mxu0 0
    %1401 = vmatprep.subr.bf16.mxu0 0
    %1402 = vmatpush1.bf16.xpose.msra.mxu0 0
    %1403 = vmatprep.subr.bf16.mxu0 0
    %1404 = vmatpush1.bf16.xpose.msra.mxu0 0
    %1405 = vmatprep.subr.bf16.mxu0 0
    %1406 = vmatpush1.bf16.xpose.msra.mxu0 0
    %1407 = vmatprep.subr.bf16.mxu0 0
    %1408 = vmatpush1.bf16.xpose.msra.mxu0 0
    %1409 = vmatprep.mubr.bf16.mxu0 0
    %1410 = vmatmul.mubr.bf16.gmra.mrb[0].mxu0 %v1372
    %v1411 = vpop.f32.mrb[0].mxu0
    %v1412 = vadd.f32 0.0, %v1411
    %v1413 = vpop.f32.mrb[0].mxu0
    %v1414 = vpop.f32.mrb[0].mxu0
    %v1415 = vpop.f32.mrb[0].mxu0
    %1416 = vdwg.mxu0
    %v1418 = vsel %vm508, %v1094, 0
    %v1421 = vsel %vm508, %v491, 0
    %1423 = vmatprep.subr.bf16.mxu0 0
    %1424 = vmatpush1.bf16.xpose.msra.mxu0 %v1421
    %1425 = vmatprep.subr.bf16.mxu0 0
    %1426 = vmatpush1.bf16.xpose.msra.mxu0 0
    %1427 = vmatprep.subr.bf16.mxu0 0
    %1428 = vmatpush1.bf16.xpose.msra.mxu0 0
    %1429 = vmatprep.subr.bf16.mxu0 0
    %1430 = vmatpush1.bf16.xpose.msra.mxu0 0
    %1431 = vmatprep.subr.bf16.mxu0 0
    %1432 = vmatpush1.bf16.xpose.msra.mxu0 0
    %1433 = vmatprep.subr.bf16.mxu0 0
    %1434 = vmatpush1.bf16.xpose.msra.mxu0 0
    %1435 = vmatprep.subr.bf16.mxu0 0
    %1436 = vmatpush1.bf16.xpose.msra.mxu0 0
    %1437 = vmatprep.subr.bf16.mxu0 0
    %1438 = vmatpush1.bf16.xpose.msra.mxu0 0
    %1439 = vmatprep.subr.bf16.mxu0 0
    %1440 = vmatpush1.bf16.xpose.msra.mxu0 0
    %1441 = vmatprep.subr.bf16.mxu0 0
    %1442 = vmatpush1.bf16.xpose.msra.mxu0 0
    %1443 = vmatprep.subr.bf16.mxu0 0
    %1444 = vmatpush1.bf16.xpose.msra.mxu0 0
    %1445 = vmatprep.subr.bf16.mxu0 0
    %1446 = vmatpush1.bf16.xpose.msra.mxu0 0
    %1447 = vmatprep.subr.bf16.mxu0 0
    %1448 = vmatpush1.bf16.xpose.msra.mxu0 0
    %1449 = vmatprep.subr.bf16.mxu0 0
    %1450 = vmatpush1.bf16.xpose.msra.mxu0 0
    %1451 = vmatprep.subr.bf16.mxu0 0
    %1452 = vmatpush1.bf16.xpose.msra.mxu0 0
    %1453 = vmatprep.subr.bf16.mxu0 0
    %1454 = vmatpush1.bf16.xpose.msra.mxu0 0
    %1455 = vmatprep.mubr.bf16.mxu0 0
    %1456 = vmatmul.mubr.bf16.gmra.mrb[0].mxu0 %v1418
    %v1457 = vpop.f32.mrb[0].mxu0
    %v1458 = vadd.f32 0.0, %v1457
    %v1459 = vpop.f32.mrb[0].mxu0
    %v1460 = vpop.f32.mrb[0].mxu0
    %v1461 = vpop.f32.mrb[0].mxu0
    %1462 = vdwg.mxu0
    %v1463 = vpack.c.bf16 %v1136, %v1136
    %v1464 = vpack.c.bf16 %v1182, %v1182
    %v1465 = vpack.c.bf16 %v1228, %v1228
    %v1466 = vpack.c.bf16 %v1274, %v1274
    %v1467 = vpack.c.bf16 %v1320, %v1320
    %v1468 = vpack.c.bf16 %v1366, %v1366
    %v1469 = vpack.c.bf16 %v1412, %v1412
    %v1470 = vpack.c.bf16 %v1458, %v1458
    %v1471 = vld [vmem:[%s4] sm:$0xf]
    %v1472 = vld [vmem:[%s4 + $0x4] sm:$0xf]
    %v1473 = vld [vmem:[%s4 + $0x8] sm:$0xf]
    %v1474 = vld [vmem:[%s4 + $0xc] sm:$0xf]
    %v1475 = vld [vmem:[%s4 + $0x10] sm:$0xf]
    %v1476 = vld [vmem:[%s4 + $0x14] sm:$0xf]
    %v1477 = vld [vmem:[%s4 + $0x18] sm:$0xf]
    %v1478 = vld [vmem:[%s4 + $0x1c] sm:$0xf]
    %v1480 = vsel %vm508, %v1463, 0
    %v1483 = vsel %vm512, %v1471, 0
    %1485 = vmatprep.subr.bf16.mxu0 0
    %1486 = vmatpush1.bf16.msra.mxu0 %v1483
    %1487 = vmatprep.subr.bf16.mxu0 0
    %1488 = vmatpush1.bf16.msra.mxu0 0
    %1489 = vmatprep.subr.bf16.mxu0 0
    %1490 = vmatpush1.bf16.msra.mxu0 0
    %1491 = vmatprep.subr.bf16.mxu0 0
    %1492 = vmatpush1.bf16.msra.mxu0 0
    %1493 = vmatprep.subr.bf16.mxu0 0
    %1494 = vmatpush1.bf16.msra.mxu0 0
    %1495 = vmatprep.subr.bf16.mxu0 0
    %1496 = vmatpush1.bf16.msra.mxu0 0
    %1497 = vmatprep.subr.bf16.mxu0 0
    %1498 = vmatpush1.bf16.msra.mxu0 0
    %1499 = vmatprep.subr.bf16.mxu0 0
    %1500 = vmatpush1.bf16.msra.mxu0 0
    %1501 = vmatprep.subr.bf16.mxu0 0
    %1502 = vmatpush1.bf16.msra.mxu0 0
    %1503 = vmatprep.subr.bf16.mxu0 0
    %1504 = vmatpush1.bf16.msra.mxu0 0
    %1505 = vmatprep.subr.bf16.mxu0 0
    %1506 = vmatpush1.bf16.msra.mxu0 0
    %1507 = vmatprep.subr.bf16.mxu0 0
    %1508 = vmatpush1.bf16.msra.mxu0 0
    %1509 = vmatprep.subr.bf16.mxu0 0
    %1510 = vmatpush1.bf16.msra.mxu0 0
    %1511 = vmatprep.subr.bf16.mxu0 0
    %1512 = vmatpush1.bf16.msra.mxu0 0
    %1513 = vmatprep.subr.bf16.mxu0 0
    %1514 = vmatpush1.bf16.msra.mxu0 0
    %1515 = vmatprep.subr.bf16.mxu0 0
    %1516 = vmatpush1.bf16.msra.mxu0 0
    %1517 = vmatprep.mubr.bf16.mxu0 0
    %1518 = vmatmul.mubr.bf16.gmra.mrb[0].mxu0 %v1480
    %v1519 = vpop.f32.mrb[0].mxu0
    %v1520 = vadd.f32 0.0, %v1519
    %v1521 = vpop.f32.mrb[0].mxu0
    %v1522 = vpop.f32.mrb[0].mxu0
    %v1523 = vpop.f32.mrb[0].mxu0
    %1524 = vdwg.mxu0
    %v1526 = vsel %vm508, %v1464, 0
    %v1529 = vsel %vm512, %v1472, 0
    %1531 = vmatprep.subr.bf16.mxu0 0
    %1532 = vmatpush1.bf16.msra.mxu0 %v1529
    %1533 = vmatprep.subr.bf16.mxu0 0
    %1534 = vmatpush1.bf16.msra.mxu0 0
    %1535 = vmatprep.subr.bf16.mxu0 0
    %1536 = vmatpush1.bf16.msra.mxu0 0
    %1537 = vmatprep.subr.bf16.mxu0 0
    %1538 = vmatpush1.bf16.msra.mxu0 0
    %1539 = vmatprep.subr.bf16.mxu0 0
    %1540 = vmatpush1.bf16.msra.mxu0 0
    %1541 = vmatprep.subr.bf16.mxu0 0
    %1542 = vmatpush1.bf16.msra.mxu0 0
    %1543 = vmatprep.subr.bf16.mxu0 0
    %1544 = vmatpush1.bf16.msra.mxu0 0
    %1545 = vmatprep.subr.bf16.mxu0 0
    %1546 = vmatpush1.bf16.msra.mxu0 0
    %1547 = vmatprep.subr.bf16.mxu0 0
    %1548 = vmatpush1.bf16.msra.mxu0 0
    %1549 = vmatprep.subr.bf16.mxu0 0
    %1550 = vmatpush1.bf16.msra.mxu0 0
    %1551 = vmatprep.subr.bf16.mxu0 0
    %1552 = vmatpush1.bf16.msra.mxu0 0
    %1553 = vmatprep.subr.bf16.mxu0 0
    %1554 = vmatpush1.bf16.msra.mxu0 0
    %1555 = vmatprep.subr.bf16.mxu0 0
    %1556 = vmatpush1.bf16.msra.mxu0 0
    %1557 = vmatprep.subr.bf16.mxu0 0
    %1558 = vmatpush1.bf16.msra.mxu0 0
    %1559 = vmatprep.subr.bf16.mxu0 0
    %1560 = vmatpush1.bf16.msra.mxu0 0
    %1561 = vmatprep.subr.bf16.mxu0 0
    %1562 = vmatpush1.bf16.msra.mxu0 0
    %1563 = vmatprep.mubr.bf16.mxu0 0
    %1564 = vmatmul.mubr.bf16.gmra.mrb[0].mxu0 %v1526
    %v1565 = vpop.f32.mrb[0].mxu0
    %v1566 = vadd.f32 0.0, %v1565
    %v1567 = vpop.f32.mrb[0].mxu0
    %v1568 = vpop.f32.mrb[0].mxu0
    %v1569 = vpop.f32.mrb[0].mxu0
    %1570 = vdwg.mxu0
    %v1572 = vsel %vm508, %v1465, 0
    %v1575 = vsel %vm512, %v1473, 0
    %1577 = vmatprep.subr.bf16.mxu0 0
    %1578 = vmatpush1.bf16.msra.mxu0 %v1575
    %1579 = vmatprep.subr.bf16.mxu0 0
    %1580 = vmatpush1.bf16.msra.mxu0 0
    %1581 = vmatprep.subr.bf16.mxu0 0
    %1582 = vmatpush1.bf16.msra.mxu0 0
    %1583 = vmatprep.subr.bf16.mxu0 0
    %1584 = vmatpush1.bf16.msra.mxu0 0
    %1585 = vmatprep.subr.bf16.mxu0 0
    %1586 = vmatpush1.bf16.msra.mxu0 0
    %1587 = vmatprep.subr.bf16.mxu0 0
    %1588 = vmatpush1.bf16.msra.mxu0 0
    %1589 = vmatprep.subr.bf16.mxu0 0
    %1590 = vmatpush1.bf16.msra.mxu0 0
    %1591 = vmatprep.subr.bf16.mxu0 0
    %1592 = vmatpush1.bf16.msra.mxu0 0
    %1593 = vmatprep.subr.bf16.mxu0 0
    %1594 = vmatpush1.bf16.msra.mxu0 0
    %1595 = vmatprep.subr.bf16.mxu0 0
    %1596 = vmatpush1.bf16.msra.mxu0 0
    %1597 = vmatprep.subr.bf16.mxu0 0
    %1598 = vmatpush1.bf16.msra.mxu0 0
    %1599 = vmatprep.subr.bf16.mxu0 0
    %1600 = vmatpush1.bf16.msra.mxu0 0
    %1601 = vmatprep.subr.bf16.mxu0 0
    %1602 = vmatpush1.bf16.msra.mxu0 0
    %1603 = vmatprep.subr.bf16.mxu0 0
    %1604 = vmatpush1.bf16.msra.mxu0 0
    %1605 = vmatprep.subr.bf16.mxu0 0
    %1606 = vmatpush1.bf16.msra.mxu0 0
    %1607 = vmatprep.subr.bf16.mxu0 0
    %1608 = vmatpush1.bf16.msra.mxu0 0
    %1609 = vmatprep.mubr.bf16.mxu0 0
    %1610 = vmatmul.mubr.bf16.gmra.mrb[0].mxu0 %v1572
    %v1611 = vpop.f32.mrb[0].mxu0
    %v1612 = vadd.f32 0.0, %v1611
    %v1613 = vpop.f32.mrb[0].mxu0
    %v1614 = vpop.f32.mrb[0].mxu0
    %v1615 = vpop.f32.mrb[0].mxu0
    %1616 = vdwg.mxu0
    %v1618 = vsel %vm508, %v1466, 0
    %v1621 = vsel %vm512, %v1474, 0
    %1623 = vmatprep.subr.bf16.mxu0 0
    %1624 = vmatpush1.bf16.msra.mxu0 %v1621
    %1625 = vmatprep.subr.bf16.mxu0 0
    %1626 = vmatpush1.bf16.msra.mxu0 0
    %1627 = vmatprep.subr.bf16.mxu0 0
    %1628 = vmatpush1.bf16.msra.mxu0 0
    %1629 = vmatprep.subr.bf16.mxu0 0
    %1630 = vmatpush1.bf16.msra.mxu0 0
    %1631 = vmatprep.subr.bf16.mxu0 0
    %1632 = vmatpush1.bf16.msra.mxu0 0
    %1633 = vmatprep.subr.bf16.mxu0 0
    %1634 = vmatpush1.bf16.msra.mxu0 0
    %1635 = vmatprep.subr.bf16.mxu0 0
    %1636 = vmatpush1.bf16.msra.mxu0 0
    %1637 = vmatprep.subr.bf16.mxu0 0
    %1638 = vmatpush1.bf16.msra.mxu0 0
    %1639 = vmatprep.subr.bf16.mxu0 0
    %1640 = vmatpush1.bf16.msra.mxu0 0
    %1641 = vmatprep.subr.bf16.mxu0 0
    %1642 = vmatpush1.bf16.msra.mxu0 0
    %1643 = vmatprep.subr.bf16.mxu0 0
    %1644 = vmatpush1.bf16.msra.mxu0 0
    %1645 = vmatprep.subr.bf16.mxu0 0
    %1646 = vmatpush1.bf16.msra.mxu0 0
    %1647 = vmatprep.subr.bf16.mxu0 0
    %1648 = vmatpush1.bf16.msra.mxu0 0
    %1649 = vmatprep.subr.bf16.mxu0 0
    %1650 = vmatpush1.bf16.msra.mxu0 0
    %1651 = vmatprep.subr.bf16.mxu0 0
    %1652 = vmatpush1.bf16.msra.mxu0 0
    %1653 = vmatprep.subr.bf16.mxu0 0
    %1654 = vmatpush1.bf16.msra.mxu0 0
    %1655 = vmatprep.mubr.bf16.mxu0 0
    %1656 = vmatmul.mubr.bf16.gmra.mrb[0].mxu0 %v1618
    %v1657 = vpop.f32.mrb[0].mxu0
    %v1658 = vadd.f32 0.0, %v1657
    %v1659 = vpop.f32.mrb[0].mxu0
    %v1660 = vpop.f32.mrb[0].mxu0
    %v1661 = vpop.f32.mrb[0].mxu0
    %1662 = vdwg.mxu0
    %v1664 = vsel %vm508, %v1467, 0
    %v1667 = vsel %vm512, %v1475, 0
    %1669 = vmatprep.subr.bf16.mxu0 0
    %1670 = vmatpush1.bf16.msra.mxu0 %v1667
    %1671 = vmatprep.subr.bf16.mxu0 0
    %1672 = vmatpush1.bf16.msra.mxu0 0
    %1673 = vmatprep.subr.bf16.mxu0 0
    %1674 = vmatpush1.bf16.msra.mxu0 0
    %1675 = vmatprep.subr.bf16.mxu0 0
    %1676 = vmatpush1.bf16.msra.mxu0 0
    %1677 = vmatprep.subr.bf16.mxu0 0
    %1678 = vmatpush1.bf16.msra.mxu0 0
    %1679 = vmatprep.subr.bf16.mxu0 0
    %1680 = vmatpush1.bf16.msra.mxu0 0
    %1681 = vmatprep.subr.bf16.mxu0 0
    %1682 = vmatpush1.bf16.msra.mxu0 0
    %1683 = vmatprep.subr.bf16.mxu0 0
    %1684 = vmatpush1.bf16.msra.mxu0 0
    %1685 = vmatprep.subr.bf16.mxu0 0
    %1686 = vmatpush1.bf16.msra.mxu0 0
    %1687 = vmatprep.subr.bf16.mxu0 0
    %1688 = vmatpush1.bf16.msra.mxu0 0
    %1689 = vmatprep.subr.bf16.mxu0 0
    %1690 = vmatpush1.bf16.msra.mxu0 0
    %1691 = vmatprep.subr.bf16.mxu0 0
    %1692 = vmatpush1.bf16.msra.mxu0 0
    %1693 = vmatprep.subr.bf16.mxu0 0
    %1694 = vmatpush1.bf16.msra.mxu0 0
    %1695 = vmatprep.subr.bf16.mxu0 0
    %1696 = vmatpush1.bf16.msra.mxu0 0
    %1697 = vmatprep.subr.bf16.mxu0 0
    %1698 = vmatpush1.bf16.msra.mxu0 0
    %1699 = vmatprep.subr.bf16.mxu0 0
    %1700 = vmatpush1.bf16.msra.mxu0 0
    %1701 = vmatprep.mubr.bf16.mxu0 0
    %1702 = vmatmul.mubr.bf16.gmra.mrb[0].mxu0 %v1664
    %v1703 = vpop.f32.mrb[0].mxu0
    %v1704 = vadd.f32 0.0, %v1703
    %v1705 = vpop.f32.mrb[0].mxu0
    %v1706 = vpop.f32.mrb[0].mxu0
    %v1707 = vpop.f32.mrb[0].mxu0
    %1708 = vdwg.mxu0
    %v1710 = vsel %vm508, %v1468, 0
    %v1713 = vsel %vm512, %v1476, 0
    %1715 = vmatprep.subr.bf16.mxu0 0
    %1716 = vmatpush1.bf16.msra.mxu0 %v1713
    %1717 = vmatprep.subr.bf16.mxu0 0
    %1718 = vmatpush1.bf16.msra.mxu0 0
    %1719 = vmatprep.subr.bf16.mxu0 0
    %1720 = vmatpush1.bf16.msra.mxu0 0
    %1721 = vmatprep.subr.bf16.mxu0 0
    %1722 = vmatpush1.bf16.msra.mxu0 0
    %1723 = vmatprep.subr.bf16.mxu0 0
    %1724 = vmatpush1.bf16.msra.mxu0 0
    %1725 = vmatprep.subr.bf16.mxu0 0
    %1726 = vmatpush1.bf16.msra.mxu0 0
    %1727 = vmatprep.subr.bf16.mxu0 0
    %1728 = vmatpush1.bf16.msra.mxu0 0
    %1729 = vmatprep.subr.bf16.mxu0 0
    %1730 = vmatpush1.bf16.msra.mxu0 0
    %1731 = vmatprep.subr.bf16.mxu0 0
    %1732 = vmatpush1.bf16.msra.mxu0 0
    %1733 = vmatprep.subr.bf16.mxu0 0
    %1734 = vmatpush1.bf16.msra.mxu0 0
    %1735 = vmatprep.subr.bf16.mxu0 0
    %1736 = vmatpush1.bf16.msra.mxu0 0
    %1737 = vmatprep.subr.bf16.mxu0 0
    %1738 = vmatpush1.bf16.msra.mxu0 0
    %1739 = vmatprep.subr.bf16.mxu0 0
    %1740 = vmatpush1.bf16.msra.mxu0 0
    %1741 = vmatprep.subr.bf16.mxu0 0
    %1742 = vmatpush1.bf16.msra.mxu0 0
    %1743 = vmatprep.subr.bf16.mxu0 0
    %1744 = vmatpush1.bf16.msra.mxu0 0
    %1745 = vmatprep.subr.bf16.mxu0 0
    %1746 = vmatpush1.bf16.msra.mxu0 0
    %1747 = vmatprep.mubr.bf16.mxu0 0
    %1748 = vmatmul.mubr.bf16.gmra.mrb[0].mxu0 %v1710
    %v1749 = vpop.f32.mrb[0].mxu0
    %v1750 = vadd.f32 0.0, %v1749
    %v1751 = vpop.f32.mrb[0].mxu0
    %v1752 = vpop.f32.mrb[0].mxu0
    %v1753 = vpop.f32.mrb[0].mxu0
    %1754 = vdwg.mxu0
    %v1756 = vsel %vm508, %v1469, 0
    %v1759 = vsel %vm512, %v1477, 0
    %1761 = vmatprep.subr.bf16.mxu0 0
    %1762 = vmatpush1.bf16.msra.mxu0 %v1759
    %1763 = vmatprep.subr.bf16.mxu0 0
    %1764 = vmatpush1.bf16.msra.mxu0 0
    %1765 = vmatprep.subr.bf16.mxu0 0
    %1766 = vmatpush1.bf16.msra.mxu0 0
    %1767 = vmatprep.subr.bf16.mxu0 0
    %1768 = vmatpush1.bf16.msra.mxu0 0
    %1769 = vmatprep.subr.bf16.mxu0 0
    %1770 = vmatpush1.bf16.msra.mxu0 0
    %1771 = vmatprep.subr.bf16.mxu0 0
    %1772 = vmatpush1.bf16.msra.mxu0 0
    %1773 = vmatprep.subr.bf16.mxu0 0
    %1774 = vmatpush1.bf16.msra.mxu0 0
    %1775 = vmatprep.subr.bf16.mxu0 0
    %1776 = vmatpush1.bf16.msra.mxu0 0
    %1777 = vmatprep.subr.bf16.mxu0 0
    %1778 = vmatpush1.bf16.msra.mxu0 0
    %1779 = vmatprep.subr.bf16.mxu0 0
    %1780 = vmatpush1.bf16.msra.mxu0 0
    %1781 = vmatprep.subr.bf16.mxu0 0
    %1782 = vmatpush1.bf16.msra.mxu0 0
    %1783 = vmatprep.subr.bf16.mxu0 0
    %1784 = vmatpush1.bf16.msra.mxu0 0
    %1785 = vmatprep.subr.bf16.mxu0 0
    %1786 = vmatpush1.bf16.msra.mxu0 0
    %1787 = vmatprep.subr.bf16.mxu0 0
    %1788 = vmatpush1.bf16.msra.mxu0 0
    %1789 = vmatprep.subr.bf16.mxu0 0
    %1790 = vmatpush1.bf16.msra.mxu0 0
    %1791 = vmatprep.subr.bf16.mxu0 0
    %1792 = vmatpush1.bf16.msra.mxu0 0
    %1793 = vmatprep.mubr.bf16.mxu0 0
    %1794 = vmatmul.mubr.bf16.gmra.mrb[0].mxu0 %v1756
    %v1795 = vpop.f32.mrb[0].mxu0
    %v1796 = vadd.f32 0.0, %v1795
    %v1797 = vpop.f32.mrb[0].mxu0
    %v1798 = vpop.f32.mrb[0].mxu0
    %v1799 = vpop.f32.mrb[0].mxu0
    %1800 = vdwg.mxu0
    %v1802 = vsel %vm508, %v1470, 0
    %v1805 = vsel %vm512, %v1478, 0
    %1807 = vmatprep.subr.bf16.mxu0 0
    %1808 = vmatpush1.bf16.msra.mxu0 %v1805
    %1809 = vmatprep.subr.bf16.mxu0 0
    %1810 = vmatpush1.bf16.msra.mxu0 0
    %1811 = vmatprep.subr.bf16.mxu0 0
    %1812 = vmatpush1.bf16.msra.mxu0 0
    %1813 = vmatprep.subr.bf16.mxu0 0
    %1814 = vmatpush1.bf16.msra.mxu0 0
    %1815 = vmatprep.subr.bf16.mxu0 0
    %1816 = vmatpush1.bf16.msra.mxu0 0
    %1817 = vmatprep.subr.bf16.mxu0 0
    %1818 = vmatpush1.bf16.msra.mxu0 0
    %1819 = vmatprep.subr.bf16.mxu0 0
    %1820 = vmatpush1.bf16.msra.mxu0 0
    %1821 = vmatprep.subr.bf16.mxu0 0
    %1822 = vmatpush1.bf16.msra.mxu0 0
    %1823 = vmatprep.subr.bf16.mxu0 0
    %1824 = vmatpush1.bf16.msra.mxu0 0
    %1825 = vmatprep.subr.bf16.mxu0 0
    %1826 = vmatpush1.bf16.msra.mxu0 0
    %1827 = vmatprep.subr.bf16.mxu0 0
    %1828 = vmatpush1.bf16.msra.mxu0 0
    %1829 = vmatprep.subr.bf16.mxu0 0
    %1830 = vmatpush1.bf16.msra.mxu0 0
    %1831 = vmatprep.subr.bf16.mxu0 0
    %1832 = vmatpush1.bf16.msra.mxu0 0
    %1833 = vmatprep.subr.bf16.mxu0 0
    %1834 = vmatpush1.bf16.msra.mxu0 0
    %1835 = vmatprep.subr.bf16.mxu0 0
    %1836 = vmatpush1.bf16.msra.mxu0 0
    %1837 = vmatprep.subr.bf16.mxu0 0
    %1838 = vmatpush1.bf16.msra.mxu0 0
    %1839 = vmatprep.mubr.bf16.mxu0 0
    %1840 = vmatmul.mubr.bf16.gmra.mrb[0].mxu0 %v1802
    %v1841 = vpop.f32.mrb[0].mxu0
    %v1842 = vadd.f32 0.0, %v1841
    %v1843 = vpop.f32.mrb[0].mxu0
    %v1844 = vpop.f32.mrb[0].mxu0
    %v1845 = vpop.f32.mrb[0].mxu0
    %1846 = vdwg.mxu0
    %v1847 = vsel %vm291, %v1520, 0.0
    %v1848 = vsel %vm291, %v1566, 0.0
    %v1849 = vadd.f32 %v1847, %v1848
    %v1850 = vsel %vm291, %v1612, 0.0
    %v1851 = vadd.f32 %v1849, %v1850
    %v1852 = vsel %vm291, %v1658, 0.0
    %v1853 = vadd.f32 %v1851, %v1852
    %v1854 = vsel %vm291, %v1704, 0.0
    %v1855 = vadd.f32 %v1853, %v1854
    %v1856 = vsel %vm291, %v1750, 0.0
    %v1857 = vadd.f32 %v1855, %v1856
    %v1858 = vsel %vm291, %v1796, 0.0
    %v1859 = vadd.f32 %v1857, %v1858
    %v1860 = vsel %vm291, %v1842, 0.0
    %v1861 = vadd.f32 %v1859, %v1860
    %v1862 = vld [vmem:[%s5] sm:$0x1]
    %v1864 = vlaneseq
    %v1865 = vshrl.u32 %v1864, 7
    %v1866 = vsub.s32 0, %v1865
    %v1867 = vrot.slane %v1862, %v1866
    %v1869 = vadd.f32 %v1861, %v1867
    %v1870 = vpack.c.bf16 %v1869, %v1869
    %v1871 = vld [vmem:[%s6] sm:$0xff]
    %v1872 = vld [vmem:[%s6 + $0x8] sm:$0xf]
    %v1873 = vld [vmem:[%s6 + $0xc] sm:$0xff]
    %v1874 = vld [vmem:[%s6 + $0x14] sm:$0xf]
    %v1875 = vld [vmem:[%s6 + $0x18] sm:$0xff]
    %v1876 = vld [vmem:[%s6 + $0x20] sm:$0xf]
    %v1877 = vld [vmem:[%s6 + $0x24] sm:$0xff]
    %v1878 = vld [vmem:[%s6 + $0x2c] sm:$0xf]
    %v1879 = vld [vmem:[%s6 + $0x30] sm:$0xff]
    %v1880 = vld [vmem:[%s6 + $0x38] sm:$0xf]
    %v1881 = vld [vmem:[%s6 + $0x3c] sm:$0xff]
    %v1882 = vld [vmem:[%s6 + $0x44] sm:$0xf]
    %v1883 = vld [vmem:[%s6 + $0x48] sm:$0xff]
    %v1884 = vld [vmem:[%s6 + $0x50] sm:$0xf]
    %v1885 = vld [vmem:[%s6 + $0x54] sm:$0xff]
    %v1886 = vld [vmem:[%s6 + $0x5c] sm:$0xf]
    %v1903 = vunpack.c.l.b16 %v1871
    %v1904 = vunpack.c.h.b16 %v1871
    %v1905 = vunpack.c.l.b16 %v1872
    %v1906 = vunpack.c.l.b16 %v1873
    %v1907 = vunpack.c.h.b16 %v1873
    %v1908 = vunpack.c.l.b16 %v1874
    %v1909 = vunpack.c.l.b16 %v1875
    %v1910 = vunpack.c.h.b16 %v1875
    %v1911 = vunpack.c.l.b16 %v1876
    %v1912 = vunpack.c.l.b16 %v1877
    %v1913 = vunpack.c.h.b16 %v1877
    %v1914 = vunpack.c.l.b16 %v1878
    %v1915 = vunpack.c.l.b16 %v1879
    %v1916 = vunpack.c.h.b16 %v1879
    %v1917 = vunpack.c.l.b16 %v1880
    %v1918 = vunpack.c.l.b16 %v1881
    %v1919 = vunpack.c.h.b16 %v1881
    %v1920 = vunpack.c.l.b16 %v1882
    %v1921 = vunpack.c.l.b16 %v1883
    %v1922 = vunpack.c.h.b16 %v1883
    %v1923 = vunpack.c.l.b16 %v1884
    %v1924 = vunpack.c.l.b16 %v1885
    %v1925 = vunpack.c.h.b16 %v1885
    %v1926 = vunpack.c.l.b16 %v1886
    %v1927 = vpack.c.b16 %v1906, %v1903
    %v1928 = vpack.c.b16 %v1907, %v1904
    %v1929 = vpack.c.b16 %v1908, %v1905
    %v1930 = vpack.c.b16 %v1912, %v1909
    %v1931 = vpack.c.b16 %v1913, %v1910
    %v1932 = vpack.c.b16 %v1914, %v1911
    %v1933 = vpack.c.b16 %v1918, %v1915
    %v1934 = vpack.c.b16 %v1919, %v1916
    %v1935 = vpack.c.b16 %v1920, %v1917
    %v1936 = vpack.c.b16 %v1924, %v1921
    %v1937 = vpack.c.b16 %v1925, %v1922
    %v1938 = vpack.c.b16 %v1926, %v1923
    %v1952 = vsel %vm291, %v1870, 0
    %1954 = vmatprep.subr.bf16.mxu0 %v1928
    %1955 = vmatpush1.bf16.msra.mxu0 %v1927
    %1956 = vmatprep.subr.bf16.mxu0 %v1931
    %1957 = vmatpush1.bf16.msra.mxu0 %v1930
    %1958 = vmatprep.subr.bf16.mxu0 %v1934
    %1959 = vmatpush1.bf16.msra.mxu0 %v1933
    %1960 = vmatprep.subr.bf16.mxu0 %v1937
    %1961 = vmatpush1.bf16.msra.mxu0 %v1936
    %1962 = vmatprep.subr.bf16.mxu0 0
    %1963 = vmatpush1.bf16.msra.mxu0 0
    %1964 = vmatprep.subr.bf16.mxu0 0
    %1965 = vmatpush1.bf16.msra.mxu0 0
    %1966 = vmatprep.subr.bf16.mxu0 0
    %1967 = vmatpush1.bf16.msra.mxu0 0
    %1968 = vmatprep.subr.bf16.mxu0 0
    %1969 = vmatpush1.bf16.msra.mxu0 0
    %1970 = vmatprep.subr.bf16.mxu0 0
    %1971 = vmatpush1.bf16.msra.mxu0 0
    %1972 = vmatprep.subr.bf16.mxu0 0
    %1973 = vmatpush1.bf16.msra.mxu0 0
    %1974 = vmatprep.subr.bf16.mxu0 0
    %1975 = vmatpush1.bf16.msra.mxu0 0
    %1976 = vmatprep.subr.bf16.mxu0 0
    %1977 = vmatpush1.bf16.msra.mxu0 0
    %1978 = vmatprep.subr.bf16.mxu0 0
    %1979 = vmatpush1.bf16.msra.mxu0 0
    %1980 = vmatprep.subr.bf16.mxu0 0
    %1981 = vmatpush1.bf16.msra.mxu0 0
    %1982 = vmatprep.subr.bf16.mxu0 0
    %1983 = vmatpush1.bf16.msra.mxu0 0
    %1984 = vmatprep.subr.bf16.mxu0 0
    %1985 = vmatpush1.bf16.msra.mxu0 0
    %1986 = vmatprep.mubr.bf16.mxu0 0
    %1987 = vmatmul.mubr.bf16.gmra.mrb[0].mxu0 %v1952
    %v1988 = vpop.f32.mrb[0].mxu0
    %v1989 = vadd.f32 0.0, %v1988
    %v1990 = vpop.f32.mrb[0].mxu0
    %v1991 = vadd.f32 0.0, %v1990
    %v1992 = vpop.f32.mrb[0].mxu0
    %v1993 = vpop.f32.mrb[0].mxu0
    %1994 = vdwg.mxu0
    %1995 = vmatprep.subr.bf16.mxu0 0
    %1996 = vmatpush1.bf16.msra.mxu0 %v1929
    %1997 = vmatprep.subr.bf16.mxu0 0
    %1998 = vmatpush1.bf16.msra.mxu0 %v1932
    %1999 = vmatprep.subr.bf16.mxu0 0
    %2000 = vmatpush1.bf16.msra.mxu0 %v1935
    %2001 = vmatprep.subr.bf16.mxu0 0
    %2002 = vmatpush1.bf16.msra.mxu0 %v1938
    %2003 = vmatprep.subr.bf16.mxu0 0
    %2004 = vmatpush1.bf16.msra.mxu0 0
    %2005 = vmatprep.subr.bf16.mxu0 0
    %2006 = vmatpush1.bf16.msra.mxu0 0
    %2007 = vmatprep.subr.bf16.mxu0 0
    %2008 = vmatpush1.bf16.msra.mxu0 0
    %2009 = vmatprep.subr.bf16.mxu0 0
    %2010 = vmatpush1.bf16.msra.mxu0 0
    %2011 = vmatprep.subr.bf16.mxu0 0
    %2012 = vmatpush1.bf16.msra.mxu0 0
    %2013 = vmatprep.subr.bf16.mxu0 0
    %2014 = vmatpush1.bf16.msra.mxu0 0
    %2015 = vmatprep.subr.bf16.mxu0 0
    %2016 = vmatpush1.bf16.msra.mxu0 0
    %2017 = vmatprep.subr.bf16.mxu0 0
    %2018 = vmatpush1.bf16.msra.mxu0 0
    %2019 = vmatprep.subr.bf16.mxu0 0
    %2020 = vmatpush1.bf16.msra.mxu0 0
    %2021 = vmatprep.subr.bf16.mxu0 0
    %2022 = vmatpush1.bf16.msra.mxu0 0
    %2023 = vmatprep.subr.bf16.mxu0 0
    %2024 = vmatpush1.bf16.msra.mxu0 0
    %2025 = vmatprep.subr.bf16.mxu0 0
    %2026 = vmatpush1.bf16.msra.mxu0 0
    %2027 = vmatprep.mubr.bf16.mxu0 0
    %2028 = vmatmul.mubr.bf16.gmra.mrb[0].mxu0 %v1952
    %v2029 = vpop.f32.mrb[0].mxu0
    %v2030 = vadd.f32 0.0, %v2029
    %v2031 = vpop.f32.mrb[0].mxu0
    %v2032 = vpop.f32.mrb[0].mxu0
    %v2033 = vpop.f32.mrb[0].mxu0
    %2034 = vdwg.mxu0
    %v2035 = vmax.f32 %v1989, 0.0
    %v2036 = vmax.f32 %v1991, 0.0
    %v2037 = vmax.f32 %v2030, 0.0
    %v2038 = vpack.c.bf16 %v2035, %v2035
    %v2039 = vpack.c.bf16 %v2036, %v2036
    %v2040 = vpack.c.bf16 %v2037, %v2037
    %v2044 = vcombine.low %v2038, %v2039
    %v2046 = vunpack.c.l.s4 1983009808
    %v2047 = vunpack.c.0.s8 %v2046
    %v2048 = vlaneseq
    %v2049 = vshrl.u32 %v2048, 7
    %v2050 = vsub.s32 %v2047, %v2049
    %v2051 = vrot.slane %v2044, %v2050
    %v2053 = vunpack.c.l.s4 1983009808
    %v2054 = vunpack.c.0.s8 %v2053
    %v2055 = vlaneseq
    %v2056 = vshrl.u32 %v2055, 7
    %v2057 = vsub.s32 %v2054, %v2056
    %v2058 = vrot.slane %v2040, %v2057
    %v2059 = vcombine.low %v2051, %v2058
    %v2060 = vcombine.high %v2051, %v2058
    %v2061 = vld [vmem:[%s7] sm:$0x3]
    %s2062 = scalar_lea.vmem %s7, 2
    %v2063 = vld [vmem:[%s2062] sm:$0x3]
    %v2064 = vcombine.high %v2059, %v2059
    %v2066 = vunpack.c.l.s4 1983009808
    %v2067 = vunpack.c.0.s8 %v2066
    %v2068 = vlaneseq
    %v2069 = vshrl.u32 %v2068, 7
    %v2070 = vsub.s32 %v2067, %v2069
    %v2071 = vrot.slane %v2059, %v2070
    %v2073 = vunpack.c.l.s4 1983009808
    %v2074 = vunpack.c.0.s8 %v2073
    %v2075 = vlaneseq
    %v2076 = vshrl.u32 %v2075, 7
    %v2077 = vsub.s32 %v2074, %v2076
    %v2078 = vrot.slane %v2064, %v2077
    %v2079 = vcombine.high %v2071, %v2071
    %2080 = vrot.lane.b32.xlu0 %v2071, 127
    %v2081 = vpop.permute.xlu0 %2080
    %2082 = vrot.lane.b32.xlu0 %v2079, 127
    %v2083 = vpop.permute.xlu0 %2082
    %2084 = vrot.lane.b32.xlu0 %v2078, 127
    %v2085 = vpop.permute.xlu0 %2084
    %vm2086 = vcmask 1039360
    %v2087 = vsel %vm2086, %v2081, %v2083
    %v2088 = vsel %vm2086, %v2083, %v2085
    %vm2089 = vcmask 31744
    %v2091 = vsel %vm2089, %v2063, 0
    %vm2093 = vcmask 1041408
    %v2095 = vsel %vm2093, %v2087, 0
    %v2098 = vsel %vm2093, %v2088, 0
    %2100 = vmatprep.subr.bf16.mxu0 %v2098
    %2101 = vmatpush1.bf16.msra.mxu0 %v2095
    %2102 = vmatprep.subr.bf16.mxu0 0
    %2103 = vmatpush1.bf16.msra.mxu0 0
    %2104 = vmatprep.subr.bf16.mxu0 0
    %2105 = vmatpush1.bf16.msra.mxu0 0
    %2106 = vmatprep.subr.bf16.mxu0 0
    %2107 = vmatpush1.bf16.msra.mxu0 0
    %2108 = vmatprep.subr.bf16.mxu0 0
    %2109 = vmatpush1.bf16.msra.mxu0 0
    %2110 = vmatprep.subr.bf16.mxu0 0
    %2111 = vmatpush1.bf16.msra.mxu0 0
    %2112 = vmatprep.subr.bf16.mxu0 0
    %2113 = vmatpush1.bf16.msra.mxu0 0
    %2114 = vmatprep.subr.bf16.mxu0 0
    %2115 = vmatpush1.bf16.msra.mxu0 0
    %2116 = vmatprep.subr.bf16.mxu0 0
    %2117 = vmatpush1.bf16.msra.mxu0 0
    %2118 = vmatprep.subr.bf16.mxu0 0
    %2119 = vmatpush1.bf16.msra.mxu0 0
    %2120 = vmatprep.subr.bf16.mxu0 0
    %2121 = vmatpush1.bf16.msra.mxu0 0
    %2122 = vmatprep.subr.bf16.mxu0 0
    %2123 = vmatpush1.bf16.msra.mxu0 0
    %2124 = vmatprep.subr.bf16.mxu0 0
    %2125 = vmatpush1.bf16.msra.mxu0 0
    %2126 = vmatprep.subr.bf16.mxu0 0
    %2127 = vmatpush1.bf16.msra.mxu0 0
    %2128 = vmatprep.subr.bf16.mxu0 0
    %2129 = vmatpush1.bf16.msra.mxu0 0
    %2130 = vmatprep.subr.bf16.mxu0 0
    %2131 = vmatpush1.bf16.msra.mxu0 0
    %2132 = vmatprep.mubr.bf16.mxu0 0
    %2133 = vmatmul.mubr.bf16.gmra.mrb[0].mxu0 %v2091
    %v2134 = vpop.f32.mrb[0].mxu0
    %v2135 = vadd.f32 0.0, %v2134
    %v2136 = vpop.f32.mrb[0].mxu0
    %v2137 = vadd.f32 0.0, %v2136
    %v2138 = vpop.f32.mrb[0].mxu0
    %v2139 = vpop.f32.mrb[0].mxu0
    %2140 = vdwg.mxu0
    %v2141 = vcombine.high %v2060, %v2060
    %v2143 = vunpack.c.l.s4 1983009808
    %v2144 = vunpack.c.0.s8 %v2143
    %v2145 = vlaneseq
    %v2146 = vshrl.u32 %v2145, 7
    %v2147 = vsub.s32 %v2144, %v2146
    %v2148 = vrot.slane %v2060, %v2147
    %v2150 = vunpack.c.l.s4 1983009808
    %v2151 = vunpack.c.0.s8 %v2150
    %v2152 = vlaneseq
    %v2153 = vshrl.u32 %v2152, 7
    %v2154 = vsub.s32 %v2151, %v2153
    %v2155 = vrot.slane %v2141, %v2154
    %v2156 = vcombine.high %v2148, %v2148
    %2157 = vrot.lane.b32.xlu0 %v2148, 127
    %v2158 = vpop.permute.xlu0 %2157
    %2159 = vrot.lane.b32.xlu0 %v2156, 127
    %v2160 = vpop.permute.xlu0 %2159
    %2161 = vrot.lane.b32.xlu0 %v2155, 127
    %v2162 = vpop.permute.xlu0 %2161
    %v2163 = vsel %vm2086, %v2158, %v2160
    %v2164 = vsel %vm2086, %v2160, %v2162
    %v2166 = vsel %vm2093, %v2163, 0
    %v2169 = vsel %vm2093, %v2164, 0
    %2171 = vmatprep.subr.bf16.mxu0 %v2169
    %2172 = vmatpush1.bf16.msra.mxu0 %v2166
    %2173 = vmatprep.subr.bf16.mxu0 0
    %2174 = vmatpush1.bf16.msra.mxu0 0
    %2175 = vmatprep.subr.bf16.mxu0 0
    %2176 = vmatpush1.bf16.msra.mxu0 0
    %2177 = vmatprep.subr.bf16.mxu0 0
    %2178 = vmatpush1.bf16.msra.mxu0 0
    %2179 = vmatprep.subr.bf16.mxu0 0
    %2180 = vmatpush1.bf16.msra.mxu0 0
    %2181 = vmatprep.subr.bf16.mxu0 0
    %2182 = vmatpush1.bf16.msra.mxu0 0
    %2183 = vmatprep.subr.bf16.mxu0 0
    %2184 = vmatpush1.bf16.msra.mxu0 0
    %2185 = vmatprep.subr.bf16.mxu0 0
    %2186 = vmatpush1.bf16.msra.mxu0 0
    %2187 = vmatprep.subr.bf16.mxu0 0
    %2188 = vmatpush1.bf16.msra.mxu0 0
    %2189 = vmatprep.subr.bf16.mxu0 0
    %2190 = vmatpush1.bf16.msra.mxu0 0
    %2191 = vmatprep.subr.bf16.mxu0 0
    %2192 = vmatpush1.bf16.msra.mxu0 0
    %2193 = vmatprep.subr.bf16.mxu0 0
    %2194 = vmatpush1.bf16.msra.mxu0 0
    %2195 = vmatprep.subr.bf16.mxu0 0
    %2196 = vmatpush1.bf16.msra.mxu0 0
    %2197 = vmatprep.subr.bf16.mxu0 0
    %2198 = vmatpush1.bf16.msra.mxu0 0
    %2199 = vmatprep.subr.bf16.mxu0 0
    %2200 = vmatpush1.bf16.msra.mxu0 0
    %2201 = vmatprep.subr.bf16.mxu0 0
    %2202 = vmatpush1.bf16.msra.mxu0 0
    %2203 = vmatprep.mubr.bf16.mxu0 0
    %2204 = vmatmul.mubr.bf16.gmra.mrb[0].mxu0 %v2091
    %v2205 = vpop.f32.mrb[0].mxu0
    %v2206 = vadd.f32 0.0, %v2205
    %v2207 = vpop.f32.mrb[0].mxu0
    %v2208 = vadd.f32 0.0, %v2207
    %v2209 = vpop.f32.mrb[0].mxu0
    %v2210 = vpop.f32.mrb[0].mxu0
    %2211 = vdwg.mxu0
    %v2213 = vsel %vm2089, %v2061, 0
    %v2216 = vsel %vm2093, %v2071, 0
    %v2219 = vsel %vm2093, %v2079, 0
    %2221 = vmatprep.subr.bf16.mxu0 %v2219
    %2222 = vmatpush1.bf16.msra.mxu0 %v2216
    %2223 = vmatprep.subr.bf16.mxu0 0
    %2224 = vmatpush1.bf16.msra.mxu0 0
    %2225 = vmatprep.subr.bf16.mxu0 0
    %2226 = vmatpush1.bf16.msra.mxu0 0
    %2227 = vmatprep.subr.bf16.mxu0 0
    %2228 = vmatpush1.bf16.msra.mxu0 0
    %2229 = vmatprep.subr.bf16.mxu0 0
    %2230 = vmatpush1.bf16.msra.mxu0 0
    %2231 = vmatprep.subr.bf16.mxu0 0
    %2232 = vmatpush1.bf16.msra.mxu0 0
    %2233 = vmatprep.subr.bf16.mxu0 0
    %2234 = vmatpush1.bf16.msra.mxu0 0
    %2235 = vmatprep.subr.bf16.mxu0 0
    %2236 = vmatpush1.bf16.msra.mxu0 0
    %2237 = vmatprep.subr.bf16.mxu0 0
    %2238 = vmatpush1.bf16.msra.mxu0 0
    %2239 = vmatprep.subr.bf16.mxu0 0
    %2240 = vmatpush1.bf16.msra.mxu0 0
    %2241 = vmatprep.subr.bf16.mxu0 0
    %2242 = vmatpush1.bf16.msra.mxu0 0
    %2243 = vmatprep.subr.bf16.mxu0 0
    %2244 = vmatpush1.bf16.msra.mxu0 0
    %2245 = vmatprep.subr.bf16.mxu0 0
    %2246 = vmatpush1.bf16.msra.mxu0 0
    %2247 = vmatprep.subr.bf16.mxu0 0
    %2248 = vmatpush1.bf16.msra.mxu0 0
    %2249 = vmatprep.subr.bf16.mxu0 0
    %2250 = vmatpush1.bf16.msra.mxu0 0
    %2251 = vmatprep.subr.bf16.mxu0 0
    %2252 = vmatpush1.bf16.msra.mxu0 0
    %2253 = vmatprep.mubr.bf16.mxu0 0
    %2254 = vmatmul.mubr.bf16.gmra.mrb[0].mxu0 %v2213
    %v2255 = vpop.f32.mrb[0].mxu0
    %v2256 = vadd.f32 %v2135, %v2255
    %v2257 = vpop.f32.mrb[0].mxu0
    %v2258 = vadd.f32 %v2137, %v2257
    %v2259 = vpop.f32.mrb[0].mxu0
    %v2260 = vpop.f32.mrb[0].mxu0
    %2261 = vdwg.mxu0
    %v2263 = vsel %vm2093, %v2148, 0
    %v2266 = vsel %vm2093, %v2156, 0
    %2268 = vmatprep.subr.bf16.mxu0 %v2266
    %2269 = vmatpush1.bf16.msra.mxu0 %v2263
    %2270 = vmatprep.subr.bf16.mxu0 0
    %2271 = vmatpush1.bf16.msra.mxu0 0
    %2272 = vmatprep.subr.bf16.mxu0 0
    %2273 = vmatpush1.bf16.msra.mxu0 0
    %2274 = vmatprep.subr.bf16.mxu0 0
    %2275 = vmatpush1.bf16.msra.mxu0 0
    %2276 = vmatprep.subr.bf16.mxu0 0
    %2277 = vmatpush1.bf16.msra.mxu0 0
    %2278 = vmatprep.subr.bf16.mxu0 0
    %2279 = vmatpush1.bf16.msra.mxu0 0
    %2280 = vmatprep.subr.bf16.mxu0 0
    %2281 = vmatpush1.bf16.msra.mxu0 0
    %2282 = vmatprep.subr.bf16.mxu0 0
    %2283 = vmatpush1.bf16.msra.mxu0 0
    %2284 = vmatprep.subr.bf16.mxu0 0
    %2285 = vmatpush1.bf16.msra.mxu0 0
    %2286 = vmatprep.subr.bf16.mxu0 0
    %2287 = vmatpush1.bf16.msra.mxu0 0
    %2288 = vmatprep.subr.bf16.mxu0 0
    %2289 = vmatpush1.bf16.msra.mxu0 0
    %2290 = vmatprep.subr.bf16.mxu0 0
    %2291 = vmatpush1.bf16.msra.mxu0 0
    %2292 = vmatprep.subr.bf16.mxu0 0
    %2293 = vmatpush1.bf16.msra.mxu0 0
    %2294 = vmatprep.subr.bf16.mxu0 0
    %2295 = vmatpush1.bf16.msra.mxu0 0
    %2296 = vmatprep.subr.bf16.mxu0 0
    %2297 = vmatpush1.bf16.msra.mxu0 0
    %2298 = vmatprep.subr.bf16.mxu0 0
    %2299 = vmatpush1.bf16.msra.mxu0 0
    %2300 = vmatprep.mubr.bf16.mxu0 0
    %2301 = vmatmul.mubr.bf16.gmra.mrb[0].mxu0 %v2213
    %v2302 = vpop.f32.mrb[0].mxu0
    %v2303 = vadd.f32 %v2206, %v2302
    %v2304 = vpop.f32.mrb[0].mxu0
    %v2305 = vadd.f32 %v2208, %v2304
    %v2306 = vpop.f32.mrb[0].mxu0
    %v2307 = vpop.f32.mrb[0].mxu0
    %2308 = vdwg.mxu0
    %s2309 = scalar_lea.vmem %s7, 4
    %v2310 = vld [vmem:[%s2309] sm:$0x3]
    %2311 = vrot.lane.b32.xlu0 %v2071, 126
    %v2312 = vpop.permute.xlu0 %2311
    %2313 = vrot.lane.b32.xlu0 %v2079, 126
    %v2314 = vpop.permute.xlu0 %2313
    %2315 = vrot.lane.b32.xlu0 %v2078, 126
    %v2316 = vpop.permute.xlu0 %2315
    %vm2317 = vcmask 1031168
    %v2318 = vsel %vm2317, %v2312, %v2314
    %v2319 = vsel %vm2317, %v2314, %v2316
    %v2321 = vsel %vm2089, %v2310, 0
    %v2324 = vsel %vm2093, %v2318, 0
    %v2327 = vsel %vm2093, %v2319, 0
    %2329 = vmatprep.subr.bf16.mxu0 %v2327
    %2330 = vmatpush1.bf16.msra.mxu0 %v2324
    %2331 = vmatprep.subr.bf16.mxu0 0
    %2332 = vmatpush1.bf16.msra.mxu0 0
    %2333 = vmatprep.subr.bf16.mxu0 0
    %2334 = vmatpush1.bf16.msra.mxu0 0
    %2335 = vmatprep.subr.bf16.mxu0 0
    %2336 = vmatpush1.bf16.msra.mxu0 0
    %2337 = vmatprep.subr.bf16.mxu0 0
    %2338 = vmatpush1.bf16.msra.mxu0 0
    %2339 = vmatprep.subr.bf16.mxu0 0
    %2340 = vmatpush1.bf16.msra.mxu0 0
    %2341 = vmatprep.subr.bf16.mxu0 0
    %2342 = vmatpush1.bf16.msra.mxu0 0
    %2343 = vmatprep.subr.bf16.mxu0 0
    %2344 = vmatpush1.bf16.msra.mxu0 0
    %2345 = vmatprep.subr.bf16.mxu0 0
    %2346 = vmatpush1.bf16.msra.mxu0 0
    %2347 = vmatprep.subr.bf16.mxu0 0
    %2348 = vmatpush1.bf16.msra.mxu0 0
    %2349 = vmatprep.subr.bf16.mxu0 0
    %2350 = vmatpush1.bf16.msra.mxu0 0
    %2351 = vmatprep.subr.bf16.mxu0 0
    %2352 = vmatpush1.bf16.msra.mxu0 0
    %2353 = vmatprep.subr.bf16.mxu0 0
    %2354 = vmatpush1.bf16.msra.mxu0 0
    %2355 = vmatprep.subr.bf16.mxu0 0
    %2356 = vmatpush1.bf16.msra.mxu0 0
    %2357 = vmatprep.subr.bf16.mxu0 0
    %2358 = vmatpush1.bf16.msra.mxu0 0
    %2359 = vmatprep.subr.bf16.mxu0 0
    %2360 = vmatpush1.bf16.msra.mxu0 0
    %2361 = vmatprep.mubr.bf16.mxu0 0
    %2362 = vmatmul.mubr.bf16.gmra.mrb[0].mxu0 %v2321
    %v2363 = vpop.f32.mrb[0].mxu0
    %v2364 = vadd.f32 0.0, %v2363
    %v2365 = vpop.f32.mrb[0].mxu0
    %v2366 = vadd.f32 0.0, %v2365
    %v2367 = vpop.f32.mrb[0].mxu0
    %v2368 = vpop.f32.mrb[0].mxu0
    %2369 = vdwg.mxu0
    %2370 = vrot.lane.b32.xlu0 %v2148, 126
    %v2371 = vpop.permute.xlu0 %2370
    %2372 = vrot.lane.b32.xlu0 %v2156, 126
    %v2373 = vpop.permute.xlu0 %2372
    %2374 = vrot.lane.b32.xlu0 %v2155, 126
    %v2375 = vpop.permute.xlu0 %2374
    %v2376 = vsel %vm2317, %v2371, %v2373
    %v2377 = vsel %vm2317, %v2373, %v2375
    %v2379 = vsel %vm2093, %v2376, 0
    %v2382 = vsel %vm2093, %v2377, 0
    %2384 = vmatprep.subr.bf16.mxu0 %v2382
    %2385 = vmatpush1.bf16.msra.mxu0 %v2379
    %2386 = vmatprep.subr.bf16.mxu0 0
    %2387 = vmatpush1.bf16.msra.mxu0 0
    %2388 = vmatprep.subr.bf16.mxu0 0
    %2389 = vmatpush1.bf16.msra.mxu0 0
    %2390 = vmatprep.subr.bf16.mxu0 0
    %2391 = vmatpush1.bf16.msra.mxu0 0
    %2392 = vmatprep.subr.bf16.mxu0 0
    %2393 = vmatpush1.bf16.msra.mxu0 0
    %2394 = vmatprep.subr.bf16.mxu0 0
    %2395 = vmatpush1.bf16.msra.mxu0 0
    %2396 = vmatprep.subr.bf16.mxu0 0
    %2397 = vmatpush1.bf16.msra.mxu0 0
    %2398 = vmatprep.subr.bf16.mxu0 0
    %2399 = vmatpush1.bf16.msra.mxu0 0
    %2400 = vmatprep.subr.bf16.mxu0 0
    %2401 = vmatpush1.bf16.msra.mxu0 0
    %2402 = vmatprep.subr.bf16.mxu0 0
    %2403 = vmatpush1.bf16.msra.mxu0 0
    %2404 = vmatprep.subr.bf16.mxu0 0
    %2405 = vmatpush1.bf16.msra.mxu0 0
    %2406 = vmatprep.subr.bf16.mxu0 0
    %2407 = vmatpush1.bf16.msra.mxu0 0
    %2408 = vmatprep.subr.bf16.mxu0 0
    %2409 = vmatpush1.bf16.msra.mxu0 0
    %2410 = vmatprep.subr.bf16.mxu0 0
    %2411 = vmatpush1.bf16.msra.mxu0 0
    %2412 = vmatprep.subr.bf16.mxu0 0
    %2413 = vmatpush1.bf16.msra.mxu0 0
    %2414 = vmatprep.subr.bf16.mxu0 0
    %2415 = vmatpush1.bf16.msra.mxu0 0
    %2416 = vmatprep.mubr.bf16.mxu0 0
    %2417 = vmatmul.mubr.bf16.gmra.mrb[0].mxu0 %v2321
    %v2418 = vpop.f32.mrb[0].mxu0
    %v2419 = vadd.f32 0.0, %v2418
    %v2420 = vpop.f32.mrb[0].mxu0
    %v2421 = vadd.f32 0.0, %v2420
    %v2422 = vpop.f32.mrb[0].mxu0
    %v2423 = vpop.f32.mrb[0].mxu0
    %2424 = vdwg.mxu0
    %v2425 = vadd.f32 %v2256, %v2364
    %v2426 = vadd.f32 %v2258, %v2366
    %v2427 = vadd.f32 %v2303, %v2419
    %v2428 = vadd.f32 %v2305, %v2421
    %s2429 = scalar_lea.vmem %s7, 6
    %v2430 = vld [vmem:[%s2429] sm:$0x3]
    %2431 = vrot.lane.b32.xlu0 %v2071, 114
    %v2432 = vpop.permute.xlu0 %2431
    %2433 = vrot.lane.b32.xlu0 %v2079, 114
    %v2434 = vpop.permute.xlu0 %2433
    %2435 = vrot.lane.b32.xlu0 %v2078, 114
    %v2436 = vpop.permute.xlu0 %2435
    %vm2437 = vcmask 932864
    %v2438 = vsel %vm2437, %v2432, %v2434
    %v2439 = vsel %vm2437, %v2434, %v2436
    %v2441 = vsel %vm2089, %v2430, 0
    %v2444 = vsel %vm2093, %v2438, 0
    %v2447 = vsel %vm2093, %v2439, 0
    %2449 = vmatprep.subr.bf16.mxu0 %v2447
    %2450 = vmatpush1.bf16.msra.mxu0 %v2444
    %2451 = vmatprep.subr.bf16.mxu0 0
    %2452 = vmatpush1.bf16.msra.mxu0 0
    %2453 = vmatprep.subr.bf16.mxu0 0
    %2454 = vmatpush1.bf16.msra.mxu0 0
    %2455 = vmatprep.subr.bf16.mxu0 0
    %2456 = vmatpush1.bf16.msra.mxu0 0
    %2457 = vmatprep.subr.bf16.mxu0 0
    %2458 = vmatpush1.bf16.msra.mxu0 0
    %2459 = vmatprep.subr.bf16.mxu0 0
    %2460 = vmatpush1.bf16.msra.mxu0 0
    %2461 = vmatprep.subr.bf16.mxu0 0
    %2462 = vmatpush1.bf16.msra.mxu0 0
    %2463 = vmatprep.subr.bf16.mxu0 0
    %2464 = vmatpush1.bf16.msra.mxu0 0
    %2465 = vmatprep.subr.bf16.mxu0 0
    %2466 = vmatpush1.bf16.msra.mxu0 0
    %2467 = vmatprep.subr.bf16.mxu0 0
    %2468 = vmatpush1.bf16.msra.mxu0 0
    %2469 = vmatprep.subr.bf16.mxu0 0
    %2470 = vmatpush1.bf16.msra.mxu0 0
    %2471 = vmatprep.subr.bf16.mxu0 0
    %2472 = vmatpush1.bf16.msra.mxu0 0
    %2473 = vmatprep.subr.bf16.mxu0 0
    %2474 = vmatpush1.bf16.msra.mxu0 0
    %2475 = vmatprep.subr.bf16.mxu0 0
    %2476 = vmatpush1.bf16.msra.mxu0 0
    %2477 = vmatprep.subr.bf16.mxu0 0
    %2478 = vmatpush1.bf16.msra.mxu0 0
    %2479 = vmatprep.subr.bf16.mxu0 0
    %2480 = vmatpush1.bf16.msra.mxu0 0
    %2481 = vmatprep.mubr.bf16.mxu0 0
    %2482 = vmatmul.mubr.bf16.gmra.mrb[0].mxu0 %v2441
    %v2483 = vpop.f32.mrb[0].mxu0
    %v2484 = vadd.f32 0.0, %v2483
    %v2485 = vpop.f32.mrb[0].mxu0
    %v2486 = vadd.f32 0.0, %v2485
    %v2487 = vpop.f32.mrb[0].mxu0
    %v2488 = vpop.f32.mrb[0].mxu0
    %2489 = vdwg.mxu0
    %2490 = vrot.lane.b32.xlu0 %v2148, 114
    %v2491 = vpop.permute.xlu0 %2490
    %2492 = vrot.lane.b32.xlu0 %v2156, 114
    %v2493 = vpop.permute.xlu0 %2492
    %2494 = vrot.lane.b32.xlu0 %v2155, 114
    %v2495 = vpop.permute.xlu0 %2494
    %v2496 = vsel %vm2437, %v2491, %v2493
    %v2497 = vsel %vm2437, %v2493, %v2495
    %v2499 = vsel %vm2093, %v2496, 0
    %v2502 = vsel %vm2093, %v2497, 0
    %2504 = vmatprep.subr.bf16.mxu0 %v2502
    %2505 = vmatpush1.bf16.msra.mxu0 %v2499
    %2506 = vmatprep.subr.bf16.mxu0 0
    %2507 = vmatpush1.bf16.msra.mxu0 0
    %2508 = vmatprep.subr.bf16.mxu0 0
    %2509 = vmatpush1.bf16.msra.mxu0 0
    %2510 = vmatprep.subr.bf16.mxu0 0
    %2511 = vmatpush1.bf16.msra.mxu0 0
    %2512 = vmatprep.subr.bf16.mxu0 0
    %2513 = vmatpush1.bf16.msra.mxu0 0
    %2514 = vmatprep.subr.bf16.mxu0 0
    %2515 = vmatpush1.bf16.msra.mxu0 0
    %2516 = vmatprep.subr.bf16.mxu0 0
    %2517 = vmatpush1.bf16.msra.mxu0 0
    %2518 = vmatprep.subr.bf16.mxu0 0
    %2519 = vmatpush1.bf16.msra.mxu0 0
    %2520 = vmatprep.subr.bf16.mxu0 0
    %2521 = vmatpush1.bf16.msra.mxu0 0
    %2522 = vmatprep.subr.bf16.mxu0 0
    %2523 = vmatpush1.bf16.msra.mxu0 0
    %2524 = vmatprep.subr.bf16.mxu0 0
    %2525 = vmatpush1.bf16.msra.mxu0 0
    %2526 = vmatprep.subr.bf16.mxu0 0
    %2527 = vmatpush1.bf16.msra.mxu0 0
    %2528 = vmatprep.subr.bf16.mxu0 0
    %2529 = vmatpush1.bf16.msra.mxu0 0
    %2530 = vmatprep.subr.bf16.mxu0 0
    %2531 = vmatpush1.bf16.msra.mxu0 0
    %2532 = vmatprep.subr.bf16.mxu0 0
    %2533 = vmatpush1.bf16.msra.mxu0 0
    %2534 = vmatprep.subr.bf16.mxu0 0
    %2535 = vmatpush1.bf16.msra.mxu0 0
    %2536 = vmatprep.mubr.bf16.mxu0 0
    %2537 = vmatmul.mubr.bf16.gmra.mrb[0].mxu0 %v2441
    %v2538 = vpop.f32.mrb[0].mxu0
    %v2539 = vadd.f32 0.0, %v2538
    %v2540 = vpop.f32.mrb[0].mxu0
    %v2541 = vadd.f32 0.0, %v2540
    %v2542 = vpop.f32.mrb[0].mxu0
    %v2543 = vpop.f32.mrb[0].mxu0
    %2544 = vdwg.mxu0
    %v2545 = vadd.f32 %v2425, %v2484
    %v2546 = vadd.f32 %v2426, %v2486
    %v2547 = vadd.f32 %v2427, %v2539
    %v2548 = vadd.f32 %v2428, %v2541
    %s2549 = scalar_lea.vmem %s7, 8
    %v2550 = vld [vmem:[%s2549] sm:$0x3]
    %2551 = vrot.lane.b32.xlu0 %v2071, 113
    %v2552 = vpop.permute.xlu0 %2551
    %2553 = vrot.lane.b32.xlu0 %v2079, 113
    %v2554 = vpop.permute.xlu0 %2553
    %2555 = vrot.lane.b32.xlu0 %v2078, 113
    %v2556 = vpop.permute.xlu0 %2555
    %vm2557 = vcmask 924672
    %v2558 = vsel %vm2557, %v2552, %v2554
    %v2559 = vsel %vm2557, %v2554, %v2556
    %v2561 = vsel %vm2089, %v2550, 0
    %v2564 = vsel %vm2093, %v2558, 0
    %v2567 = vsel %vm2093, %v2559, 0
    %2569 = vmatprep.subr.bf16.mxu0 %v2567
    %2570 = vmatpush1.bf16.msra.mxu0 %v2564
    %2571 = vmatprep.subr.bf16.mxu0 0
    %2572 = vmatpush1.bf16.msra.mxu0 0
    %2573 = vmatprep.subr.bf16.mxu0 0
    %2574 = vmatpush1.bf16.msra.mxu0 0
    %2575 = vmatprep.subr.bf16.mxu0 0
    %2576 = vmatpush1.bf16.msra.mxu0 0
    %2577 = vmatprep.subr.bf16.mxu0 0
    %2578 = vmatpush1.bf16.msra.mxu0 0
    %2579 = vmatprep.subr.bf16.mxu0 0
    %2580 = vmatpush1.bf16.msra.mxu0 0
    %2581 = vmatprep.subr.bf16.mxu0 0
    %2582 = vmatpush1.bf16.msra.mxu0 0
    %2583 = vmatprep.subr.bf16.mxu0 0
    %2584 = vmatpush1.bf16.msra.mxu0 0
    %2585 = vmatprep.subr.bf16.mxu0 0
    %2586 = vmatpush1.bf16.msra.mxu0 0
    %2587 = vmatprep.subr.bf16.mxu0 0
    %2588 = vmatpush1.bf16.msra.mxu0 0
    %2589 = vmatprep.subr.bf16.mxu0 0
    %2590 = vmatpush1.bf16.msra.mxu0 0
    %2591 = vmatprep.subr.bf16.mxu0 0
    %2592 = vmatpush1.bf16.msra.mxu0 0
    %2593 = vmatprep.subr.bf16.mxu0 0
    %2594 = vmatpush1.bf16.msra.mxu0 0
    %2595 = vmatprep.subr.bf16.mxu0 0
    %2596 = vmatpush1.bf16.msra.mxu0 0
    %2597 = vmatprep.subr.bf16.mxu0 0
    %2598 = vmatpush1.bf16.msra.mxu0 0
    %2599 = vmatprep.subr.bf16.mxu0 0
    %2600 = vmatpush1.bf16.msra.mxu0 0
    %2601 = vmatprep.mubr.bf16.mxu0 0
    %2602 = vmatmul.mubr.bf16.gmra.mrb[0].mxu0 %v2561
    %v2603 = vpop.f32.mrb[0].mxu0
    %v2604 = vadd.f32 0.0, %v2603
    %v2605 = vpop.f32.mrb[0].mxu0
    %v2606 = vadd.f32 0.0, %v2605
    %v2607 = vpop.f32.mrb[0].mxu0
    %v2608 = vpop.f32.mrb[0].mxu0
    %2609 = vdwg.mxu0
    %2610 = vrot.lane.b32.xlu0 %v2148, 113
    %v2611 = vpop.permute.xlu0 %2610
    %2612 = vrot.lane.b32.xlu0 %v2156, 113
    %v2613 = vpop.permute.xlu0 %2612
    %2614 = vrot.lane.b32.xlu0 %v2155, 113
    %v2615 = vpop.permute.xlu0 %2614
    %v2616 = vsel %vm2557, %v2611, %v2613
    %v2617 = vsel %vm2557, %v2613, %v2615
    %v2619 = vsel %vm2093, %v2616, 0
    %v2622 = vsel %vm2093, %v2617, 0
    %2624 = vmatprep.subr.bf16.mxu0 %v2622
    %2625 = vmatpush1.bf16.msra.mxu0 %v2619
    %2626 = vmatprep.subr.bf16.mxu0 0
    %2627 = vmatpush1.bf16.msra.mxu0 0
    %2628 = vmatprep.subr.bf16.mxu0 0
    %2629 = vmatpush1.bf16.msra.mxu0 0
    %2630 = vmatprep.subr.bf16.mxu0 0
    %2631 = vmatpush1.bf16.msra.mxu0 0
    %2632 = vmatprep.subr.bf16.mxu0 0
    %2633 = vmatpush1.bf16.msra.mxu0 0
    %2634 = vmatprep.subr.bf16.mxu0 0
    %2635 = vmatpush1.bf16.msra.mxu0 0
    %2636 = vmatprep.subr.bf16.mxu0 0
    %2637 = vmatpush1.bf16.msra.mxu0 0
    %2638 = vmatprep.subr.bf16.mxu0 0
    %2639 = vmatpush1.bf16.msra.mxu0 0
    %2640 = vmatprep.subr.bf16.mxu0 0
    %2641 = vmatpush1.bf16.msra.mxu0 0
    %2642 = vmatprep.subr.bf16.mxu0 0
    %2643 = vmatpush1.bf16.msra.mxu0 0
    %2644 = vmatprep.subr.bf16.mxu0 0
    %2645 = vmatpush1.bf16.msra.mxu0 0
    %2646 = vmatprep.subr.bf16.mxu0 0
    %2647 = vmatpush1.bf16.msra.mxu0 0
    %2648 = vmatprep.subr.bf16.mxu0 0
    %2649 = vmatpush1.bf16.msra.mxu0 0
    %2650 = vmatprep.subr.bf16.mxu0 0
    %2651 = vmatpush1.bf16.msra.mxu0 0
    %2652 = vmatprep.subr.bf16.mxu0 0
    %2653 = vmatpush1.bf16.msra.mxu0 0
    %2654 = vmatprep.subr.bf16.mxu0 0
    %2655 = vmatpush1.bf16.msra.mxu0 0
    %2656 = vmatprep.mubr.bf16.mxu0 0
    %2657 = vmatmul.mubr.bf16.gmra.mrb[0].mxu0 %v2561
    %v2658 = vpop.f32.mrb[0].mxu0
    %v2659 = vadd.f32 0.0, %v2658
    %v2660 = vpop.f32.mrb[0].mxu0
    %v2661 = vadd.f32 0.0, %v2660
    %v2662 = vpop.f32.mrb[0].mxu0
    %v2663 = vpop.f32.mrb[0].mxu0
    %2664 = vdwg.mxu0
    %v2665 = vadd.f32 %v2545, %v2604
    %v2666 = vadd.f32 %v2546, %v2606
    %v2667 = vadd.f32 %v2547, %v2659
    %v2668 = vadd.f32 %v2548, %v2661
    %s2669 = scalar_lea.vmem %s7, 10
    %v2670 = vld [vmem:[%s2669] sm:$0x3]
    %2671 = vrot.lane.b32.xlu0 %v2071, 112
    %v2672 = vpop.permute.xlu0 %2671
    %2673 = vrot.lane.b32.xlu0 %v2079, 112
    %v2674 = vpop.permute.xlu0 %2673
    %2675 = vrot.lane.b32.xlu0 %v2078, 112
    %v2676 = vpop.permute.xlu0 %2675
    %vm2677 = vcmask 916480
    %v2678 = vsel %vm2677, %v2672, %v2674
    %v2679 = vsel %vm2677, %v2674, %v2676
    %v2681 = vsel %vm2089, %v2670, 0
    %v2684 = vsel %vm2093, %v2678, 0
    %v2687 = vsel %vm2093, %v2679, 0
    %2689 = vmatprep.subr.bf16.mxu0 %v2687
    %2690 = vmatpush1.bf16.msra.mxu0 %v2684
    %2691 = vmatprep.subr.bf16.mxu0 0
    %2692 = vmatpush1.bf16.msra.mxu0 0
    %2693 = vmatprep.subr.bf16.mxu0 0
    %2694 = vmatpush1.bf16.msra.mxu0 0
    %2695 = vmatprep.subr.bf16.mxu0 0
    %2696 = vmatpush1.bf16.msra.mxu0 0
    %2697 = vmatprep.subr.bf16.mxu0 0
    %2698 = vmatpush1.bf16.msra.mxu0 0
    %2699 = vmatprep.subr.bf16.mxu0 0
    %2700 = vmatpush1.bf16.msra.mxu0 0
    %2701 = vmatprep.subr.bf16.mxu0 0
    %2702 = vmatpush1.bf16.msra.mxu0 0
    %2703 = vmatprep.subr.bf16.mxu0 0
    %2704 = vmatpush1.bf16.msra.mxu0 0
    %2705 = vmatprep.subr.bf16.mxu0 0
    %2706 = vmatpush1.bf16.msra.mxu0 0
    %2707 = vmatprep.subr.bf16.mxu0 0
    %2708 = vmatpush1.bf16.msra.mxu0 0
    %2709 = vmatprep.subr.bf16.mxu0 0
    %2710 = vmatpush1.bf16.msra.mxu0 0
    %2711 = vmatprep.subr.bf16.mxu0 0
    %2712 = vmatpush1.bf16.msra.mxu0 0
    %2713 = vmatprep.subr.bf16.mxu0 0
    %2714 = vmatpush1.bf16.msra.mxu0 0
    %2715 = vmatprep.subr.bf16.mxu0 0
    %2716 = vmatpush1.bf16.msra.mxu0 0
    %2717 = vmatprep.subr.bf16.mxu0 0
    %2718 = vmatpush1.bf16.msra.mxu0 0
    %2719 = vmatprep.subr.bf16.mxu0 0
    %2720 = vmatpush1.bf16.msra.mxu0 0
    %2721 = vmatprep.mubr.bf16.mxu0 0
    %2722 = vmatmul.mubr.bf16.gmra.mrb[0].mxu0 %v2681
    %v2723 = vpop.f32.mrb[0].mxu0
    %v2724 = vadd.f32 0.0, %v2723
    %v2725 = vpop.f32.mrb[0].mxu0
    %v2726 = vadd.f32 0.0, %v2725
    %v2727 = vpop.f32.mrb[0].mxu0
    %v2728 = vpop.f32.mrb[0].mxu0
    %2729 = vdwg.mxu0
    %2730 = vrot.lane.b32.xlu0 %v2148, 112
    %v2731 = vpop.permute.xlu0 %2730
    %2732 = vrot.lane.b32.xlu0 %v2156, 112
    %v2733 = vpop.permute.xlu0 %2732
    %2734 = vrot.lane.b32.xlu0 %v2155, 112
    %v2735 = vpop.permute.xlu0 %2734
    %v2736 = vsel %vm2677, %v2731, %v2733
    %v2737 = vsel %vm2677, %v2733, %v2735
    %v2739 = vsel %vm2093, %v2736, 0
    %v2742 = vsel %vm2093, %v2737, 0
    %2744 = vmatprep.subr.bf16.mxu0 %v2742
    %2745 = vmatpush1.bf16.msra.mxu0 %v2739
    %2746 = vmatprep.subr.bf16.mxu0 0
    %2747 = vmatpush1.bf16.msra.mxu0 0
    %2748 = vmatprep.subr.bf16.mxu0 0
    %2749 = vmatpush1.bf16.msra.mxu0 0
    %2750 = vmatprep.subr.bf16.mxu0 0
    %2751 = vmatpush1.bf16.msra.mxu0 0
    %2752 = vmatprep.subr.bf16.mxu0 0
    %2753 = vmatpush1.bf16.msra.mxu0 0
    %2754 = vmatprep.subr.bf16.mxu0 0
    %2755 = vmatpush1.bf16.msra.mxu0 0
    %2756 = vmatprep.subr.bf16.mxu0 0
    %2757 = vmatpush1.bf16.msra.mxu0 0
    %2758 = vmatprep.subr.bf16.mxu0 0
    %2759 = vmatpush1.bf16.msra.mxu0 0
    %2760 = vmatprep.subr.bf16.mxu0 0
    %2761 = vmatpush1.bf16.msra.mxu0 0
    %2762 = vmatprep.subr.bf16.mxu0 0
    %2763 = vmatpush1.bf16.msra.mxu0 0
    %2764 = vmatprep.subr.bf16.mxu0 0
    %2765 = vmatpush1.bf16.msra.mxu0 0
    %2766 = vmatprep.subr.bf16.mxu0 0
    %2767 = vmatpush1.bf16.msra.mxu0 0
    %2768 = vmatprep.subr.bf16.mxu0 0
    %2769 = vmatpush1.bf16.msra.mxu0 0
    %2770 = vmatprep.subr.bf16.mxu0 0
    %2771 = vmatpush1.bf16.msra.mxu0 0
    %2772 = vmatprep.subr.bf16.mxu0 0
    %2773 = vmatpush1.bf16.msra.mxu0 0
    %2774 = vmatprep.subr.bf16.mxu0 0
    %2775 = vmatpush1.bf16.msra.mxu0 0
    %2776 = vmatprep.mubr.bf16.mxu0 0
    %2777 = vmatmul.mubr.bf16.gmra.mrb[0].mxu0 %v2681
    %v2778 = vpop.f32.mrb[0].mxu0
    %v2779 = vadd.f32 0.0, %v2778
    %v2780 = vpop.f32.mrb[0].mxu0
    %v2781 = vadd.f32 0.0, %v2780
    %v2782 = vpop.f32.mrb[0].mxu0
    %v2783 = vpop.f32.mrb[0].mxu0
    %2784 = vdwg.mxu0
    %v2785 = vadd.f32 %v2665, %v2724
    %v2786 = vadd.f32 %v2666, %v2726
    %v2787 = vadd.f32 %v2667, %v2779
    %v2788 = vadd.f32 %v2668, %v2781
    %s2789 = scalar_lea.vmem %s7, 12
    %v2790 = vld [vmem:[%s2789] sm:$0x3]
    %2791 = vrot.lane.b32.xlu0 %v2071, 100
    %v2792 = vpop.permute.xlu0 %2791
    %2793 = vrot.lane.b32.xlu0 %v2079, 100
    %v2794 = vpop.permute.xlu0 %2793
    %2795 = vrot.lane.b32.xlu0 %v2078, 100
    %v2796 = vpop.permute.xlu0 %2795
    %vm2797 = vcmask 818176
    %v2798 = vsel %vm2797, %v2792, %v2794
    %v2799 = vsel %vm2797, %v2794, %v2796
    %v2801 = vsel %vm2089, %v2790, 0
    %v2804 = vsel %vm2093, %v2798, 0
    %v2807 = vsel %vm2093, %v2799, 0
    %2809 = vmatprep.subr.bf16.mxu0 %v2807
    %2810 = vmatpush1.bf16.msra.mxu0 %v2804
    %2811 = vmatprep.subr.bf16.mxu0 0
    %2812 = vmatpush1.bf16.msra.mxu0 0
    %2813 = vmatprep.subr.bf16.mxu0 0
    %2814 = vmatpush1.bf16.msra.mxu0 0
    %2815 = vmatprep.subr.bf16.mxu0 0
    %2816 = vmatpush1.bf16.msra.mxu0 0
    %2817 = vmatprep.subr.bf16.mxu0 0
    %2818 = vmatpush1.bf16.msra.mxu0 0
    %2819 = vmatprep.subr.bf16.mxu0 0
    %2820 = vmatpush1.bf16.msra.mxu0 0
    %2821 = vmatprep.subr.bf16.mxu0 0
    %2822 = vmatpush1.bf16.msra.mxu0 0
    %2823 = vmatprep.subr.bf16.mxu0 0
    %2824 = vmatpush1.bf16.msra.mxu0 0
    %2825 = vmatprep.subr.bf16.mxu0 0
    %2826 = vmatpush1.bf16.msra.mxu0 0
    %2827 = vmatprep.subr.bf16.mxu0 0
    %2828 = vmatpush1.bf16.msra.mxu0 0
    %2829 = vmatprep.subr.bf16.mxu0 0
    %2830 = vmatpush1.bf16.msra.mxu0 0
    %2831 = vmatprep.subr.bf16.mxu0 0
    %2832 = vmatpush1.bf16.msra.mxu0 0
    %2833 = vmatprep.subr.bf16.mxu0 0
    %2834 = vmatpush1.bf16.msra.mxu0 0
    %2835 = vmatprep.subr.bf16.mxu0 0
    %2836 = vmatpush1.bf16.msra.mxu0 0
    %2837 = vmatprep.subr.bf16.mxu0 0
    %2838 = vmatpush1.bf16.msra.mxu0 0
    %2839 = vmatprep.subr.bf16.mxu0 0
    %2840 = vmatpush1.bf16.msra.mxu0 0
    %2841 = vmatprep.mubr.bf16.mxu0 0
    %2842 = vmatmul.mubr.bf16.gmra.mrb[0].mxu0 %v2801
    %v2843 = vpop.f32.mrb[0].mxu0
    %v2844 = vadd.f32 0.0, %v2843
    %v2845 = vpop.f32.mrb[0].mxu0
    %v2846 = vadd.f32 0.0, %v2845
    %v2847 = vpop.f32.mrb[0].mxu0
    %v2848 = vpop.f32.mrb[0].mxu0
    %2849 = vdwg.mxu0
    %2850 = vrot.lane.b32.xlu0 %v2148, 100
    %v2851 = vpop.permute.xlu0 %2850
    %2852 = vrot.lane.b32.xlu0 %v2156, 100
    %v2853 = vpop.permute.xlu0 %2852
    %2854 = vrot.lane.b32.xlu0 %v2155, 100
    %v2855 = vpop.permute.xlu0 %2854
    %v2856 = vsel %vm2797, %v2851, %v2853
    %v2857 = vsel %vm2797, %v2853, %v2855
    %v2859 = vsel %vm2093, %v2856, 0
    %v2862 = vsel %vm2093, %v2857, 0
    %2864 = vmatprep.subr.bf16.mxu0 %v2862
    %2865 = vmatpush1.bf16.msra.mxu0 %v2859
    %2866 = vmatprep.subr.bf16.mxu0 0
    %2867 = vmatpush1.bf16.msra.mxu0 0
    %2868 = vmatprep.subr.bf16.mxu0 0
    %2869 = vmatpush1.bf16.msra.mxu0 0
    %2870 = vmatprep.subr.bf16.mxu0 0
    %2871 = vmatpush1.bf16.msra.mxu0 0
    %2872 = vmatprep.subr.bf16.mxu0 0
    %2873 = vmatpush1.bf16.msra.mxu0 0
    %2874 = vmatprep.subr.bf16.mxu0 0
    %2875 = vmatpush1.bf16.msra.mxu0 0
    %2876 = vmatprep.subr.bf16.mxu0 0
    %2877 = vmatpush1.bf16.msra.mxu0 0
    %2878 = vmatprep.subr.bf16.mxu0 0
    %2879 = vmatpush1.bf16.msra.mxu0 0
    %2880 = vmatprep.subr.bf16.mxu0 0
    %2881 = vmatpush1.bf16.msra.mxu0 0
    %2882 = vmatprep.subr.bf16.mxu0 0
    %2883 = vmatpush1.bf16.msra.mxu0 0
    %2884 = vmatprep.subr.bf16.mxu0 0
    %2885 = vmatpush1.bf16.msra.mxu0 0
    %2886 = vmatprep.subr.bf16.mxu0 0
    %2887 = vmatpush1.bf16.msra.mxu0 0
    %2888 = vmatprep.subr.bf16.mxu0 0
    %2889 = vmatpush1.bf16.msra.mxu0 0
    %2890 = vmatprep.subr.bf16.mxu0 0
    %2891 = vmatpush1.bf16.msra.mxu0 0
    %2892 = vmatprep.subr.bf16.mxu0 0
    %2893 = vmatpush1.bf16.msra.mxu0 0
    %2894 = vmatprep.subr.bf16.mxu0 0
    %2895 = vmatpush1.bf16.msra.mxu0 0
    %2896 = vmatprep.mubr.bf16.mxu0 0
    %2897 = vmatmul.mubr.bf16.gmra.mrb[0].mxu0 %v2801
    %v2898 = vpop.f32.mrb[0].mxu0
    %v2899 = vadd.f32 0.0, %v2898
    %v2900 = vpop.f32.mrb[0].mxu0
    %v2901 = vadd.f32 0.0, %v2900
    %v2902 = vpop.f32.mrb[0].mxu0
    %v2903 = vpop.f32.mrb[0].mxu0
    %2904 = vdwg.mxu0
    %v2905 = vadd.f32 %v2785, %v2844
    %v2906 = vadd.f32 %v2786, %v2846
    %v2907 = vadd.f32 %v2787, %v2899
    %v2908 = vadd.f32 %v2788, %v2901
    %s2909 = scalar_lea.vmem %s7, 14
    %v2910 = vld [vmem:[%s2909] sm:$0x3]
    %2911 = vrot.lane.b32.xlu0 %v2071, 99
    %v2912 = vpop.permute.xlu0 %2911
    %2913 = vrot.lane.b32.xlu0 %v2079, 99
    %v2914 = vpop.permute.xlu0 %2913
    %2915 = vrot.lane.b32.xlu0 %v2078, 99
    %v2916 = vpop.permute.xlu0 %2915
    %vm2917 = vcmask 809984
    %v2918 = vsel %vm2917, %v2912, %v2914
    %v2919 = vsel %vm2917, %v2914, %v2916
    %v2921 = vsel %vm2089, %v2910, 0
    %v2924 = vsel %vm2093, %v2918, 0
    %v2927 = vsel %vm2093, %v2919, 0
    %2929 = vmatprep.subr.bf16.mxu0 %v2927
    %2930 = vmatpush1.bf16.msra.mxu0 %v2924
    %2931 = vmatprep.subr.bf16.mxu0 0
    %2932 = vmatpush1.bf16.msra.mxu0 0
    %2933 = vmatprep.subr.bf16.mxu0 0
    %2934 = vmatpush1.bf16.msra.mxu0 0
    %2935 = vmatprep.subr.bf16.mxu0 0
    %2936 = vmatpush1.bf16.msra.mxu0 0
    %2937 = vmatprep.subr.bf16.mxu0 0
    %2938 = vmatpush1.bf16.msra.mxu0 0
    %2939 = vmatprep.subr.bf16.mxu0 0
    %2940 = vmatpush1.bf16.msra.mxu0 0
    %2941 = vmatprep.subr.bf16.mxu0 0
    %2942 = vmatpush1.bf16.msra.mxu0 0
    %2943 = vmatprep.subr.bf16.mxu0 0
    %2944 = vmatpush1.bf16.msra.mxu0 0
    %2945 = vmatprep.subr.bf16.mxu0 0
    %2946 = vmatpush1.bf16.msra.mxu0 0
    %2947 = vmatprep.subr.bf16.mxu0 0
    %2948 = vmatpush1.bf16.msra.mxu0 0
    %2949 = vmatprep.subr.bf16.mxu0 0
    %2950 = vmatpush1.bf16.msra.mxu0 0
    %2951 = vmatprep.subr.bf16.mxu0 0
    %2952 = vmatpush1.bf16.msra.mxu0 0
    %2953 = vmatprep.subr.bf16.mxu0 0
    %2954 = vmatpush1.bf16.msra.mxu0 0
    %2955 = vmatprep.subr.bf16.mxu0 0
    %2956 = vmatpush1.bf16.msra.mxu0 0
    %2957 = vmatprep.subr.bf16.mxu0 0
    %2958 = vmatpush1.bf16.msra.mxu0 0
    %2959 = vmatprep.subr.bf16.mxu0 0
    %2960 = vmatpush1.bf16.msra.mxu0 0
    %2961 = vmatprep.mubr.bf16.mxu0 0
    %2962 = vmatmul.mubr.bf16.gmra.mrb[0].mxu0 %v2921
    %v2963 = vpop.f32.mrb[0].mxu0
    %v2964 = vadd.f32 0.0, %v2963
    %v2965 = vpop.f32.mrb[0].mxu0
    %v2966 = vadd.f32 0.0, %v2965
    %v2967 = vpop.f32.mrb[0].mxu0
    %v2968 = vpop.f32.mrb[0].mxu0
    %2969 = vdwg.mxu0
    %2970 = vrot.lane.b32.xlu0 %v2148, 99
    %v2971 = vpop.permute.xlu0 %2970
    %2972 = vrot.lane.b32.xlu0 %v2156, 99
    %v2973 = vpop.permute.xlu0 %2972
    %2974 = vrot.lane.b32.xlu0 %v2155, 99
    %v2975 = vpop.permute.xlu0 %2974
    %v2976 = vsel %vm2917, %v2971, %v2973
    %v2977 = vsel %vm2917, %v2973, %v2975
    %v2979 = vsel %vm2093, %v2976, 0
    %v2982 = vsel %vm2093, %v2977, 0
    %2984 = vmatprep.subr.bf16.mxu0 %v2982
    %2985 = vmatpush1.bf16.msra.mxu0 %v2979
    %2986 = vmatprep.subr.bf16.mxu0 0
    %2987 = vmatpush1.bf16.msra.mxu0 0
    %2988 = vmatprep.subr.bf16.mxu0 0
    %2989 = vmatpush1.bf16.msra.mxu0 0
    %2990 = vmatprep.subr.bf16.mxu0 0
    %2991 = vmatpush1.bf16.msra.mxu0 0
    %2992 = vmatprep.subr.bf16.mxu0 0
    %2993 = vmatpush1.bf16.msra.mxu0 0
    %2994 = vmatprep.subr.bf16.mxu0 0
    %2995 = vmatpush1.bf16.msra.mxu0 0
    %2996 = vmatprep.subr.bf16.mxu0 0
    %2997 = vmatpush1.bf16.msra.mxu0 0
    %2998 = vmatprep.subr.bf16.mxu0 0
    %2999 = vmatpush1.bf16.msra.mxu0 0
    %3000 = vmatprep.subr.bf16.mxu0 0
    %3001 = vmatpush1.bf16.msra.mxu0 0
    %3002 = vmatprep.subr.bf16.mxu0 0
    %3003 = vmatpush1.bf16.msra.mxu0 0
    %3004 = vmatprep.subr.bf16.mxu0 0
    %3005 = vmatpush1.bf16.msra.mxu0 0
    %3006 = vmatprep.subr.bf16.mxu0 0
    %3007 = vmatpush1.bf16.msra.mxu0 0
    %3008 = vmatprep.subr.bf16.mxu0 0
    %3009 = vmatpush1.bf16.msra.mxu0 0
    %3010 = vmatprep.subr.bf16.mxu0 0
    %3011 = vmatpush1.bf16.msra.mxu0 0
    %3012 = vmatprep.subr.bf16.mxu0 0
    %3013 = vmatpush1.bf16.msra.mxu0 0
    %3014 = vmatprep.subr.bf16.mxu0 0
    %3015 = vmatpush1.bf16.msra.mxu0 0
    %3016 = vmatprep.mubr.bf16.mxu0 0
    %3017 = vmatmul.mubr.bf16.gmra.mrb[0].mxu0 %v2921
    %v3018 = vpop.f32.mrb[0].mxu0
    %v3019 = vadd.f32 0.0, %v3018
    %v3020 = vpop.f32.mrb[0].mxu0
    %v3021 = vadd.f32 0.0, %v3020
    %v3022 = vpop.f32.mrb[0].mxu0
    %v3023 = vpop.f32.mrb[0].mxu0
    %3024 = vdwg.mxu0
    %v3025 = vadd.f32 %v2905, %v2964
    %v3026 = vadd.f32 %v2906, %v2966
    %v3027 = vadd.f32 %v2907, %v3019
    %v3028 = vadd.f32 %v2908, %v3021
    %s3029 = scalar_lea.vmem %s7, 16
    %v3030 = vld [vmem:[%s3029] sm:$0x3]
    %3031 = vrot.lane.b32.xlu0 %v2071, 98
    %v3032 = vpop.permute.xlu0 %3031
    %3033 = vrot.lane.b32.xlu0 %v2079, 98
    %v3034 = vpop.permute.xlu0 %3033
    %3035 = vrot.lane.b32.xlu0 %v2078, 98
    %v3036 = vpop.permute.xlu0 %3035
    %vm3037 = vcmask 801792
    %v3038 = vsel %vm3037, %v3032, %v3034
    %v3039 = vsel %vm3037, %v3034, %v3036
    %v3041 = vsel %vm2089, %v3030, 0
    %v3044 = vsel %vm2093, %v3038, 0
    %v3047 = vsel %vm2093, %v3039, 0
    %3049 = vmatprep.subr.bf16.mxu0 %v3047
    %3050 = vmatpush1.bf16.msra.mxu0 %v3044
    %3051 = vmatprep.subr.bf16.mxu0 0
    %3052 = vmatpush1.bf16.msra.mxu0 0
    %3053 = vmatprep.subr.bf16.mxu0 0
    %3054 = vmatpush1.bf16.msra.mxu0 0
    %3055 = vmatprep.subr.bf16.mxu0 0
    %3056 = vmatpush1.bf16.msra.mxu0 0
    %3057 = vmatprep.subr.bf16.mxu0 0
    %3058 = vmatpush1.bf16.msra.mxu0 0
    %3059 = vmatprep.subr.bf16.mxu0 0
    %3060 = vmatpush1.bf16.msra.mxu0 0
    %3061 = vmatprep.subr.bf16.mxu0 0
    %3062 = vmatpush1.bf16.msra.mxu0 0
    %3063 = vmatprep.subr.bf16.mxu0 0
    %3064 = vmatpush1.bf16.msra.mxu0 0
    %3065 = vmatprep.subr.bf16.mxu0 0
    %3066 = vmatpush1.bf16.msra.mxu0 0
    %3067 = vmatprep.subr.bf16.mxu0 0
    %3068 = vmatpush1.bf16.msra.mxu0 0
    %3069 = vmatprep.subr.bf16.mxu0 0
    %3070 = vmatpush1.bf16.msra.mxu0 0
    %3071 = vmatprep.subr.bf16.mxu0 0
    %3072 = vmatpush1.bf16.msra.mxu0 0
    %3073 = vmatprep.subr.bf16.mxu0 0
    %3074 = vmatpush1.bf16.msra.mxu0 0
    %3075 = vmatprep.subr.bf16.mxu0 0
    %3076 = vmatpush1.bf16.msra.mxu0 0
    %3077 = vmatprep.subr.bf16.mxu0 0
    %3078 = vmatpush1.bf16.msra.mxu0 0
    %3079 = vmatprep.subr.bf16.mxu0 0
    %3080 = vmatpush1.bf16.msra.mxu0 0
    %3081 = vmatprep.mubr.bf16.mxu0 0
    %3082 = vmatmul.mubr.bf16.gmra.mrb[0].mxu0 %v3041
    %v3083 = vpop.f32.mrb[0].mxu0
    %v3084 = vadd.f32 0.0, %v3083
    %v3085 = vpop.f32.mrb[0].mxu0
    %v3086 = vadd.f32 0.0, %v3085
    %v3087 = vpop.f32.mrb[0].mxu0
    %v3088 = vpop.f32.mrb[0].mxu0
    %3089 = vdwg.mxu0
    %3090 = vrot.lane.b32.xlu0 %v2148, 98
    %v3091 = vpop.permute.xlu0 %3090
    %3092 = vrot.lane.b32.xlu0 %v2156, 98
    %v3093 = vpop.permute.xlu0 %3092
    %3094 = vrot.lane.b32.xlu0 %v2155, 98
    %v3095 = vpop.permute.xlu0 %3094
    %v3096 = vsel %vm3037, %v3091, %v3093
    %v3097 = vsel %vm3037, %v3093, %v3095
    %v3099 = vsel %vm2093, %v3096, 0
    %v3102 = vsel %vm2093, %v3097, 0
    %3104 = vmatprep.subr.bf16.mxu0 %v3102
    %3105 = vmatpush1.bf16.msra.mxu0 %v3099
    %3106 = vmatprep.subr.bf16.mxu0 0
    %3107 = vmatpush1.bf16.msra.mxu0 0
    %3108 = vmatprep.subr.bf16.mxu0 0
    %3109 = vmatpush1.bf16.msra.mxu0 0
    %3110 = vmatprep.subr.bf16.mxu0 0
    %3111 = vmatpush1.bf16.msra.mxu0 0
    %3112 = vmatprep.subr.bf16.mxu0 0
    %3113 = vmatpush1.bf16.msra.mxu0 0
    %3114 = vmatprep.subr.bf16.mxu0 0
    %3115 = vmatpush1.bf16.msra.mxu0 0
    %3116 = vmatprep.subr.bf16.mxu0 0
    %3117 = vmatpush1.bf16.msra.mxu0 0
    %3118 = vmatprep.subr.bf16.mxu0 0
    %3119 = vmatpush1.bf16.msra.mxu0 0
    %3120 = vmatprep.subr.bf16.mxu0 0
    %3121 = vmatpush1.bf16.msra.mxu0 0
    %3122 = vmatprep.subr.bf16.mxu0 0
    %3123 = vmatpush1.bf16.msra.mxu0 0
    %3124 = vmatprep.subr.bf16.mxu0 0
    %3125 = vmatpush1.bf16.msra.mxu0 0
    %3126 = vmatprep.subr.bf16.mxu0 0
    %3127 = vmatpush1.bf16.msra.mxu0 0
    %3128 = vmatprep.subr.bf16.mxu0 0
    %3129 = vmatpush1.bf16.msra.mxu0 0
    %3130 = vmatprep.subr.bf16.mxu0 0
    %3131 = vmatpush1.bf16.msra.mxu0 0
    %3132 = vmatprep.subr.bf16.mxu0 0
    %3133 = vmatpush1.bf16.msra.mxu0 0
    %3134 = vmatprep.subr.bf16.mxu0 0
    %3135 = vmatpush1.bf16.msra.mxu0 0
    %3136 = vmatprep.mubr.bf16.mxu0 0
    %3137 = vmatmul.mubr.bf16.gmra.mrb[0].mxu0 %v3041
    %v3138 = vpop.f32.mrb[0].mxu0
    %v3139 = vadd.f32 0.0, %v3138
    %v3140 = vpop.f32.mrb[0].mxu0
    %v3141 = vadd.f32 0.0, %v3140
    %v3142 = vpop.f32.mrb[0].mxu0
    %v3143 = vpop.f32.mrb[0].mxu0
    %3144 = vdwg.mxu0
    %v3145 = vadd.f32 %v3025, %v3084
    %v3146 = vadd.f32 %v3026, %v3086
    %v3147 = vadd.f32 %v3027, %v3139
    %v3148 = vadd.f32 %v3028, %v3141
    %v3149 = vld [vmem:[%s8] sm:$0xf]
    %3151 = vset.pattern.permute.xlu0 0
    %3152 = vperm.xlu0 %3151, %v3149
    %v3153 = vpop.permute.xlu0 %3152
    %v3155 = vadd.f32 %v3145, %v3153
    %v3156 = vadd.f32 %v3146, %v3153
    %v3157 = vadd.f32 %v3147, %v3153
    %v3158 = vadd.f32 %v3148, %v3153
    %v3159 = vmax.f32 %v3155, 0.0
    %v3160 = vmax.f32 %v3156, 0.0
    %v3161 = vmax.f32 %v3157, 0.0
    %v3162 = vmax.f32 %v3158, 0.0
    %v3167 = vcombine.low %v3159, %v3160
    %v3168 = vcombine.low %v3161, %v3162
    %3171 = vst [vmem:[#allocation2] sm:$0xff] %v3167
    %3172 = vst [vmem:[#allocation2 + $0x8] sm:$0xff] %v3168
    // Predicated region
    $region38: #{tpu_custom_call.1} parent=1 // pred_check
      _
    $region39: #{tpu_custom_call.1} parent=1 // pred_check_branch
      %3174 = sbr.rel (0) target = $region41
    $region40: #{tpu_custom_call.1} parent=1 // pred_region
      %s3176 = ssub.s32 256, 256
      %3177 = vsyncadd [#allocation3], %s3176
      %s3178 = sshll.u32 [#allocation2], 4
      %s3179 = int_to_ptr.vmem [resolvable:$true] %s3178
      %3184 = dma.vmem_to_hbm [thread:$0]  %s3179, 256, %s9, [#allocation3], 128, 128, 8
    $region41: #{tpu_custom_call.1} parent=1 // pred_fallthru
      _
    // Predicated region
    $region42: #{tpu_custom_call.1} parent=1 // pred_check
      _
    $region43: #{tpu_custom_call.1} parent=1 // pred_check_branch
      %3186 = sbr.rel (0) target = $region45
    $region44: #{tpu_custom_call.1} parent=1 // pred_region
      %3187 = dma.done [#allocation3], 256
    $region45: #{tpu_custom_call.1} parent=1 // pred_fallthru
      _
    %3188 = vsyncpa [#allocation3], 1

</llo_original>
